<compile_context>
chip_gen: v5e
topology: v5e:2x2
jax: 0.10.0
libtpu: 0.0.40
codegen_flags: <defaults>
</compile_context>

<pallas_src>
import functools

import numpy as np
import jax
import jax.numpy as jnp
from jax import lax
from jax.experimental import pallas as pl
from jax.experimental.pallas import tpu as pltpu

EPS = 1e-5
CPG = 8                         # channels per GroupNorm group (nn.GroupNorm(C//8, C))
_FOLD_BELOW = 256               # fold batch into GEMM M when per-sample HW < this
_FIRST_CIN_PAD = 16             # pad the 3-channel network input (bf16 packing)
_VMEM_LIMIT = 32 * 1024 * 1024  # well under v7x's 64 MiB physical VMEM


# ---------------------------------------------------------------------------
# Pallas kernel: (in-kernel im2col | plain GEMM) + optional fused skip-concat
#                + GroupNorm (per-sample stats via MXU selector matmuls) + ReLU
# ---------------------------------------------------------------------------
def _fused_conv_gn_relu_kernel(*refs, n_inputs, cins, taps, halo, use_mask,
                               n_blk, rows, inv_count, eps):
    idx = 0
    x_refs = refs[idx:idx + n_inputs]; idx += n_inputs
    m_ref = None
    if use_mask:
        m_ref = refs[idx]; idx += 1
    w_ref = refs[idx]; idx += 1
    samp_ref = refs[idx]; idx += 1
    rowsel_ref = None
    if n_blk > 1:
        rowsel_ref = refs[idx]; idx += 1
    gsel_ref, gamma_ref, beta_ref, o_ref = refs[idx:idx + 4]

    # ---- convolution: sum of shifted bf16 GEMMs, f32 accumulation (MXU) ----
    acc = None
    wrow = 0
    for i in range(n_inputs):
        cin = cins[i]
        for t, off in enumerate(taps):
            lhs = x_refs[i][0, halo + off: halo + off + rows, :]
            if use_mask:                       # zero taps whose source is off-image
                lhs = lhs * m_ref[:, t:t + 1]
            part = jnp.dot(lhs, w_ref[wrow: wrow + cin, :],
                           preferred_element_type=jnp.float32)
            acc = part if acc is None else acc + part
            wrow += cin

    # ---- GroupNorm statistics entirely on the MXU --------------------------
    ssum = jnp.dot(samp_ref[...], acc, preferred_element_type=jnp.float32)      # [n_blk, C]
    ssq = jnp.dot(samp_ref[...], acc * acc, preferred_element_type=jnp.float32)
    gsel = gsel_ref[...].astype(jnp.float32)
    gsum = jnp.dot(ssum, gsel, preferred_element_type=jnp.float32)
    gsq = jnp.dot(ssq, gsel, preferred_element_type=jnp.float32)
    mean = gsum * inv_count
    # biased variance (PyTorch GN); single-pass E[x^2]-E[x]^2 in f32 (clamped)
    var = jnp.maximum(gsq * inv_count - mean * mean, 0.0)
    inv = lax.rsqrt(var + eps)
    scale = inv * gamma_ref[...]
    shift = beta_ref[...] - mean * scale
    if n_blk > 1:   # broadcast per-sample stats back to rows via a tiny matmul
        scale = jnp.dot(rowsel_ref[...], scale, preferred_element_type=jnp.float32)
        shift = jnp.dot(rowsel_ref[...], shift, preferred_element_type=jnp.float32)
    o_ref[0] = jnp.maximum(acc * scale + shift, 0.0).astype(o_ref.dtype)


# ---------------------------------------------------------------------------
# Host-side wrappers around pallas_call
# ---------------------------------------------------------------------------
def _shift_masks(h, w, k=3):
    """[H*W, k*k] validity of the (dh, dw) tap for a stride-1 'same' conv."""
    oh, ow = np.meshgrid(np.arange(h), np.arange(w), indexing='ij')
    cols = []
    for dh in range(k):
        for dw in range(k):
            ih = oh + dh - k // 2
            iw = ow + dw - k // 2
            cols.append(((ih >= 0) & (ih < h) & (iw >= 0) & (iw < w)).reshape(-1))
    return np.stack(cols, axis=1).astype(np.float32)


def _call_fused(x_list, cins, w2d, gsel, gamma2d, beta2d, members,
                taps, halo, masks_np, n, hw, fold_batch):
    grid_n = 1 if fold_batch else n
    n_blk = n if fold_batch else 1
    rows = hw * n_blk
    cout = w2d.shape[1]
    use_mask = masks_np is not None

    ins, specs = [], []
    for x, cin in zip(x_list, cins):
        xg = x.reshape(grid_n, rows, cin).astype(jnp.bfloat16)
        if halo:
            xg = jnp.pad(xg, ((0, 0), (halo, halo), (0, 0)))
        ins.append(xg)
        specs.append(pl.BlockSpec((1, rows + 2 * halo, cin), lambda g: (g, 0, 0)))
    if use_mask:
        ins.append(jnp.asarray(np.tile(masks_np, (n_blk, 1)), jnp.bfloat16))
        specs.append(pl.BlockSpec((rows, len(taps)), lambda g: (0, 0)))

    ins.append(w2d)
    specs.append(pl.BlockSpec(w2d.shape, lambda g: (0, 0)))

    samp = np.kron(np.eye(n_blk, dtype=np.float32), np.ones((1, hw), np.float32))
    ins.append(jnp.asarray(samp, jnp.float32))
    specs.append(pl.BlockSpec((n_blk, rows), lambda g: (0, 0)))
    if n_blk > 1:
        ins.append(jnp.asarray(np.ascontiguousarray(samp.T), jnp.float32))
        specs.append(pl.BlockSpec((rows, n_blk), lambda g: (0, 0)))

    ins += [gsel, gamma2d, beta2d]
    specs += [pl.BlockSpec(gsel.shape, lambda g: (0, 0)),
              pl.BlockSpec((1, cout), lambda g: (0, 0)),
              pl.BlockSpec((1, cout), lambda g: (0, 0))]

    kernel = functools.partial(
        _fused_conv_gn_relu_kernel,
        n_inputs=len(x_list), cins=tuple(int(c) for c in cins),
        taps=tuple(int(t) for t in taps), halo=int(halo), use_mask=use_mask,
        n_blk=int(n_blk), rows=int(rows),
        inv_count=1.0 / float(hw * members), eps=EPS)

    out = pl.pallas_call(
        kernel,
        out_shape=jax.ShapeDtypeStruct((grid_n, rows, cout), jnp.bfloat16),
        grid_spec=pltpu.PrefetchScalarGridSpec(
            num_scalar_prefetch=0,
            grid=(grid_n,),
            in_specs=specs,
            out_specs=pl.BlockSpec((1, rows, cout), lambda g: (g, 0, 0))),
        compiler_params=pltpu.CompilerParams(
            dimension_semantics=("parallel",),
            vmem_limit_bytes=_VMEM_LIMIT),
    )(*ins)
    return out.reshape(n, hw, cout)


def _conv_shifted(xs_nhwc, lp, n, h, w):
    """Stride-1 3x3 conv (or sub-pixel deconv) with in-kernel im2col. Multiple
    inputs == fused channel-concat (Conv2x skip)."""
    hw = h * w
    xs = [x.reshape(n, hw, x.shape[-1]) for x in xs_nhwc]
    taps = [(dh - 1) * w + (dw - 1) for dh in range(3) for dw in range(3)]
    return _call_fused(xs, lp['cins'], lp['w2d'], lp['gsel'],
                       lp['gamma2d'], lp['beta2d'], lp['members'],
                       taps, w + 1, _shift_masks(h, w), n, hw,
                       fold_batch=hw < _FOLD_BELOW)


def _conv_patches(patches, lp, n, ohw):
    """Strided conv: pre-formed patches, single GEMM."""
    return _call_fused([patches], (patches.shape[-1],), lp['w2d'], lp['gsel'],
                       lp['gamma2d'], lp['beta2d'], lp['members'],
                       (0,), 0, None, n, ohw,
                       fold_batch=ohw < _FOLD_BELOW)


def _extract_patches_nhwc(x, k, stride, padding):
    """x: [N,H,W,C] -> [N, OH*OW, k*k*C] with feature index (dh*k+dw)*C+ci."""
    n, h, w, c = x.shape
    xp = jnp.pad(x, ((0, 0), (padding, padding), (padding, padding), (0, 0)))
    oh = (h + 2 * padding - k) // stride + 1
    ow = (w + 2 * padding - k) // stride + 1
    cols = []
    for dh in range(k):
        for dw in range(k):
            cols.append(xp[:, dh: dh + stride * (oh - 1) + 1: stride,
                           dw: dw + stride * (ow - 1) + 1: stride, :])
    p = jnp.stack(cols, axis=3)                      # [N, OH, OW, k*k, C]
    return p.reshape(n, oh * ow, k * k * c), oh, ow


# ---------------------------------------------------------------------------
# Layer application
# ---------------------------------------------------------------------------
def basic_conv_apply(lp, x):
    """BasicConv: (transposed) conv (no bias) + GroupNorm(C//8) + ReLU. NHWC bf16."""
    n, h, w, _ = x.shape
    oc = lp['out_ch']
    if lp['deconv']:
        # ConvTranspose2d(4,2,1) lowered sub-pixel: stride-1 3x3 over the input
        # grid producing 4*OC parity-stacked channels (GN stats identical).
        y = _conv_shifted([x], lp, n, h, w)                       # [N, HW, 4*OC]
        y = y.reshape(n, h, w, 2, 2, oc).transpose(0, 1, 3, 2, 4, 5)
        # TODO(synk): fuse this depth-to-space relayout into the kernel's store.
        return y.reshape(n, 2 * h, 2 * w, oc)
    if lp['stride'] == 1 and lp['kernel'] == 3:
        y = _conv_shifted([x], lp, n, h, w)
        return y.reshape(n, h, w, oc)
    patches, oh, ow = _extract_patches_nhwc(x, lp['kernel'], lp['stride'],
                                            lp['padding'])
    y = _conv_patches(patches, lp, n, oh * ow)
    return y.reshape(n, oh, ow, oc)


def conv2x_apply(lp, x, rem):
    x = basic_conv_apply(lp['conv1'], x)
    assert x.shape == rem.shape
    # conv2 (3x3/s1) on concat([x, rem]) — concat fused into the kernel.
    n, h, w, _ = x.shape
    y = _conv_shifted([x, rem], lp['conv2'], n, h, w)
    return y.reshape(n, h, w, lp['conv2']['out_ch'])


# ---------------------------------------------------------------------------
# One-time parameter preparation (hoisted out of the forward pass)
# ---------------------------------------------------------------------------
def _conv_w2d(w, cin_pad=None):
    """torch Conv2d weight [OC, Cin, k, k] -> [k*k*Cin', OC], rows (dh, dw, ci)."""
    oc, cin, kh, kw = w.shape
    if cin_pad is not None and cin_pad > cin:
        w = jnp.pad(w, ((0, 0), (0, cin_pad - cin), (0, 0), (0, 0)))
        cin = cin_pad
    return jnp.transpose(w, (2, 3, 1, 0)).reshape(kh * kw * cin, oc)


# ConvTranspose2d(k=4,s=2,p=1): per output-parity a, offset dh of the 3x3 input
# patch maps to transposed-kernel row kh:
_SUBPIX_TAPS = {(0, 0): 3, (0, 1): 1, (1, 1): 2, (1, 2): 0}


def _deconv_effective_weight(w):
    """ConvTranspose2d weight [Cin, OC, 4, 4] -> [9*Cin, 4*OC] for a stride-1
    3x3 GEMM over the input grid producing parity-stacked channels (a*2+b)*OC+oc."""
    cin, oc = w.shape[0], w.shape[1]
    we = jnp.zeros((3, 3, cin, 2, 2, oc), w.dtype)
    for (a, dh), kh in _SUBPIX_TAPS.items():
        for (b, dw), kw in _SUBPIX_TAPS.items():
            we = we.at[dh, dw, :, a, b, :].set(w[:, :, kh, kw])
    return we.reshape(9 * cin, 4 * oc)


def prepare_basic_conv(raw, in_ch_pad=None, concat_in=False):
    w = raw['w']
    if raw['deconv']:
        cin, oc = w.shape[0], w.shape[1]
        w2d = _deconv_effective_weight(w)
        gid = np.tile(np.arange(oc) // CPG, 4)
        members = 4 * CPG
        cins = (cin,)
        gamma = jnp.tile(raw['gamma'], 4)
        beta = jnp.tile(raw['beta'], 4)
    elif concat_in:
        oc = w.shape[0]
        half = w.shape[1] // 2
        w2d = jnp.concatenate([_conv_w2d(w[:, :half]), _conv_w2d(w[:, half:])], 0)
        gid = np.arange(oc) // CPG
        members = CPG
        cins = (half, half)
        gamma, beta = raw['gamma'], raw['beta']
    else:
        oc, cin = w.shape[0], w.shape[1]
        cinp = in_ch_pad if in_ch_pad is not None else cin
        w2d = _conv_w2d(w, cinp)
        gid = np.arange(oc) // CPG
        members = CPG
        cins = (cinp,)
        gamma, beta = raw['gamma'], raw['beta']
    cout = w2d.shape[1]
    gsel = jnp.asarray(gid[:, None] == gid[None, :], jnp.bfloat16)
    return {'w2d': w2d.astype(jnp.bfloat16), 'cins': cins, 'gsel': gsel,
            'gamma2d': gamma.astype(jnp.float32).reshape(1, cout),
            'beta2d': beta.astype(jnp.float32).reshape(1, cout),
            'members': members, 'out_ch': oc,
            'deconv': raw['deconv'], 'kernel': raw['kernel'],
            'stride': raw['stride'], 'padding': raw['padding'],
            'w_raw': raw['w'], 'gamma_raw': raw['gamma'], 'beta_raw': raw['beta']}


def prepare_conv2x(raw):
    return {'conv1': prepare_basic_conv(raw['conv1']),
            'conv2': prepare_basic_conv(raw['conv2'], concat_in=True)}


def prepare_feature(raw):
    p = {'conv_start': [prepare_basic_conv(raw['conv_start'][0],
                                           in_ch_pad=_FIRST_CIN_PAD),
                        prepare_basic_conv(raw['conv_start'][1]),
                        prepare_basic_conv(raw['conv_start'][2])]}
    for name in ['conv1a', 'conv2a', 'conv3a', 'conv4a']:
        p[name] = prepare_basic_conv(raw[name])
    for name in ['deconv4a', 'deconv3a', 'deconv2a', 'deconv1a',
                 'conv1b', 'conv2b', 'conv3b', 'conv4b',
                 'deconv4b', 'deconv3b', 'deconv2b', 'deconv1b']:
        p[name] = prepare_conv2x(raw[name])
    return p


# ---------------------------------------------------------------------------
# Deterministic synthetic parameters (mirrors the PyTorch module __init__)
# ---------------------------------------------------------------------------
def make_bc(key, ic, oc, k, s, pad, deconv=False):
    kw_, kg, kb_ = jax.random.split(key, 3)
    shape = (ic, oc, k, k) if deconv else (oc, ic, k, k)
    return {'w': jax.random.normal(kw_, shape, jnp.float32) * 0.05,
            'gamma': 1.0 + 0.1 * jax.random.normal(kg, (oc,), jnp.float32),
            'beta': 0.05 * jax.random.normal(kb_, (oc,), jnp.float32),
            'kernel': k, 'stride': s, 'padding': pad, 'deconv': deconv}


def make_conv2x(key, ic, oc, deconv=False):
    k1, k2 = jax.random.split(key)
    kernel = 4 if deconv else 3
    return {'conv1': make_bc(k1, ic, oc, kernel, 2, 1, deconv=deconv),
            'conv2': make_bc(k2, oc * 2, oc, 3, 1, 1, deconv=False)}


def init_feature(key):
    ks = jax.random.split(key, 19)
    p = {}
    p['conv_start'] = [make_bc(ks[0], 3, 32, 3, 1, 1),
                       make_bc(ks[1], 32, 32, 5, 3, 2),
                       make_bc(ks[2], 32, 32, 3, 1, 1)]
    p['conv1a'] = make_bc(ks[3], 32, 48, 3, 2, 1)
    p['conv2a'] = make_bc(ks[4], 48, 64, 3, 2, 1)
    p['conv3a'] = make_bc(ks[5], 64, 96, 3, 2, 1)
    p['conv4a'] = make_bc(ks[6], 96, 128, 3, 2, 1)
    p['deconv4a'] = make_conv2x(ks[7], 128, 96, deconv=True)
    p['deconv3a'] = make_conv2x(ks[8], 96, 64, deconv=True)
    p['deconv2a'] = make_conv2x(ks[9], 64, 48, deconv=True)
    p['deconv1a'] = make_conv2x(ks[10], 48, 32, deconv=True)
    p['conv1b'] = make_conv2x(ks[11], 32, 48)
    p['conv2b'] = make_conv2x(ks[12], 48, 64)
    p['conv3b'] = make_conv2x(ks[13], 64, 96)
    p['conv4b'] = make_conv2x(ks[14], 96, 128)
    p['deconv4b'] = make_conv2x(ks[15], 128, 96, deconv=True)
    p['deconv3b'] = make_conv2x(ks[16], 96, 64, deconv=True)
    p['deconv2b'] = make_conv2x(ks[17], 64, 48, deconv=True)
    p['deconv1b'] = make_conv2x(ks[18], 48, 32, deconv=True)
    return p


def feature_forward(p, x):
    """x: NHWC bf16 (channels pre-padded to _FIRST_CIN_PAD) -> NHWC bf16."""
    for bc in p['conv_start']:
        x = basic_conv_apply(bc, x)
    rem0 = x
    x = basic_conv_apply(p['conv1a'], x); rem1 = x
    x = basic_conv_apply(p['conv2a'], x); rem2 = x
    x = basic_conv_apply(p['conv3a'], x); rem3 = x
    x = basic_conv_apply(p['conv4a'], x); rem4 = x
    x = conv2x_apply(p['deconv4a'], x, rem3); rem3 = x
    x = conv2x_apply(p['deconv3a'], x, rem2); rem2 = x
    x = conv2x_apply(p['deconv2a'], x, rem1); rem1 = x
    x = conv2x_apply(p['deconv1a'], x, rem0); rem0 = x
    x = conv2x_apply(p['conv1b'], x, rem1); rem1 = x
    x = conv2x_apply(p['conv2b'], x, rem2); rem2 = x
    x = conv2x_apply(p['conv3b'], x, rem3); rem3 = x
    x = conv2x_apply(p['conv4b'], x, rem4)
    x = conv2x_apply(p['deconv4b'], x, rem3)
    x = conv2x_apply(p['deconv3b'], x, rem2)
    x = conv2x_apply(p['deconv2b'], x, rem1)
    x = conv2x_apply(p['deconv1b'], x, rem0)
    return x


# ---------------------------------------------------------------------------
# Pure-XLA references for numerical validation
# ---------------------------------------------------------------------------
def _b2f(a):
    return a.astype(jnp.bfloat16).astype(jnp.float32)


def _ref_conv2d(x, w, stride, padding):
    return lax.conv_general_dilated(
        x, jnp.transpose(w, (2, 3, 1, 0)),
        window_strides=(stride, stride),
        padding=[(padding, padding), (padding, padding)],
        dimension_numbers=('NHWC', 'HWIO', 'NHWC'),
        precision=lax.Precision.HIGHEST)


def _ref_deconv2d(x, w):
    # ConvTranspose2d(k=4, s=2, p=1) == conv(dilate(x,2), flip(w), pad=2)
    wf = jnp.transpose(jnp.flip(w, (2, 3)), (2, 3, 0, 1))
    return lax.conv_general_dilated(
        x, wf, window_strides=(1, 1), padding=[(2, 2), (2, 2)],
        lhs_dilation=(2, 2), dimension_numbers=('NHWC', 'HWIO', 'NHWC'),
        precision=lax.Precision.HIGHEST)


def _ref_gn_relu(x, gamma, beta):
    n, h, w, c = x.shape
    xr = x.reshape(n, h * w, c // CPG, CPG)
    mean = xr.mean(axis=(1, 3), keepdims=True)
    var = ((xr - mean) ** 2).mean(axis=(1, 3), keepdims=True)
    xn = ((xr - mean) * lax.rsqrt(var + EPS)).reshape(n, h, w, c)
    return jnp.maximum(xn * gamma + beta, 0.0)


# ---------------------------------------------------------------------------
if __name__ == "__main__":
    key = jax.random.PRNGKey(0)
    kx, kp, ka, kb = jax.random.split(key, 4)
    raw_params = init_feature(kp)
    params = prepare_feature(raw_params)      # one-time weight preprocessing

    def check(name, got, want, tol=3e-2):
        np.testing.assert_allclose(np.asarray(got, np.float32),
                                   np.asarray(want, np.float32),
                                   atol=tol, rtol=tol, err_msg=name)

    kc1, kc2, kc3 = jax.random.split(ka, 3)

    # (A) plain 3x3/s1 conv  (in-kernel im2col, per-sample grid blocks)
    lpA = params['conv_start'][2]
    xA = jax.random.normal(kc1, (2, 16, 16, 32), jnp.float32).astype(jnp.bfloat16)
    outA = jax.jit(lambda v: basic_conv_apply(lpA, v))(xA)
    refA = _ref_gn_relu(_ref_conv2d(xA.astype(jnp.float32), _b2f(lpA['w_raw']), 1, 1),
                        lpA['gamma_raw'], lpA['beta_raw'])
    check("conv3x3_s1", outA, refA)

    # (B) strided 3x3/s2 conv  (patches path, batch folded into GEMM M)
    lpB = params['conv1a']
    xB = jax.random.normal(kc2, (2, 16, 16, 32), jnp.float32).astype(jnp.bfloat16)
    outB = jax.jit(lambda v: basic_conv_apply(lpB, v))(xB)
    refB = _ref_gn_relu(_ref_conv2d(xB.astype(jnp.float32), _b2f(lpB['w_raw']), 2, 1),
                        lpB['gamma_raw'], lpB['beta_raw'])
    check("conv3x3_s2", outB, refB)

    # (C) deconv Conv2x: sub-pixel ConvTranspose2d + GN + ReLU, then the
    #     concat-fused 3x3 conv (validates the transposed-conv decomposition).
    lpC = params['deconv1a']
    xC = jax.random.normal(kc3, (2, 8, 8, 48), jnp.float32).astype(jnp.bfloat16)
    remC = jax.random.normal(kb, (2, 16, 16, 32), jnp.float32).astype(jnp.bfloat16)
    outC = jax.jit(lambda a, b: conv2x_apply(lpC, a, b))(xC, remC)
    y1 = _ref_gn_relu(_ref_deconv2d(xC.astype(jnp.float32), _b2f(lpC['conv1']['w_raw'])),
                      lpC['conv1']['gamma_raw'], lpC['conv1']['beta_raw'])
    cat = jnp.concatenate([_b2f(y1), remC.astype(jnp.float32)], axis=-1)
    refC = _ref_gn_relu(_ref_conv2d(cat, _b2f(lpC['conv2']['w_raw']), 1, 1),
                        lpC['conv2']['gamma_raw'], lpC['conv2']['beta_raw'])
    check("deconv_conv2x", outC, refC)

    # ---- full forward pass --------------------------------------------------
    # spatial 48: conv_start (stride 3) -> 16, halved down to 1, back up to 16.
    x = jax.random.normal(kx, (2, 3, 48, 48), jnp.float32)

    @jax.jit
    def fwd(x_nchw):
        xh = jnp.transpose(x_nchw, (0, 2, 3, 1))                    # -> NHWC
        xh = jnp.pad(xh, ((0, 0), (0, 0), (0, 0), (0, _FIRST_CIN_PAD - 3)))
        y = feature_forward(params, xh.astype(jnp.bfloat16))
        return jnp.transpose(y, (0, 3, 1, 2)).astype(jnp.float32)   # -> NCHW

    out = jax.block_until_ready(fwd(x))
    assert out.shape == (2, 32, 16, 16), out.shape
    assert bool(jnp.all(jnp.isfinite(out)))
    print("KERNEL_OK")
</pallas_src>

<mosaic_0001>
module attributes {stable_mosaic.version = 11 : i64} {
  func.func @_fused_conv_gn_relu_kernel(%arg0: i32, %arg1: memref<1x290x32xbf16, #tpu.memory_space<vmem>>, %arg2: memref<256x9xbf16, #tpu.memory_space<vmem>>, %arg3: memref<288x32xbf16, #tpu.memory_space<vmem>>, %arg4: memref<1x256xf32, #tpu.memory_space<vmem>>, %arg5: memref<32x32xbf16, #tpu.memory_space<vmem>>, %arg6: memref<1x32xf32, #tpu.memory_space<vmem>>, %arg7: memref<1x32xf32, #tpu.memory_space<vmem>>, %arg8: memref<1x256x32xbf16, #tpu.memory_space<vmem>>) attributes {dimension_semantics = [#tpu.dimension_semantics<parallel>], iteration_bounds = array<i64: 2>, scalar_prefetch = 0 : i64, scratch_operands = 0 : i64, tpu.core_type = #tpu.core_type<tc>, window_params = [{transform_indices = @transform_0, window_bounds = array<i64: 1, 290, 32>}, {pipeline_mode = #tpu.pipeline_mode<synchronous>, transform_indices = @transform_1, window_bounds = array<i64: 256, 9>}, {pipeline_mode = #tpu.pipeline_mode<synchronous>, transform_indices = @transform_2, window_bounds = array<i64: 288, 32>}, {pipeline_mode = #tpu.pipeline_mode<synchronous>, transform_indices = @transform_3, window_bounds = array<i64: 1, 256>}, {pipeline_mode = #tpu.pipeline_mode<synchronous>, transform_indices = @transform_4, window_bounds = array<i64: 32, 32>}, {pipeline_mode = #tpu.pipeline_mode<synchronous>, transform_indices = @transform_5, window_bounds = array<i64: 1, 32>}, {pipeline_mode = #tpu.pipeline_mode<synchronous>, transform_indices = @transform_6, window_bounds = array<i64: 1, 32>}, {transform_indices = @transform_7, window_bounds = array<i64: 1, 256, 32>}]} {
    %c0 = arith.constant 0 : index
    %c0_0 = arith.constant 0 : index
    %c0_1 = arith.constant 0 : index
    %0 = vector.load %arg1[%c0, %c0_0, %c0_1] : memref<1x290x32xbf16, #tpu.memory_space<vmem>>, vector<1x256x32xbf16>
    %1 = vector.shape_cast %0 : vector<1x256x32xbf16> to vector<256x32xbf16>
    %c0_2 = arith.constant 0 : index
    %c0_3 = arith.constant 0 : index
    %2 = vector.load %arg2[%c0_2, %c0_3] : memref<256x9xbf16, #tpu.memory_space<vmem>>, vector<256x1xbf16>
    %3 = vector.broadcast %2 : vector<256x1xbf16> to vector<256x32xbf16>
    %4 = arith.mulf %1, %3 : vector<256x32xbf16>
    %c0_4 = arith.constant 0 : index
    %c0_5 = arith.constant 0 : index
    %5 = vector.load %arg3[%c0_4, %c0_5] : memref<288x32xbf16, #tpu.memory_space<vmem>>, vector<32x32xbf16>
    %cst = arith.constant dense<0.000000e+00> : vector<256x32xf32>
    %6 = tpu.matmul %4, %5, %cst {dimension_numbers = #tpu.dot_dimension_numbers<[1], [0], [0], [1], [0, 0, 1, 1], [], []>} : vector<256x32xbf16>, vector<32x32xbf16>, vector<256x32xf32> -> vector<256x32xf32>
    %c0_6 = arith.constant 0 : index
    %c1 = arith.constant 1 : index
    %c0_7 = arith.constant 0 : index
    %7 = vector.load %arg1[%c0_6, %c1, %c0_7] : memref<1x290x32xbf16, #tpu.memory_space<vmem>>, vector<1x256x32xbf16>
    %8 = vector.shape_cast %7 : vector<1x256x32xbf16> to vector<256x32xbf16>
    %c0_8 = arith.constant 0 : index
    %c1_9 = arith.constant 1 : index
    %9 = vector.load %arg2[%c0_8, %c1_9] : memref<256x9xbf16, #tpu.memory_space<vmem>>, vector<256x1xbf16>
    %10 = vector.broadcast %9 : vector<256x1xbf16> to vector<256x32xbf16>
    %11 = arith.mulf %8, %10 : vector<256x32xbf16>
    %c32 = arith.constant 32 : index
    %c0_10 = arith.constant 0 : index
    %12 = vector.load %arg3[%c32, %c0_10] : memref<288x32xbf16, #tpu.memory_space<vmem>>, vector<32x32xbf16>
    %cst_11 = arith.constant dense<0.000000e+00> : vector<256x32xf32>
    %13 = tpu.matmul %11, %12, %cst_11 {dimension_numbers = #tpu.dot_dimension_numbers<[1], [0], [0], [1], [0, 0, 1, 1], [], []>} : vector<256x32xbf16>, vector<32x32xbf16>, vector<256x32xf32> -> vector<256x32xf32>
    %14 = arith.addf %6, %13 : vector<256x32xf32>
    %c0_12 = arith.constant 0 : index
    %c2 = arith.constant 2 : index
    %c0_13 = arith.constant 0 : index
    %15 = vector.load %arg1[%c0_12, %c2, %c0_13] : memref<1x290x32xbf16, #tpu.memory_space<vmem>>, vector<1x256x32xbf16>
    %16 = vector.shape_cast %15 : vector<1x256x32xbf16> to vector<256x32xbf16>
    %c0_14 = arith.constant 0 : index
    %c2_15 = arith.constant 2 : index
    %17 = vector.load %arg2[%c0_14, %c2_15] : memref<256x9xbf16, #tpu.memory_space<vmem>>, vector<256x1xbf16>
    %18 = vector.broadcast %17 : vector<256x1xbf16> to vector<256x32xbf16>
    %19 = arith.mulf %16, %18 : vector<256x32xbf16>
    %c64 = arith.constant 64 : index
    %c0_16 = arith.constant 0 : index
    %20 = vector.load %arg3[%c64, %c0_16] : memref<288x32xbf16, #tpu.memory_space<vmem>>, vector<32x32xbf16>
    %cst_17 = arith.constant dense<0.000000e+00> : vector<256x32xf32>
    %21 = tpu.matmul %19, %20, %cst_17 {dimension_numbers = #tpu.dot_dimension_numbers<[1], [0], [0], [1], [0, 0, 1, 1], [], []>} : vector<256x32xbf16>, vector<32x32xbf16>, vector<256x32xf32> -> vector<256x32xf32>
    %22 = arith.addf %14, %21 : vector<256x32xf32>
    %c0_18 = arith.constant 0 : index
    %c16 = arith.constant 16 : index
    %c0_19 = arith.constant 0 : index
    %23 = vector.load %arg1[%c0_18, %c16, %c0_19] : memref<1x290x32xbf16, #tpu.memory_space<vmem>>, vector<1x256x32xbf16>
    %24 = vector.shape_cast %23 : vector<1x256x32xbf16> to vector<256x32xbf16>
    %c0_20 = arith.constant 0 : index
    %c3 = arith.constant 3 : index
    %25 = vector.load %arg2[%c0_20, %c3] : memref<256x9xbf16, #tpu.memory_space<vmem>>, vector<256x1xbf16>
    %26 = vector.broadcast %25 : vector<256x1xbf16> to vector<256x32xbf16>
    %27 = arith.mulf %24, %26 : vector<256x32xbf16>
    %c96 = arith.constant 96 : index
    %c0_21 = arith.constant 0 : index
    %28 = vector.load %arg3[%c96, %c0_21] : memref<288x32xbf16, #tpu.memory_space<vmem>>, vector<32x32xbf16>
    %cst_22 = arith.constant dense<0.000000e+00> : vector<256x32xf32>
    %29 = tpu.matmul %27, %28, %cst_22 {dimension_numbers = #tpu.dot_dimension_numbers<[1], [0], [0], [1], [0, 0, 1, 1], [], []>} : vector<256x32xbf16>, vector<32x32xbf16>, vector<256x32xf32> -> vector<256x32xf32>
    %30 = arith.addf %22, %29 : vector<256x32xf32>
    %c0_23 = arith.constant 0 : index
    %c17 = arith.constant 17 : index
    %c0_24 = arith.constant 0 : index
    %31 = vector.load %arg1[%c0_23, %c17, %c0_24] : memref<1x290x32xbf16, #tpu.memory_space<vmem>>, vector<1x256x32xbf16>
    %32 = vector.shape_cast %31 : vector<1x256x32xbf16> to vector<256x32xbf16>
    %c0_25 = arith.constant 0 : index
    %c4 = arith.constant 4 : index
    %33 = vector.load %arg2[%c0_25, %c4] : memref<256x9xbf16, #tpu.memory_space<vmem>>, vector<256x1xbf16>
    %34 = vector.broadcast %33 : vector<256x1xbf16> to vector<256x32xbf16>
    %35 = arith.mulf %32, %34 : vector<256x32xbf16>
    %c128 = arith.constant 128 : index
    %c0_26 = arith.constant 0 : index
    %36 = vector.load %arg3[%c128, %c0_26] : memref<288x32xbf16, #tpu.memory_space<vmem>>, vector<32x32xbf16>
    %cst_27 = arith.constant dense<0.000000e+00> : vector<256x32xf32>
    %37 = tpu.matmul %35, %36, %cst_27 {dimension_numbers = #tpu.dot_dimension_numbers<[1], [0], [0], [1], [0, 0, 1, 1], [], []>} : vector<256x32xbf16>, vector<32x32xbf16>, vector<256x32xf32> -> vector<256x32xf32>
    %38 = arith.addf %30, %37 : vector<256x32xf32>
    %c0_28 = arith.constant 0 : index
    %c18 = arith.constant 18 : index
    %c0_29 = arith.constant 0 : index
    %39 = vector.load %arg1[%c0_28, %c18, %c0_29] : memref<1x290x32xbf16, #tpu.memory_space<vmem>>, vector<1x256x32xbf16>
    %40 = vector.shape_cast %39 : vector<1x256x32xbf16> to vector<256x32xbf16>
    %c0_30 = arith.constant 0 : index
    %c5 = arith.constant 5 : index
    %41 = vector.load %arg2[%c0_30, %c5] : memref<256x9xbf16, #tpu.memory_space<vmem>>, vector<256x1xbf16>
    %42 = vector.broadcast %41 : vector<256x1xbf16> to vector<256x32xbf16>
    %43 = arith.mulf %40, %42 : vector<256x32xbf16>
    %c160 = arith.constant 160 : index
    %c0_31 = arith.constant 0 : index
    %44 = vector.load %arg3[%c160, %c0_31] : memref<288x32xbf16, #tpu.memory_space<vmem>>, vector<32x32xbf16>
    %cst_32 = arith.constant dense<0.000000e+00> : vector<256x32xf32>
    %45 = tpu.matmul %43, %44, %cst_32 {dimension_numbers = #tpu.dot_dimension_numbers<[1], [0], [0], [1], [0, 0, 1, 1], [], []>} : vector<256x32xbf16>, vector<32x32xbf16>, vector<256x32xf32> -> vector<256x32xf32>
    %46 = arith.addf %38, %45 : vector<256x32xf32>
    %c0_33 = arith.constant 0 : index
    %c32_34 = arith.constant 32 : index
    %c0_35 = arith.constant 0 : index
    %47 = vector.load %arg1[%c0_33, %c32_34, %c0_35] : memref<1x290x32xbf16, #tpu.memory_space<vmem>>, vector<1x256x32xbf16>
    %48 = vector.shape_cast %47 : vector<1x256x32xbf16> to vector<256x32xbf16>
    %c0_36 = arith.constant 0 : index
    %c6 = arith.constant 6 : index
    %49 = vector.load %arg2[%c0_36, %c6] : memref<256x9xbf16, #tpu.memory_space<vmem>>, vector<256x1xbf16>
    %50 = vector.broadcast %49 : vector<256x1xbf16> to vector<256x32xbf16>
    %51 = arith.mulf %48, %50 : vector<256x32xbf16>
    %c192 = arith.constant 192 : index
    %c0_37 = arith.constant 0 : index
    %52 = vector.load %arg3[%c192, %c0_37] : memref<288x32xbf16, #tpu.memory_space<vmem>>, vector<32x32xbf16>
    %cst_38 = arith.constant dense<0.000000e+00> : vector<256x32xf32>
    %53 = tpu.matmul %51, %52, %cst_38 {dimension_numbers = #tpu.dot_dimension_numbers<[1], [0], [0], [1], [0, 0, 1, 1], [], []>} : vector<256x32xbf16>, vector<32x32xbf16>, vector<256x32xf32> -> vector<256x32xf32>
    %54 = arith.addf %46, %53 : vector<256x32xf32>
    %c0_39 = arith.constant 0 : index
    %c33 = arith.constant 33 : index
    %c0_40 = arith.constant 0 : index
    %55 = vector.load %arg1[%c0_39, %c33, %c0_40] : memref<1x290x32xbf16, #tpu.memory_space<vmem>>, vector<1x256x32xbf16>
    %56 = vector.shape_cast %55 : vector<1x256x32xbf16> to vector<256x32xbf16>
    %c0_41 = arith.constant 0 : index
    %c7 = arith.constant 7 : index
    %57 = vector.load %arg2[%c0_41, %c7] : memref<256x9xbf16, #tpu.memory_space<vmem>>, vector<256x1xbf16>
    %58 = vector.broadcast %57 : vector<256x1xbf16> to vector<256x32xbf16>
    %59 = arith.mulf %56, %58 : vector<256x32xbf16>
    %c224 = arith.constant 224 : index
    %c0_42 = arith.constant 0 : index
    %60 = vector.load %arg3[%c224, %c0_42] : memref<288x32xbf16, #tpu.memory_space<vmem>>, vector<32x32xbf16>
    %cst_43 = arith.constant dense<0.000000e+00> : vector<256x32xf32>
    %61 = tpu.matmul %59, %60, %cst_43 {dimension_numbers = #tpu.dot_dimension_numbers<[1], [0], [0], [1], [0, 0, 1, 1], [], []>} : vector<256x32xbf16>, vector<32x32xbf16>, vector<256x32xf32> -> vector<256x32xf32>
    %62 = arith.addf %54, %61 : vector<256x32xf32>
    %c0_44 = arith.constant 0 : index
    %c34 = arith.constant 34 : index
    %c0_45 = arith.constant 0 : index
    %63 = vector.load %arg1[%c0_44, %c34, %c0_45] : memref<1x290x32xbf16, #tpu.memory_space<vmem>>, vector<1x256x32xbf16>
    %64 = vector.shape_cast %63 : vector<1x256x32xbf16> to vector<256x32xbf16>
    %c0_46 = arith.constant 0 : index
    %c8 = arith.constant 8 : index
    %65 = vector.load %arg2[%c0_46, %c8] : memref<256x9xbf16, #tpu.memory_space<vmem>>, vector<256x1xbf16>
    %66 = vector.broadcast %65 : vector<256x1xbf16> to vector<256x32xbf16>
    %67 = arith.mulf %64, %66 : vector<256x32xbf16>
    %c256 = arith.constant 256 : index
    %c0_47 = arith.constant 0 : index
    %68 = vector.load %arg3[%c256, %c0_47] : memref<288x32xbf16, #tpu.memory_space<vmem>>, vector<32x32xbf16>
    %cst_48 = arith.constant dense<0.000000e+00> : vector<256x32xf32>
    %69 = tpu.matmul %67, %68, %cst_48 {dimension_numbers = #tpu.dot_dimension_numbers<[1], [0], [0], [1], [0, 0, 1, 1], [], []>} : vector<256x32xbf16>, vector<32x32xbf16>, vector<256x32xf32> -> vector<256x32xf32>
    %70 = arith.addf %62, %69 : vector<256x32xf32>
    %c0_49 = arith.constant 0 : index
    %c0_50 = arith.constant 0 : index
    %71 = vector.load %arg4[%c0_49, %c0_50] : memref<1x256xf32, #tpu.memory_space<vmem>>, vector<1x256xf32>
    %cst_51 = arith.constant dense<0.000000e+00> : vector<1x32xf32>
    %72 = tpu.matmul %71, %70, %cst_51 {dimension_numbers = #tpu.dot_dimension_numbers<[1], [0], [0], [1], [0, 0, 1, 1], [], []>} : vector<1x256xf32>, vector<256x32xf32>, vector<1x32xf32> -> vector<1x32xf32>
    %c0_52 = arith.constant 0 : index
    %c0_53 = arith.constant 0 : index
    %73 = vector.load %arg4[%c0_52, %c0_53] : memref<1x256xf32, #tpu.memory_space<vmem>>, vector<1x256xf32>
    %74 = arith.mulf %70, %70 : vector<256x32xf32>
    %cst_54 = arith.constant dense<0.000000e+00> : vector<1x32xf32>
    %75 = tpu.matmul %73, %74, %cst_54 {dimension_numbers = #tpu.dot_dimension_numbers<[1], [0], [0], [1], [0, 0, 1, 1], [], []>} : vector<1x256xf32>, vector<256x32xf32>, vector<1x32xf32> -> vector<1x32xf32>
    %c0_55 = arith.constant 0 : index
    %c0_56 = arith.constant 0 : index
    %76 = vector.load %arg5[%c0_55, %c0_56] : memref<32x32xbf16, #tpu.memory_space<vmem>>, vector<32x32xbf16>
    %77 = arith.extf %76 : vector<32x32xbf16> to vector<32x32xf32>
    %cst_57 = arith.constant dense<0.000000e+00> : vector<1x32xf32>
    %78 = tpu.matmul %72, %77, %cst_57 {dimension_numbers = #tpu.dot_dimension_numbers<[1], [0], [0], [1], [0, 0, 1, 1], [], []>} : vector<1x32xf32>, vector<32x32xf32>, vector<1x32xf32> -> vector<1x32xf32>
    %cst_58 = arith.constant dense<0.000000e+00> : vector<1x32xf32>
    %79 = tpu.matmul %75, %77, %cst_58 {dimension_numbers = #tpu.dot_dimension_numbers<[1], [0], [0], [1], [0, 0, 1, 1], [], []>} : vector<1x32xf32>, vector<32x32xf32>, vector<1x32xf32> -> vector<1x32xf32>
    %cst_59 = arith.constant 4.8828125E-4 : f32
    %80 = vector.broadcast %cst_59 : f32 to vector<1x32xf32>
    %81 = arith.mulf %78, %80 : vector<1x32xf32>
    %cst_60 = arith.constant 4.8828125E-4 : f32
    %82 = vector.broadcast %cst_60 : f32 to vector<1x32xf32>
    %83 = arith.mulf %79, %82 : vector<1x32xf32>
    %84 = arith.mulf %81, %81 : vector<1x32xf32>
    %85 = arith.subf %83, %84 : vector<1x32xf32>
    %cst_61 = arith.constant 0.000000e+00 : f32
    %86 = vector.broadcast %cst_61 : f32 to vector<1x32xf32>
    %87 = arith.maximumf %85, %86 : vector<1x32xf32>
    %cst_62 = arith.constant 9.99999974E-6 : f32
    %88 = vector.broadcast %cst_62 : f32 to vector<1x32xf32>
    %89 = arith.addf %87, %88 : vector<1x32xf32>
    %90 = math.rsqrt %89 : vector<1x32xf32>
    %c0_63 = arith.constant 0 : index
    %c0_64 = arith.constant 0 : index
    %91 = vector.load %arg6[%c0_63, %c0_64] : memref<1x32xf32, #tpu.memory_space<vmem>>, vector<1x32xf32>
    %92 = arith.mulf %90, %91 : vector<1x32xf32>
    %c0_65 = arith.constant 0 : index
    %c0_66 = arith.constant 0 : index
    %93 = vector.load %arg7[%c0_65, %c0_66] : memref<1x32xf32, #tpu.memory_space<vmem>>, vector<1x32xf32>
    %94 = arith.mulf %81, %92 : vector<1x32xf32>
    %95 = arith.subf %93, %94 : vector<1x32xf32>
    %96 = vector.broadcast %92 : vector<1x32xf32> to vector<256x32xf32>
    %97 = arith.mulf %70, %96 : vector<256x32xf32>
    %98 = vector.broadcast %95 : vector<1x32xf32> to vector<256x32xf32>
    %99 = arith.addf %97, %98 : vector<256x32xf32>
    %cst_67 = arith.constant 0.000000e+00 : f32
    %100 = vector.broadcast %cst_67 : f32 to vector<256x32xf32>
    %101 = arith.maximumf %99, %100 : vector<256x32xf32>
    %102 = arith.truncf %101 : vector<256x32xf32> to vector<256x32xbf16>
    %c0_68 = arith.constant 0 : index
    %c0_69 = arith.constant 0 : index
    %c0_70 = arith.constant 0 : index
    %103 = vector.load %arg8[%c0_68, %c0_69, %c0_70] : memref<1x256x32xbf16, #tpu.memory_space<vmem>>, vector<1x256x32xbf16>
    %104 = vector.shape_cast %103 : vector<1x256x32xbf16> to vector<256x32xbf16>
    %105 = vector.shape_cast %102 : vector<256x32xbf16> to vector<1x256x32xbf16>
    tpu.vector_store %arg8[%c0_68, %c0_69, %c0_70], %105 {strides = array<i32>} : memref<1x256x32xbf16, #tpu.memory_space<vmem>>, vector<1x256x32xbf16>,
    return
  }
  func.func @transform_0(%arg0: i32) -> (i32, i32, i32) {
    %c0_i32 = arith.constant 0 : i32
    %c0_i32_0 = arith.constant 0 : i32
    %c0_i32_1 = arith.constant 0 : i32
    return %arg0, %c0_i32, %c0_i32_0 : i32, i32, i32
  }
  func.func @transform_1(%arg0: i32) -> (i32, i32) {
    %c0_i32 = arith.constant 0 : i32
    %c0_i32_0 = arith.constant 0 : i32
    %c0_i32_1 = arith.constant 0 : i32
    return %c0_i32, %c0_i32_0 : i32, i32
  }
  func.func @transform_2(%arg0: i32) -> (i32, i32) {
    %c0_i32 = arith.constant 0 : i32
    %c0_i32_0 = arith.constant 0 : i32
    %c0_i32_1 = arith.constant 0 : i32
    return %c0_i32, %c0_i32_0 : i32, i32
  }
  func.func @transform_3(%arg0: i32) -> (i32, i32) {
    %c0_i32 = arith.constant 0 : i32
    %c0_i32_0 = arith.constant 0 : i32
    %c0_i32_1 = arith.constant 0 : i32
    return %c0_i32, %c0_i32_0 : i32, i32
  }
  func.func @transform_4(%arg0: i32) -> (i32, i32) {
    %c0_i32 = arith.constant 0 : i32
    %c0_i32_0 = arith.constant 0 : i32
    %c0_i32_1 = arith.constant 0 : i32
    return %c0_i32, %c0_i32_0 : i32, i32
  }
  func.func @transform_5(%arg0: i32) -> (i32, i32) {
    %c0_i32 = arith.constant 0 : i32
    %c0_i32_0 = arith.constant 0 : i32
    %c0_i32_1 = arith.constant 0 : i32
    return %c0_i32, %c0_i32_0 : i32, i32
  }
  func.func @transform_6(%arg0: i32) -> (i32, i32) {
    %c0_i32 = arith.constant 0 : i32
    %c0_i32_0 = arith.constant 0 : i32
    %c0_i32_1 = arith.constant 0 : i32
    return %c0_i32, %c0_i32_0 : i32, i32
  }
  func.func @transform_7(%arg0: i32) -> (i32, i32, i32) {
    %c0_i32 = arith.constant 0 : i32
    %c0_i32_0 = arith.constant 0 : i32
    %c0_i32_1 = arith.constant 0 : i32
    return %arg0, %c0_i32, %c0_i32_0 : i32, i32, i32
  }
}

</mosaic_0001>

<llo_original>
// kernel: _lambda_.1
$region0: #{_lambda_.1}
  #allocation0 [shape = 'u32[]', space=smem, size = 0x4, offset = 0x4, fixed_abs, tag = 'smem constant byte address 0x4 - core index']
  #allocation1 [shape = 'u32[72,128]{1,0:T(1,128)}', space=vmem, size = 0x9000, scoped, tag = 'internal scratch']
  %s0 = inlined_call_operand.vmem [shape: bf16[2,290,32], index: 0, kind: input, shape index: {}]
  %s1 = inlined_call_operand.vmem [shape: bf16[256,9], index: 1, kind: input, shape index: {}]
  %s2 = inlined_call_operand.vmem [shape: bf16[288,32], index: 2, kind: input, shape index: {}]
  %s3 = inlined_call_operand.vmem [shape: f32[1,256], index: 3, kind: input, shape index: {}]
  %s4 = inlined_call_operand.vmem [shape: bf16[32,32], index: 4, kind: input, shape index: {}]
  %s5 = inlined_call_operand.vmem [shape: f32[1,32], index: 5, kind: input, shape index: {}]
  %s6 = inlined_call_operand.vmem [shape: f32[1,32], index: 6, kind: input, shape index: {}]
  %s7 = inlined_call_operand.hbm [shape: bf16[2,256,32], index: 7, kind: output, shape index: {}]
  %s8 = sld [smem:[#allocation0]]
  $region61: #{_lambda_.1} parent=0
    _
  %s10 = ssub.s32 1, %s8
  %s11 = scalar_select 0, %s10, %s8
  $region1: #{_lambda_.1} parent=0
    #allocation2 [shape = 'u8[131072]{0}', space=vmem, size = 0x20000, scoped, tag = 'output window, operand 0']
    #allocation3 [shape = 's32[2]{0}', space=sflag, size = 0x8, scoped, tag = 'scoped memory for _lambda_.1']
    %12 = vsyncpa [#allocation3], 0
    %s13 = scalar_lea.sflag [#allocation3], 1
    %14 = vsyncpa %s13, 0
    loop: start=0, step=1, limit=4
    $region2: #{_lambda_.1} parent=1 // loop_pre_header
      _
    $region3: #{_lambda_.1} parent=1 // loop_header
      %s16 = sphi 0, %s20
      %p17 = scmp.ge.s32.totalorder %s16, 4
      %s26 = sphi 0, %s28
      %s29 = sphi 0, %s26
      %s30 = sphi 0, %s29
      %s46 = sphi 0, %s30
      %s50 = sphi 0, %s50
      %s52 = sphi 0, %s50
      %s53 = sphi 0, %s52
      %s67 = sphi 0, %s53
      %s71 = sphi 0, %s71
      %s73 = sphi 0, %s71
      %s74 = sphi 0, %s73
      %s88 = sphi 0, %s74
      %s92 = sphi 0, %s92
      %s94 = sphi 0, %s92
      %s95 = sphi 0, %s94
      %s109 = sphi 0, %s95
      %s113 = sphi 0, %s113
      %s115 = sphi 0, %s113
      %s116 = sphi 0, %s115
      %s130 = sphi 0, %s116
      %s134 = sphi 0, %s134
      %s136 = sphi 0, %s134
      %s137 = sphi 0, %s136
      %s151 = sphi 0, %s137
      %s155 = sphi 0, %s155
      %s157 = sphi 0, %s155
      %s158 = sphi 0, %s157
      %s172 = sphi 0, %s158
      %s178 = sphi 0, %s180
      %s181 = sphi 0, %s178
      %s182 = sphi 0, %s181
      %s198 = sphi 0, %s182
    $region4: #{_lambda_.1} parent=1 // loop_header_branch
      %19 = sbr.rel (%p17) target = $region8
    $region5: #{_lambda_.1} parent=1 // loop_body
      %s21 = ssub.s32 %s16, 1
      %s22 = ssub.s32 %s16, 2
      %s23 = sadd.s32 %s16, 1
      %s24 = ssub.s32 %s16, %s23
      %p25 = scmp.eq.s32.totalorder %s24, 0
      %s27 = sadd.s32 %s26, 1
      %s28 = scalar_select %p25, %s26, %s27
      %p31 = pneg %p25
      %p32 = scmp.eq.s32.totalorder %s16, 1
      %p33 = por %p31, %p32
      %p34 = scmp.ne.s32.totalorder %s26, %s29
      %p35 = scmp.eq.s32.totalorder %s16, 0
      %p36 = por %p34, %p35
      %p37 = scmp.ne.s32.totalorder %s26, %s29
      %p38 = scmp.eq.s32.totalorder %s21, 1
      %p39 = por %p37, %p38
      %p40 = scmp.ne.s32.totalorder %s29, %s30
      %p41 = scmp.eq.s32.totalorder %s21, 0
      %p42 = por %p40, %p41
      %p43 = scmp.ne.s32.totalorder %s29, %s30
      %p44 = scmp.eq.s32.totalorder %s22, 1
      %p45 = por %p43, %p44
      %p47 = scmp.ne.s32.totalorder %s30, %s46
      %p48 = scmp.eq.s32.totalorder %s22, 0
      %p49 = por %p47, %p48
      %s51 = sadd.s32 %s50, 1
      %p54 = scmp.eq.s32.totalorder %s16, 1
      %p55 = scmp.ne.s32.totalorder %s50, %s52
      %p56 = scmp.eq.s32.totalorder %s16, 0
      %p57 = por %p55, %p56
      %p58 = scmp.ne.s32.totalorder %s50, %s52
      %p59 = scmp.eq.s32.totalorder %s21, 1
      %p60 = por %p58, %p59
      %p61 = scmp.ne.s32.totalorder %s52, %s53
      %p62 = scmp.eq.s32.totalorder %s21, 0
      %p63 = por %p61, %p62
      %p64 = scmp.ne.s32.totalorder %s52, %s53
      %p65 = scmp.eq.s32.totalorder %s22, 1
      %p66 = por %p64, %p65
      %p68 = scmp.ne.s32.totalorder %s53, %s67
      %p69 = scmp.eq.s32.totalorder %s22, 0
      %p70 = por %p68, %p69
      %s72 = sadd.s32 %s71, 1
      %p75 = scmp.eq.s32.totalorder %s16, 1
      %p76 = scmp.ne.s32.totalorder %s71, %s73
      %p77 = scmp.eq.s32.totalorder %s16, 0
      %p78 = por %p76, %p77
      %p79 = scmp.ne.s32.totalorder %s71, %s73
      %p80 = scmp.eq.s32.totalorder %s21, 1
      %p81 = por %p79, %p80
      %p82 = scmp.ne.s32.totalorder %s73, %s74
      %p83 = scmp.eq.s32.totalorder %s21, 0
      %p84 = por %p82, %p83
      %p85 = scmp.ne.s32.totalorder %s73, %s74
      %p86 = scmp.eq.s32.totalorder %s22, 1
      %p87 = por %p85, %p86
      %p89 = scmp.ne.s32.totalorder %s74, %s88
      %p90 = scmp.eq.s32.totalorder %s22, 0
      %p91 = por %p89, %p90
      %s93 = sadd.s32 %s92, 1
      %p96 = scmp.eq.s32.totalorder %s16, 1
      %p97 = scmp.ne.s32.totalorder %s92, %s94
      %p98 = scmp.eq.s32.totalorder %s16, 0
      %p99 = por %p97, %p98
      %p100 = scmp.ne.s32.totalorder %s92, %s94
      %p101 = scmp.eq.s32.totalorder %s21, 1
      %p102 = por %p100, %p101
      %p103 = scmp.ne.s32.totalorder %s94, %s95
      %p104 = scmp.eq.s32.totalorder %s21, 0
      %p105 = por %p103, %p104
      %p106 = scmp.ne.s32.totalorder %s94, %s95
      %p107 = scmp.eq.s32.totalorder %s22, 1
      %p108 = por %p106, %p107
      %p110 = scmp.ne.s32.totalorder %s95, %s109
      %p111 = scmp.eq.s32.totalorder %s22, 0
      %p112 = por %p110, %p111
      %s114 = sadd.s32 %s113, 1
      %p117 = scmp.eq.s32.totalorder %s16, 1
      %p118 = scmp.ne.s32.totalorder %s113, %s115
      %p119 = scmp.eq.s32.totalorder %s16, 0
      %p120 = por %p118, %p119
      %p121 = scmp.ne.s32.totalorder %s113, %s115
      %p122 = scmp.eq.s32.totalorder %s21, 1
      %p123 = por %p121, %p122
      %p124 = scmp.ne.s32.totalorder %s115, %s116
      %p125 = scmp.eq.s32.totalorder %s21, 0
      %p126 = por %p124, %p125
      %p127 = scmp.ne.s32.totalorder %s115, %s116
      %p128 = scmp.eq.s32.totalorder %s22, 1
      %p129 = por %p127, %p128
      %p131 = scmp.ne.s32.totalorder %s116, %s130
      %p132 = scmp.eq.s32.totalorder %s22, 0
      %p133 = por %p131, %p132
      %s135 = sadd.s32 %s134, 1
      %p138 = scmp.eq.s32.totalorder %s16, 1
      %p139 = scmp.ne.s32.totalorder %s134, %s136
      %p140 = scmp.eq.s32.totalorder %s16, 0
      %p141 = por %p139, %p140
      %p142 = scmp.ne.s32.totalorder %s134, %s136
      %p143 = scmp.eq.s32.totalorder %s21, 1
      %p144 = por %p142, %p143
      %p145 = scmp.ne.s32.totalorder %s136, %s137
      %p146 = scmp.eq.s32.totalorder %s21, 0
      %p147 = por %p145, %p146
      %p148 = scmp.ne.s32.totalorder %s136, %s137
      %p149 = scmp.eq.s32.totalorder %s22, 1
      %p150 = por %p148, %p149
      %p152 = scmp.ne.s32.totalorder %s137, %s151
      %p153 = scmp.eq.s32.totalorder %s22, 0
      %p154 = por %p152, %p153
      %s156 = sadd.s32 %s155, 1
      %p159 = scmp.eq.s32.totalorder %s16, 1
      %p160 = scmp.ne.s32.totalorder %s155, %s157
      %p161 = scmp.eq.s32.totalorder %s16, 0
      %p162 = por %p160, %p161
      %p163 = scmp.ne.s32.totalorder %s155, %s157
      %p164 = scmp.eq.s32.totalorder %s21, 1
      %p165 = por %p163, %p164
      %p166 = scmp.ne.s32.totalorder %s157, %s158
      %p167 = scmp.eq.s32.totalorder %s21, 0
      %p168 = por %p166, %p167
      %p169 = scmp.ne.s32.totalorder %s157, %s158
      %p170 = scmp.eq.s32.totalorder %s22, 1
      %p171 = por %p169, %p170
      %p173 = scmp.ne.s32.totalorder %s158, %s172
      %p174 = scmp.eq.s32.totalorder %s22, 0
      %p175 = por %p173, %p174
      %s176 = ssub.s32 %s16, %s23
      %p177 = scmp.eq.s32.totalorder %s176, 0
      %s179 = sadd.s32 %s178, 1
      %s180 = scalar_select %p177, %s178, %s179
      %p183 = pneg %p177
      %p184 = scmp.eq.s32.totalorder %s16, 1
      %p185 = por %p183, %p184
      %p186 = scmp.ne.s32.totalorder %s178, %s181
      %p187 = scmp.eq.s32.totalorder %s16, 0
      %p188 = por %p186, %p187
      %p189 = scmp.ne.s32.totalorder %s178, %s181
      %p190 = scmp.eq.s32.totalorder %s21, 1
      %p191 = por %p189, %p190
      %p192 = scmp.ne.s32.totalorder %s181, %s182
      %p193 = scmp.eq.s32.totalorder %s21, 0
      %p194 = por %p192, %p193
      %p195 = scmp.ne.s32.totalorder %s181, %s182
      %p196 = scmp.eq.s32.totalorder %s22, 1
      %p197 = por %p195, %p196
      %p199 = scmp.ne.s32.totalorder %s182, %s198
      %p200 = scmp.eq.s32.totalorder %s22, 0
      %p201 = por %p199, %p200
      %p202 = scmp.le.s32.totalorder 1, %s16
      %p203 = scmp.lt.s32.totalorder %s16, 3
      %p204 = pnand %p202, %p203
      %p205 = pneg %p204
      // Predicated region
      $region9: #{_lambda_.1} parent=5 // pred_check
        _
      $region10: #{_lambda_.1} parent=5 // pred_check_branch
        %207 = sbr.rel (%p204) target = $region12
      $region11: #{_lambda_.1} parent=5 // pred_region
        %s208 = ssub.s32 %s16, 1
        // Predicated region
        $region13: #{_lambda_.1} parent=11 // pred_check
          %p209 = pneg %p63
        $region14: #{_lambda_.1} parent=11 // pred_check_branch
          %211 = sbr.rel (%p209) target = $region16
        $region15: #{_lambda_.1} parent=11 // pred_region
          _
        $region16: #{_lambda_.1} parent=11 // pred_fallthru
          _
        // Predicated region
        $region17: #{_lambda_.1} parent=11 // pred_check
          %p212 = pneg %p84
        $region18: #{_lambda_.1} parent=11 // pred_check_branch
          %214 = sbr.rel (%p212) target = $region20
        $region19: #{_lambda_.1} parent=11 // pred_region
          _
        $region20: #{_lambda_.1} parent=11 // pred_fallthru
          _
        // Predicated region
        $region21: #{_lambda_.1} parent=11 // pred_check
          %p215 = pneg %p105
        $region22: #{_lambda_.1} parent=11 // pred_check_branch
          %217 = sbr.rel (%p215) target = $region24
        $region23: #{_lambda_.1} parent=11 // pred_region
          _
        $region24: #{_lambda_.1} parent=11 // pred_fallthru
          _
        // Predicated region
        $region25: #{_lambda_.1} parent=11 // pred_check
          %p218 = pneg %p126
        $region26: #{_lambda_.1} parent=11 // pred_check_branch
          %220 = sbr.rel (%p218) target = $region28
        $region27: #{_lambda_.1} parent=11 // pred_region
          _
        $region28: #{_lambda_.1} parent=11 // pred_fallthru
          _
        // Predicated region
        $region29: #{_lambda_.1} parent=11 // pred_check
          %p221 = pneg %p147
        $region30: #{_lambda_.1} parent=11 // pred_check_branch
          %223 = sbr.rel (%p221) target = $region32
        $region31: #{_lambda_.1} parent=11 // pred_region
          _
        $region32: #{_lambda_.1} parent=11 // pred_fallthru
          _
        // Predicated region
        $region33: #{_lambda_.1} parent=11 // pred_check
          %p224 = pneg %p168
        $region34: #{_lambda_.1} parent=11 // pred_check_branch
          %226 = sbr.rel (%p224) target = $region36
        $region35: #{_lambda_.1} parent=11 // pred_region
          _
        $region36: #{_lambda_.1} parent=11 // pred_fallthru
          _
      $region12: #{_lambda_.1} parent=5 // pred_fallthru
        _
      %p227 = scmp.lt.s32.totalorder %s16, 2
      // Predicated region
      $region37: #{_lambda_.1} parent=5 // pred_check
        %p228 = pneg %p227
      $region38: #{_lambda_.1} parent=5 // pred_check_branch
        %230 = sbr.rel (%p228) target = $region40
      $region39: #{_lambda_.1} parent=5 // pred_region
        // Predicated region
        $region41: #{_lambda_.1} parent=39 // pred_check
          %p231 = pneg %p36
        $region42: #{_lambda_.1} parent=39 // pred_check_branch
          %233 = sbr.rel (%p231) target = $region44
        $region43: #{_lambda_.1} parent=39 // pred_region
          %p234 = scmp.lt.s32.totalorder %s16, 1
          %s235 = scalar_select %p234, %s16, 1
          %s236 = smul.addr %s235, 37
          %s237 = smul.addr %s236, 4
          %s238 = scalar_lea.vmem %s0, %s237
        $region44: #{_lambda_.1} parent=39 // pred_fallthru
          _
      $region40: #{_lambda_.1} parent=5 // pred_fallthru
        _
      %p239 = scmp.le.s32.totalorder 1, %s16
      %p240 = scmp.lt.s32.totalorder %s16, 3
      %p241 = pnand %p239, %p240
      %p242 = pneg %p241
      // Predicated region
      $region45: #{_lambda_.1} parent=5 // pred_check
        _
      $region46: #{_lambda_.1} parent=5 // pred_check_branch
        %244 = sbr.rel (%p241) target = $region48
      $region47: #{_lambda_.1} parent=5 // pred_region
        %s245 = ssub.s32 %s16, 1
        %p246 = scmp.lt.s32.totalorder %s21, 1
        %s247 = scalar_select %p246, %s21, 1
        %s248 = smul.addr %s247, 37
        %s249 = smul.addr %s248, 4
        %s250 = scalar_lea.vmem %s0, %s249
        %p251 = pneg %p42
        %p252 = pneg %p39
        %p253 = pneg %p63
        %p254 = pneg %p60
        %p255 = pneg %p84
        %p256 = pneg %p81
        %p257 = pneg %p105
        %p258 = pneg %p102
        %p259 = pneg %p126
        %p260 = pneg %p123
        %p261 = pneg %p147
        %p262 = pneg %p144
        %p263 = pneg %p168
        %p264 = pneg %p165
        %p265 = pneg %p194
        %p266 = pneg %p191
        %s267 = sand.u32 %s181, 1
        %s268 = scalar_lea.sflag [#allocation3], %s267
        %s269 = sand.u32 %s181, 1
        %s270 = smul.addr %s269, 128
        %s271 = scalar_lea.vmem [#allocation2], %s270
        %p272 = scmp.lt.s32.totalorder %s21, 1
        %s273 = scalar_select %p272, %s21, 1
        %s274 = smul.addr %s273, 37
        %s275 = smul.addr %s274, 4
        %s276 = scalar_lea.vmem %s0, %s275
        %v278 = vld [vmem:[%s276] sm:$0xf]
        %v279 = vld [vmem:[%s276 + $0x4] sm:$0xf]
        %v280 = vld [vmem:[%s276 + $0x8] sm:$0xf]
        %v281 = vld [vmem:[%s276 + $0xc] sm:$0xf]
        %v282 = vld [vmem:[%s276 + $0x10] sm:$0xf]
        %v283 = vld [vmem:[%s276 + $0x14] sm:$0xf]
        %v284 = vld [vmem:[%s276 + $0x18] sm:$0xf]
        %v285 = vld [vmem:[%s276 + $0x1c] sm:$0xf]
        %v286 = vld [vmem:[%s276 + $0x20] sm:$0xf]
        %v287 = vld [vmem:[%s276 + $0x24] sm:$0xf]
        %v288 = vld [vmem:[%s276 + $0x28] sm:$0xf]
        %v289 = vld [vmem:[%s276 + $0x2c] sm:$0xf]
        %v290 = vld [vmem:[%s276 + $0x30] sm:$0xf]
        %v291 = vld [vmem:[%s276 + $0x34] sm:$0xf]
        %v292 = vld [vmem:[%s276 + $0x38] sm:$0xf]
        %v293 = vld [vmem:[%s276 + $0x3c] sm:$0xf]
        %v294 = vld [vmem:[%s276 + $0x40] sm:$0xf]
        %v295 = vld [vmem:[%s276 + $0x44] sm:$0xf]
        %v296 = vld [vmem:[%s276 + $0x48] sm:$0xf]
        %v297 = vld [vmem:[%s276 + $0x4c] sm:$0xf]
        %v298 = vld [vmem:[%s276 + $0x50] sm:$0xf]
        %v299 = vld [vmem:[%s276 + $0x54] sm:$0xf]
        %v300 = vld [vmem:[%s276 + $0x58] sm:$0xf]
        %v301 = vld [vmem:[%s276 + $0x5c] sm:$0xf]
        %v302 = vld [vmem:[%s276 + $0x60] sm:$0xf]
        %v303 = vld [vmem:[%s276 + $0x64] sm:$0xf]
        %v304 = vld [vmem:[%s276 + $0x68] sm:$0xf]
        %v305 = vld [vmem:[%s276 + $0x6c] sm:$0xf]
        %v306 = vld [vmem:[%s276 + $0x70] sm:$0xf]
        %v307 = vld [vmem:[%s276 + $0x74] sm:$0xf]
        %v308 = vld [vmem:[%s276 + $0x78] sm:$0xf]
        %v309 = vld [vmem:[%s276 + $0x7c] sm:$0xf]
        %v310 = vld [vmem:[%s1] sm:$0xf]
        %v311 = vld [vmem:[%s1 + $0x4] sm:$0xf]
        %v312 = vld [vmem:[%s1 + $0x8] sm:$0xf]
        %v313 = vld [vmem:[%s1 + $0xc] sm:$0xf]
        %v314 = vld [vmem:[%s1 + $0x10] sm:$0xf]
        %v315 = vld [vmem:[%s1 + $0x14] sm:$0xf]
        %v316 = vld [vmem:[%s1 + $0x18] sm:$0xf]
        %v317 = vld [vmem:[%s1 + $0x1c] sm:$0xf]
        %v318 = vld [vmem:[%s1 + $0x20] sm:$0xf]
        %v319 = vld [vmem:[%s1 + $0x24] sm:$0xf]
        %v320 = vld [vmem:[%s1 + $0x28] sm:$0xf]
        %v321 = vld [vmem:[%s1 + $0x2c] sm:$0xf]
        %v322 = vld [vmem:[%s1 + $0x30] sm:$0xf]
        %v323 = vld [vmem:[%s1 + $0x34] sm:$0xf]
        %v324 = vld [vmem:[%s1 + $0x38] sm:$0xf]
        %v325 = vld [vmem:[%s1 + $0x3c] sm:$0xf]
        %v326 = vld [vmem:[%s1 + $0x40] sm:$0xf]
        %v327 = vld [vmem:[%s1 + $0x44] sm:$0xf]
        %v328 = vld [vmem:[%s1 + $0x48] sm:$0xf]
        %v329 = vld [vmem:[%s1 + $0x4c] sm:$0xf]
        %v330 = vld [vmem:[%s1 + $0x50] sm:$0xf]
        %v331 = vld [vmem:[%s1 + $0x54] sm:$0xf]
        %v332 = vld [vmem:[%s1 + $0x58] sm:$0xf]
        %v333 = vld [vmem:[%s1 + $0x5c] sm:$0xf]
        %v334 = vld [vmem:[%s1 + $0x60] sm:$0xf]
        %v335 = vld [vmem:[%s1 + $0x64] sm:$0xf]
        %v336 = vld [vmem:[%s1 + $0x68] sm:$0xf]
        %v337 = vld [vmem:[%s1 + $0x6c] sm:$0xf]
        %v338 = vld [vmem:[%s1 + $0x70] sm:$0xf]
        %v339 = vld [vmem:[%s1 + $0x74] sm:$0xf]
        %v340 = vld [vmem:[%s1 + $0x78] sm:$0xf]
        %v341 = vld [vmem:[%s1 + $0x7c] sm:$0xf]
        %343 = vset.pattern.permute.xlu0 0
        %344 = vperm.xlu0 %343, %v310
        %v345 = vpop.permute.xlu0 %344
        %v348 = vunpack.c.l.s4 839922192
        %v349 = vunpack.c.0.s8 %v348
        %v350 = vperm.slane %v345, %v349
        %352 = vset.pattern.permute.xlu0 0
        %353 = vperm.xlu0 %352, %v311
        %v354 = vpop.permute.xlu0 %353
        %v357 = vunpack.c.l.s4 839922192
        %v358 = vunpack.c.0.s8 %v357
        %v359 = vperm.slane %v354, %v358
        %361 = vset.pattern.permute.xlu0 0
        %362 = vperm.xlu0 %361, %v312
        %v363 = vpop.permute.xlu0 %362
        %v366 = vunpack.c.l.s4 839922192
        %v367 = vunpack.c.0.s8 %v366
        %v368 = vperm.slane %v363, %v367
        %370 = vset.pattern.permute.xlu0 0
        %371 = vperm.xlu0 %370, %v313
        %v372 = vpop.permute.xlu0 %371
        %v375 = vunpack.c.l.s4 839922192
        %v376 = vunpack.c.0.s8 %v375
        %v377 = vperm.slane %v372, %v376
        %379 = vset.pattern.permute.xlu0 0
        %380 = vperm.xlu0 %379, %v314
        %v381 = vpop.permute.xlu0 %380
        %v384 = vunpack.c.l.s4 839922192
        %v385 = vunpack.c.0.s8 %v384
        %v386 = vperm.slane %v381, %v385
        %388 = vset.pattern.permute.xlu0 0
        %389 = vperm.xlu0 %388, %v315
        %v390 = vpop.permute.xlu0 %389
        %v393 = vunpack.c.l.s4 839922192
        %v394 = vunpack.c.0.s8 %v393
        %v395 = vperm.slane %v390, %v394
        %397 = vset.pattern.permute.xlu0 0
        %398 = vperm.xlu0 %397, %v316
        %v399 = vpop.permute.xlu0 %398
        %v402 = vunpack.c.l.s4 839922192
        %v403 = vunpack.c.0.s8 %v402
        %v404 = vperm.slane %v399, %v403
        %406 = vset.pattern.permute.xlu0 0
        %407 = vperm.xlu0 %406, %v317
        %v408 = vpop.permute.xlu0 %407
        %v411 = vunpack.c.l.s4 839922192
        %v412 = vunpack.c.0.s8 %v411
        %v413 = vperm.slane %v408, %v412
        %415 = vset.pattern.permute.xlu0 0
        %416 = vperm.xlu0 %415, %v318
        %v417 = vpop.permute.xlu0 %416
        %v420 = vunpack.c.l.s4 839922192
        %v421 = vunpack.c.0.s8 %v420
        %v422 = vperm.slane %v417, %v421
        %424 = vset.pattern.permute.xlu0 0
        %425 = vperm.xlu0 %424, %v319
        %v426 = vpop.permute.xlu0 %425
        %v429 = vunpack.c.l.s4 839922192
        %v430 = vunpack.c.0.s8 %v429
        %v431 = vperm.slane %v426, %v430
        %433 = vset.pattern.permute.xlu0 0
        %434 = vperm.xlu0 %433, %v320
        %v435 = vpop.permute.xlu0 %434
        %v438 = vunpack.c.l.s4 839922192
        %v439 = vunpack.c.0.s8 %v438
        %v440 = vperm.slane %v435, %v439
        %442 = vset.pattern.permute.xlu0 0
        %443 = vperm.xlu0 %442, %v321
        %v444 = vpop.permute.xlu0 %443
        %v447 = vunpack.c.l.s4 839922192
        %v448 = vunpack.c.0.s8 %v447
        %v449 = vperm.slane %v444, %v448
        %451 = vset.pattern.permute.xlu0 0
        %452 = vperm.xlu0 %451, %v322
        %v453 = vpop.permute.xlu0 %452
        %v456 = vunpack.c.l.s4 839922192
        %v457 = vunpack.c.0.s8 %v456
        %v458 = vperm.slane %v453, %v457
        %460 = vset.pattern.permute.xlu0 0
        %461 = vperm.xlu0 %460, %v323
        %v462 = vpop.permute.xlu0 %461
        %v465 = vunpack.c.l.s4 839922192
        %v466 = vunpack.c.0.s8 %v465
        %v467 = vperm.slane %v462, %v466
        %469 = vset.pattern.permute.xlu0 0
        %470 = vperm.xlu0 %469, %v324
        %v471 = vpop.permute.xlu0 %470
        %v474 = vunpack.c.l.s4 839922192
        %v475 = vunpack.c.0.s8 %v474
        %v476 = vperm.slane %v471, %v475
        %478 = vset.pattern.permute.xlu0 0
        %479 = vperm.xlu0 %478, %v325
        %v480 = vpop.permute.xlu0 %479
        %v483 = vunpack.c.l.s4 839922192
        %v484 = vunpack.c.0.s8 %v483
        %v485 = vperm.slane %v480, %v484
        %487 = vset.pattern.permute.xlu0 0
        %488 = vperm.xlu0 %487, %v326
        %v489 = vpop.permute.xlu0 %488
        %v492 = vunpack.c.l.s4 839922192
        %v493 = vunpack.c.0.s8 %v492
        %v494 = vperm.slane %v489, %v493
        %496 = vset.pattern.permute.xlu0 0
        %497 = vperm.xlu0 %496, %v327
        %v498 = vpop.permute.xlu0 %497
        %v501 = vunpack.c.l.s4 839922192
        %v502 = vunpack.c.0.s8 %v501
        %v503 = vperm.slane %v498, %v502
        %505 = vset.pattern.permute.xlu0 0
        %506 = vperm.xlu0 %505, %v328
        %v507 = vpop.permute.xlu0 %506
        %v510 = vunpack.c.l.s4 839922192
        %v511 = vunpack.c.0.s8 %v510
        %v512 = vperm.slane %v507, %v511
        %514 = vset.pattern.permute.xlu0 0
        %515 = vperm.xlu0 %514, %v329
        %v516 = vpop.permute.xlu0 %515
        %v519 = vunpack.c.l.s4 839922192
        %v520 = vunpack.c.0.s8 %v519
        %v521 = vperm.slane %v516, %v520
        %523 = vset.pattern.permute.xlu0 0
        %524 = vperm.xlu0 %523, %v330
        %v525 = vpop.permute.xlu0 %524
        %v528 = vunpack.c.l.s4 839922192
        %v529 = vunpack.c.0.s8 %v528
        %v530 = vperm.slane %v525, %v529
        %532 = vset.pattern.permute.xlu0 0
        %533 = vperm.xlu0 %532, %v331
        %v534 = vpop.permute.xlu0 %533
        %v537 = vunpack.c.l.s4 839922192
        %v538 = vunpack.c.0.s8 %v537
        %v539 = vperm.slane %v534, %v538
        %541 = vset.pattern.permute.xlu0 0
        %542 = vperm.xlu0 %541, %v332
        %v543 = vpop.permute.xlu0 %542
        %v546 = vunpack.c.l.s4 839922192
        %v547 = vunpack.c.0.s8 %v546
        %v548 = vperm.slane %v543, %v547
        %550 = vset.pattern.permute.xlu0 0
        %551 = vperm.xlu0 %550, %v333
        %v552 = vpop.permute.xlu0 %551
        %v555 = vunpack.c.l.s4 839922192
        %v556 = vunpack.c.0.s8 %v555
        %v557 = vperm.slane %v552, %v556
        %559 = vset.pattern.permute.xlu0 0
        %560 = vperm.xlu0 %559, %v334
        %v561 = vpop.permute.xlu0 %560
        %v564 = vunpack.c.l.s4 839922192
        %v565 = vunpack.c.0.s8 %v564
        %v566 = vperm.slane %v561, %v565
        %568 = vset.pattern.permute.xlu0 0
        %569 = vperm.xlu0 %568, %v335
        %v570 = vpop.permute.xlu0 %569
        %v573 = vunpack.c.l.s4 839922192
        %v574 = vunpack.c.0.s8 %v573
        %v575 = vperm.slane %v570, %v574
        %577 = vset.pattern.permute.xlu0 0
        %578 = vperm.xlu0 %577, %v336
        %v579 = vpop.permute.xlu0 %578
        %v582 = vunpack.c.l.s4 839922192
        %v583 = vunpack.c.0.s8 %v582
        %v584 = vperm.slane %v579, %v583
        %586 = vset.pattern.permute.xlu0 0
        %587 = vperm.xlu0 %586, %v337
        %v588 = vpop.permute.xlu0 %587
        %v591 = vunpack.c.l.s4 839922192
        %v592 = vunpack.c.0.s8 %v591
        %v593 = vperm.slane %v588, %v592
        %595 = vset.pattern.permute.xlu0 0
        %596 = vperm.xlu0 %595, %v338
        %v597 = vpop.permute.xlu0 %596
        %v600 = vunpack.c.l.s4 839922192
        %v601 = vunpack.c.0.s8 %v600
        %v602 = vperm.slane %v597, %v601
        %604 = vset.pattern.permute.xlu0 0
        %605 = vperm.xlu0 %604, %v339
        %v606 = vpop.permute.xlu0 %605
        %v609 = vunpack.c.l.s4 839922192
        %v610 = vunpack.c.0.s8 %v609
        %v611 = vperm.slane %v606, %v610
        %613 = vset.pattern.permute.xlu0 0
        %614 = vperm.xlu0 %613, %v340
        %v615 = vpop.permute.xlu0 %614
        %v618 = vunpack.c.l.s4 839922192
        %v619 = vunpack.c.0.s8 %v618
        %v620 = vperm.slane %v615, %v619
        %622 = vset.pattern.permute.xlu0 0
        %623 = vperm.xlu0 %622, %v341
        %v624 = vpop.permute.xlu0 %623
        %v627 = vunpack.c.l.s4 839922192
        %v628 = vunpack.c.0.s8 %v627
        %v629 = vperm.slane %v624, %v628
        %v630 = vunpack.c.l.bf16 %v278
        %v631 = vunpack.c.l.bf16 %v279
        %v632 = vunpack.c.l.bf16 %v280
        %v633 = vunpack.c.l.bf16 %v281
        %v634 = vunpack.c.l.bf16 %v282
        %v635 = vunpack.c.l.bf16 %v283
        %v636 = vunpack.c.l.bf16 %v284
        %v637 = vunpack.c.l.bf16 %v285
        %v638 = vunpack.c.l.bf16 %v286
        %v639 = vunpack.c.l.bf16 %v287
        %v640 = vunpack.c.l.bf16 %v288
        %v641 = vunpack.c.l.bf16 %v289
        %v642 = vunpack.c.l.bf16 %v290
        %v643 = vunpack.c.l.bf16 %v291
        %v644 = vunpack.c.l.bf16 %v292
        %v645 = vunpack.c.l.bf16 %v293
        %v646 = vunpack.c.l.bf16 %v294
        %v647 = vunpack.c.l.bf16 %v295
        %v648 = vunpack.c.l.bf16 %v296
        %v649 = vunpack.c.l.bf16 %v297
        %v650 = vunpack.c.l.bf16 %v298
        %v651 = vunpack.c.l.bf16 %v299
        %v652 = vunpack.c.l.bf16 %v300
        %v653 = vunpack.c.l.bf16 %v301
        %v654 = vunpack.c.l.bf16 %v302
        %v655 = vunpack.c.l.bf16 %v303
        %v656 = vunpack.c.l.bf16 %v304
        %v657 = vunpack.c.l.bf16 %v305
        %v658 = vunpack.c.l.bf16 %v306
        %v659 = vunpack.c.l.bf16 %v307
        %v660 = vunpack.c.l.bf16 %v308
        %v661 = vunpack.c.l.bf16 %v309
        %v662 = vunpack.c.l.bf16 %v350
        %v663 = vunpack.c.l.bf16 %v359
        %v664 = vunpack.c.l.bf16 %v368
        %v665 = vunpack.c.l.bf16 %v377
        %v666 = vunpack.c.l.bf16 %v386
        %v667 = vunpack.c.l.bf16 %v395
        %v668 = vunpack.c.l.bf16 %v404
        %v669 = vunpack.c.l.bf16 %v413
        %v670 = vunpack.c.l.bf16 %v422
        %v671 = vunpack.c.l.bf16 %v431
        %v672 = vunpack.c.l.bf16 %v440
        %v673 = vunpack.c.l.bf16 %v449
        %v674 = vunpack.c.l.bf16 %v458
        %v675 = vunpack.c.l.bf16 %v467
        %v676 = vunpack.c.l.bf16 %v476
        %v677 = vunpack.c.l.bf16 %v485
        %v678 = vunpack.c.l.bf16 %v494
        %v679 = vunpack.c.l.bf16 %v503
        %v680 = vunpack.c.l.bf16 %v512
        %v681 = vunpack.c.l.bf16 %v521
        %v682 = vunpack.c.l.bf16 %v530
        %v683 = vunpack.c.l.bf16 %v539
        %v684 = vunpack.c.l.bf16 %v548
        %v685 = vunpack.c.l.bf16 %v557
        %v686 = vunpack.c.l.bf16 %v566
        %v687 = vunpack.c.l.bf16 %v575
        %v688 = vunpack.c.l.bf16 %v584
        %v689 = vunpack.c.l.bf16 %v593
        %v690 = vunpack.c.l.bf16 %v602
        %v691 = vunpack.c.l.bf16 %v611
        %v692 = vunpack.c.l.bf16 %v620
        %v693 = vunpack.c.l.bf16 %v629
        %v694 = vmul.f32 %v630, %v662
        %v695 = vmul.f32 %v631, %v663
        %v696 = vmul.f32 %v632, %v664
        %v697 = vmul.f32 %v633, %v665
        %v698 = vmul.f32 %v634, %v666
        %v699 = vmul.f32 %v635, %v667
        %v700 = vmul.f32 %v636, %v668
        %v701 = vmul.f32 %v637, %v669
        %v702 = vmul.f32 %v638, %v670
        %v703 = vmul.f32 %v639, %v671
        %v704 = vmul.f32 %v640, %v672
        %v705 = vmul.f32 %v641, %v673
        %v706 = vmul.f32 %v642, %v674
        %v707 = vmul.f32 %v643, %v675
        %v708 = vmul.f32 %v644, %v676
        %v709 = vmul.f32 %v645, %v677
        %v710 = vmul.f32 %v646, %v678
        %v711 = vmul.f32 %v647, %v679
        %v712 = vmul.f32 %v648, %v680
        %v713 = vmul.f32 %v649, %v681
        %v714 = vmul.f32 %v650, %v682
        %v715 = vmul.f32 %v651, %v683
        %v716 = vmul.f32 %v652, %v684
        %v717 = vmul.f32 %v653, %v685
        %v718 = vmul.f32 %v654, %v686
        %v719 = vmul.f32 %v655, %v687
        %v720 = vmul.f32 %v656, %v688
        %v721 = vmul.f32 %v657, %v689
        %v722 = vmul.f32 %v658, %v690
        %v723 = vmul.f32 %v659, %v691
        %v724 = vmul.f32 %v660, %v692
        %v725 = vmul.f32 %v661, %v693
        %v726 = vpack.c.bf16 %v695, %v694
        %v727 = vpack.c.bf16 %v697, %v696
        %v728 = vpack.c.bf16 %v699, %v698
        %v729 = vpack.c.bf16 %v701, %v700
        %v730 = vpack.c.bf16 %v703, %v702
        %v731 = vpack.c.bf16 %v705, %v704
        %v732 = vpack.c.bf16 %v707, %v706
        %v733 = vpack.c.bf16 %v709, %v708
        %v734 = vpack.c.bf16 %v711, %v710
        %v735 = vpack.c.bf16 %v713, %v712
        %v736 = vpack.c.bf16 %v715, %v714
        %v737 = vpack.c.bf16 %v717, %v716
        %v738 = vpack.c.bf16 %v719, %v718
        %v739 = vpack.c.bf16 %v721, %v720
        %v740 = vpack.c.bf16 %v723, %v722
        %v741 = vpack.c.bf16 %v725, %v724
        %v742 = vld [vmem:[%s2] sm:$0xf]
        %v743 = vld [vmem:[%s2 + $0x4] sm:$0xf]
        %v744 = vld [vmem:[%s2 + $0x8] sm:$0xf]
        %v745 = vld [vmem:[%s2 + $0xc] sm:$0xf]
        %v746 = vld [vmem:[%s276] sm:$0xf]
        %v747 = vld [vmem:[%s276 + $0x4] sm:$0xf]
        %v748 = vld [vmem:[%s276 + $0x8] sm:$0xf]
        %v749 = vld [vmem:[%s276 + $0xc] sm:$0xf]
        %v750 = vld [vmem:[%s276 + $0x10] sm:$0xf]
        %v751 = vld [vmem:[%s276 + $0x14] sm:$0xf]
        %v752 = vld [vmem:[%s276 + $0x18] sm:$0xf]
        %v753 = vld [vmem:[%s276 + $0x1c] sm:$0xf]
        %v754 = vld [vmem:[%s276 + $0x20] sm:$0xf]
        %v755 = vld [vmem:[%s276 + $0x24] sm:$0xf]
        %v756 = vld [vmem:[%s276 + $0x28] sm:$0xf]
        %v757 = vld [vmem:[%s276 + $0x2c] sm:$0xf]
        %v758 = vld [vmem:[%s276 + $0x30] sm:$0xf]
        %v759 = vld [vmem:[%s276 + $0x34] sm:$0xf]
        %v760 = vld [vmem:[%s276 + $0x38] sm:$0xf]
        %v761 = vld [vmem:[%s276 + $0x3c] sm:$0xf]
        %v762 = vld [vmem:[%s276 + $0x40] sm:$0xf]
        %v763 = vld [vmem:[%s276 + $0x44] sm:$0xf]
        %v764 = vld [vmem:[%s276 + $0x48] sm:$0xf]
        %v765 = vld [vmem:[%s276 + $0x4c] sm:$0xf]
        %v766 = vld [vmem:[%s276 + $0x50] sm:$0xf]
        %v767 = vld [vmem:[%s276 + $0x54] sm:$0xf]
        %v768 = vld [vmem:[%s276 + $0x58] sm:$0xf]
        %v769 = vld [vmem:[%s276 + $0x5c] sm:$0xf]
        %v770 = vld [vmem:[%s276 + $0x60] sm:$0xf]
        %v771 = vld [vmem:[%s276 + $0x64] sm:$0xf]
        %v772 = vld [vmem:[%s276 + $0x68] sm:$0xf]
        %v773 = vld [vmem:[%s276 + $0x6c] sm:$0xf]
        %v774 = vld [vmem:[%s276 + $0x70] sm:$0xf]
        %v775 = vld [vmem:[%s276 + $0x74] sm:$0xf]
        %v776 = vld [vmem:[%s276 + $0x78] sm:$0xf]
        %v777 = vld [vmem:[%s276 + $0x7c] sm:$0xf]
        %v778 = vld [vmem:[%s276 + $0x80] sm:$0x1]
        %779 = vset.pattern.permute.xlu0 1
        %780 = vperm.xlu0 %779, %v310
        %v781 = vpop.permute.xlu0 %780
        %v784 = vunpack.c.l.s4 839922192
        %v785 = vunpack.c.0.s8 %v784
        %v786 = vperm.slane %v781, %v785
        %787 = vset.pattern.permute.xlu0 1
        %788 = vperm.xlu0 %787, %v311
        %v789 = vpop.permute.xlu0 %788
        %v792 = vunpack.c.l.s4 839922192
        %v793 = vunpack.c.0.s8 %v792
        %v794 = vperm.slane %v789, %v793
        %795 = vset.pattern.permute.xlu0 1
        %796 = vperm.xlu0 %795, %v312
        %v797 = vpop.permute.xlu0 %796
        %v800 = vunpack.c.l.s4 839922192
        %v801 = vunpack.c.0.s8 %v800
        %v802 = vperm.slane %v797, %v801
        %803 = vset.pattern.permute.xlu0 1
        %804 = vperm.xlu0 %803, %v313
        %v805 = vpop.permute.xlu0 %804
        %v808 = vunpack.c.l.s4 839922192
        %v809 = vunpack.c.0.s8 %v808
        %v810 = vperm.slane %v805, %v809
        %811 = vset.pattern.permute.xlu0 1
        %812 = vperm.xlu0 %811, %v314
        %v813 = vpop.permute.xlu0 %812
        %v816 = vunpack.c.l.s4 839922192
        %v817 = vunpack.c.0.s8 %v816
        %v818 = vperm.slane %v813, %v817
        %819 = vset.pattern.permute.xlu0 1
        %820 = vperm.xlu0 %819, %v315
        %v821 = vpop.permute.xlu0 %820
        %v824 = vunpack.c.l.s4 839922192
        %v825 = vunpack.c.0.s8 %v824
        %v826 = vperm.slane %v821, %v825
        %827 = vset.pattern.permute.xlu0 1
        %828 = vperm.xlu0 %827, %v316
        %v829 = vpop.permute.xlu0 %828
        %v832 = vunpack.c.l.s4 839922192
        %v833 = vunpack.c.0.s8 %v832
        %v834 = vperm.slane %v829, %v833
        %835 = vset.pattern.permute.xlu0 1
        %836 = vperm.xlu0 %835, %v317
        %v837 = vpop.permute.xlu0 %836
        %v840 = vunpack.c.l.s4 839922192
        %v841 = vunpack.c.0.s8 %v840
        %v842 = vperm.slane %v837, %v841
        %843 = vset.pattern.permute.xlu0 1
        %844 = vperm.xlu0 %843, %v318
        %v845 = vpop.permute.xlu0 %844
        %v848 = vunpack.c.l.s4 839922192
        %v849 = vunpack.c.0.s8 %v848
        %v850 = vperm.slane %v845, %v849
        %851 = vset.pattern.permute.xlu0 1
        %852 = vperm.xlu0 %851, %v319
        %v853 = vpop.permute.xlu0 %852
        %v856 = vunpack.c.l.s4 839922192
        %v857 = vunpack.c.0.s8 %v856
        %v858 = vperm.slane %v853, %v857
        %859 = vset.pattern.permute.xlu0 1
        %860 = vperm.xlu0 %859, %v320
        %v861 = vpop.permute.xlu0 %860
        %v864 = vunpack.c.l.s4 839922192
        %v865 = vunpack.c.0.s8 %v864
        %v866 = vperm.slane %v861, %v865
        %867 = vset.pattern.permute.xlu0 1
        %868 = vperm.xlu0 %867, %v321
        %v869 = vpop.permute.xlu0 %868
        %v872 = vunpack.c.l.s4 839922192
        %v873 = vunpack.c.0.s8 %v872
        %v874 = vperm.slane %v869, %v873
        %875 = vset.pattern.permute.xlu0 1
        %876 = vperm.xlu0 %875, %v322
        %v877 = vpop.permute.xlu0 %876
        %v880 = vunpack.c.l.s4 839922192
        %v881 = vunpack.c.0.s8 %v880
        %v882 = vperm.slane %v877, %v881
        %883 = vset.pattern.permute.xlu0 1
        %884 = vperm.xlu0 %883, %v323
        %v885 = vpop.permute.xlu0 %884
        %v888 = vunpack.c.l.s4 839922192
        %v889 = vunpack.c.0.s8 %v888
        %v890 = vperm.slane %v885, %v889
        %891 = vset.pattern.permute.xlu0 1
        %892 = vperm.xlu0 %891, %v324
        %v893 = vpop.permute.xlu0 %892
        %v896 = vunpack.c.l.s4 839922192
        %v897 = vunpack.c.0.s8 %v896
        %v898 = vperm.slane %v893, %v897
        %899 = vset.pattern.permute.xlu0 1
        %900 = vperm.xlu0 %899, %v325
        %v901 = vpop.permute.xlu0 %900
        %v904 = vunpack.c.l.s4 839922192
        %v905 = vunpack.c.0.s8 %v904
        %v906 = vperm.slane %v901, %v905
        %907 = vset.pattern.permute.xlu0 1
        %908 = vperm.xlu0 %907, %v326
        %v909 = vpop.permute.xlu0 %908
        %v912 = vunpack.c.l.s4 839922192
        %v913 = vunpack.c.0.s8 %v912
        %v914 = vperm.slane %v909, %v913
        %915 = vset.pattern.permute.xlu0 1
        %916 = vperm.xlu0 %915, %v327
        %v917 = vpop.permute.xlu0 %916
        %v920 = vunpack.c.l.s4 839922192
        %v921 = vunpack.c.0.s8 %v920
        %v922 = vperm.slane %v917, %v921
        %923 = vset.pattern.permute.xlu0 1
        %924 = vperm.xlu0 %923, %v328
        %v925 = vpop.permute.xlu0 %924
        %v928 = vunpack.c.l.s4 839922192
        %v929 = vunpack.c.0.s8 %v928
        %v930 = vperm.slane %v925, %v929
        %931 = vset.pattern.permute.xlu0 1
        %932 = vperm.xlu0 %931, %v329
        %v933 = vpop.permute.xlu0 %932
        %v936 = vunpack.c.l.s4 839922192
        %v937 = vunpack.c.0.s8 %v936
        %v938 = vperm.slane %v933, %v937
        %939 = vset.pattern.permute.xlu0 1
        %940 = vperm.xlu0 %939, %v330
        %v941 = vpop.permute.xlu0 %940
        %v944 = vunpack.c.l.s4 839922192
        %v945 = vunpack.c.0.s8 %v944
        %v946 = vperm.slane %v941, %v945
        %947 = vset.pattern.permute.xlu0 1
        %948 = vperm.xlu0 %947, %v331
        %v949 = vpop.permute.xlu0 %948
        %v952 = vunpack.c.l.s4 839922192
        %v953 = vunpack.c.0.s8 %v952
        %v954 = vperm.slane %v949, %v953
        %955 = vset.pattern.permute.xlu0 1
        %956 = vperm.xlu0 %955, %v332
        %v957 = vpop.permute.xlu0 %956
        %v960 = vunpack.c.l.s4 839922192
        %v961 = vunpack.c.0.s8 %v960
        %v962 = vperm.slane %v957, %v961
        %963 = vset.pattern.permute.xlu0 1
        %964 = vperm.xlu0 %963, %v333
        %v965 = vpop.permute.xlu0 %964
        %v968 = vunpack.c.l.s4 839922192
        %v969 = vunpack.c.0.s8 %v968
        %v970 = vperm.slane %v965, %v969
        %971 = vset.pattern.permute.xlu0 1
        %972 = vperm.xlu0 %971, %v334
        %v973 = vpop.permute.xlu0 %972
        %v976 = vunpack.c.l.s4 839922192
        %v977 = vunpack.c.0.s8 %v976
        %v978 = vperm.slane %v973, %v977
        %979 = vset.pattern.permute.xlu0 1
        %980 = vperm.xlu0 %979, %v335
        %v981 = vpop.permute.xlu0 %980
        %v984 = vunpack.c.l.s4 839922192
        %v985 = vunpack.c.0.s8 %v984
        %v986 = vperm.slane %v981, %v985
        %987 = vset.pattern.permute.xlu0 1
        %988 = vperm.xlu0 %987, %v336
        %v989 = vpop.permute.xlu0 %988
        %v992 = vunpack.c.l.s4 839922192
        %v993 = vunpack.c.0.s8 %v992
        %v994 = vperm.slane %v989, %v993
        %995 = vset.pattern.permute.xlu0 1
        %996 = vperm.xlu0 %995, %v337
        %v997 = vpop.permute.xlu0 %996
        %v1000 = vunpack.c.l.s4 839922192
        %v1001 = vunpack.c.0.s8 %v1000
        %v1002 = vperm.slane %v997, %v1001
        %1003 = vset.pattern.permute.xlu0 1
        %1004 = vperm.xlu0 %1003, %v338
        %v1005 = vpop.permute.xlu0 %1004
        %v1008 = vunpack.c.l.s4 839922192
        %v1009 = vunpack.c.0.s8 %v1008
        %v1010 = vperm.slane %v1005, %v1009
        %1011 = vset.pattern.permute.xlu0 1
        %1012 = vperm.xlu0 %1011, %v339
        %v1013 = vpop.permute.xlu0 %1012
        %v1016 = vunpack.c.l.s4 839922192
        %v1017 = vunpack.c.0.s8 %v1016
        %v1018 = vperm.slane %v1013, %v1017
        %1019 = vset.pattern.permute.xlu0 1
        %1020 = vperm.xlu0 %1019, %v340
        %v1021 = vpop.permute.xlu0 %1020
        %v1024 = vunpack.c.l.s4 839922192
        %v1025 = vunpack.c.0.s8 %v1024
        %v1026 = vperm.slane %v1021, %v1025
        %1027 = vset.pattern.permute.xlu0 1
        %1028 = vperm.xlu0 %1027, %v341
        %v1029 = vpop.permute.xlu0 %1028
        %v1032 = vunpack.c.l.s4 839922192
        %v1033 = vunpack.c.0.s8 %v1032
        %v1034 = vperm.slane %v1029, %v1033
        %v1035 = vunpack.c.l.bf16 %v746
        %v1036 = vunpack.c.l.bf16 %v747
        %v1037 = vunpack.c.l.bf16 %v748
        %v1038 = vunpack.c.l.bf16 %v749
        %v1039 = vunpack.c.l.bf16 %v750
        %v1040 = vunpack.c.l.bf16 %v751
        %v1041 = vunpack.c.l.bf16 %v752
        %v1042 = vunpack.c.l.bf16 %v753
        %v1043 = vunpack.c.l.bf16 %v754
        %v1044 = vunpack.c.l.bf16 %v755
        %v1045 = vunpack.c.l.bf16 %v756
        %v1046 = vunpack.c.l.bf16 %v757
        %v1047 = vunpack.c.l.bf16 %v758
        %v1048 = vunpack.c.l.bf16 %v759
        %v1049 = vunpack.c.l.bf16 %v760
        %v1050 = vunpack.c.l.bf16 %v761
        %v1051 = vunpack.c.l.bf16 %v762
        %v1052 = vunpack.c.l.bf16 %v763
        %v1053 = vunpack.c.l.bf16 %v764
        %v1054 = vunpack.c.l.bf16 %v765
        %v1055 = vunpack.c.l.bf16 %v766
        %v1056 = vunpack.c.l.bf16 %v767
        %v1057 = vunpack.c.l.bf16 %v768
        %v1058 = vunpack.c.l.bf16 %v769
        %v1059 = vunpack.c.l.bf16 %v770
        %v1060 = vunpack.c.l.bf16 %v771
        %v1061 = vunpack.c.l.bf16 %v772
        %v1062 = vunpack.c.l.bf16 %v773
        %v1063 = vunpack.c.l.bf16 %v774
        %v1064 = vunpack.c.l.bf16 %v775
        %v1065 = vunpack.c.l.bf16 %v776
        %v1066 = vunpack.c.l.bf16 %v777
        %v1067 = vunpack.c.l.bf16 %v778
        %v1068 = vunpack.c.l.bf16 %v786
        %v1069 = vunpack.c.l.bf16 %v794
        %v1070 = vunpack.c.l.bf16 %v802
        %v1071 = vunpack.c.l.bf16 %v810
        %v1072 = vunpack.c.l.bf16 %v818
        %v1073 = vunpack.c.l.bf16 %v826
        %v1074 = vunpack.c.l.bf16 %v834
        %v1075 = vunpack.c.l.bf16 %v842
        %v1076 = vunpack.c.l.bf16 %v850
        %v1077 = vunpack.c.l.bf16 %v858
        %v1078 = vunpack.c.l.bf16 %v866
        %v1079 = vunpack.c.l.bf16 %v874
        %v1080 = vunpack.c.l.bf16 %v882
        %v1081 = vunpack.c.l.bf16 %v890
        %v1082 = vunpack.c.l.bf16 %v898
        %v1083 = vunpack.c.l.bf16 %v906
        %v1084 = vunpack.c.l.bf16 %v914
        %v1085 = vunpack.c.l.bf16 %v922
        %v1086 = vunpack.c.l.bf16 %v930
        %v1087 = vunpack.c.l.bf16 %v938
        %v1088 = vunpack.c.l.bf16 %v946
        %v1089 = vunpack.c.l.bf16 %v954
        %v1090 = vunpack.c.l.bf16 %v962
        %v1091 = vunpack.c.l.bf16 %v970
        %v1092 = vunpack.c.l.bf16 %v978
        %v1093 = vunpack.c.l.bf16 %v986
        %v1094 = vunpack.c.l.bf16 %v994
        %v1095 = vunpack.c.l.bf16 %v1002
        %v1096 = vunpack.c.l.bf16 %v1010
        %v1097 = vunpack.c.l.bf16 %v1018
        %v1098 = vunpack.c.l.bf16 %v1026
        %v1099 = vunpack.c.l.bf16 %v1034
        %vm1132 = vcmask 1040384
        %v1133 = vrot.slane %v1068, 7
        %v1134 = vrot.slane %v1069, 7
        %v1135 = vsel %vm1132, %v1133, %v1134
        %v1136 = vrot.slane %v1070, 7
        %v1137 = vsel %vm1132, %v1134, %v1136
        %v1138 = vrot.slane %v1071, 7
        %v1139 = vsel %vm1132, %v1136, %v1138
        %v1140 = vrot.slane %v1072, 7
        %v1141 = vsel %vm1132, %v1138, %v1140
        %v1142 = vrot.slane %v1073, 7
        %v1143 = vsel %vm1132, %v1140, %v1142
        %v1144 = vrot.slane %v1074, 7
        %v1145 = vsel %vm1132, %v1142, %v1144
        %v1146 = vrot.slane %v1075, 7
        %v1147 = vsel %vm1132, %v1144, %v1146
        %v1148 = vrot.slane %v1076, 7
        %v1149 = vsel %vm1132, %v1146, %v1148
        %v1150 = vrot.slane %v1077, 7
        %v1151 = vsel %vm1132, %v1148, %v1150
        %v1152 = vrot.slane %v1078, 7
        %v1153 = vsel %vm1132, %v1150, %v1152
        %v1154 = vrot.slane %v1079, 7
        %v1155 = vsel %vm1132, %v1152, %v1154
        %v1156 = vrot.slane %v1080, 7
        %v1157 = vsel %vm1132, %v1154, %v1156
        %v1158 = vrot.slane %v1081, 7
        %v1159 = vsel %vm1132, %v1156, %v1158
        %v1160 = vrot.slane %v1082, 7
        %v1161 = vsel %vm1132, %v1158, %v1160
        %v1162 = vrot.slane %v1083, 7
        %v1163 = vsel %vm1132, %v1160, %v1162
        %v1164 = vrot.slane %v1084, 7
        %v1165 = vsel %vm1132, %v1162, %v1164
        %v1166 = vrot.slane %v1085, 7
        %v1167 = vsel %vm1132, %v1164, %v1166
        %v1168 = vrot.slane %v1086, 7
        %v1169 = vsel %vm1132, %v1166, %v1168
        %v1170 = vrot.slane %v1087, 7
        %v1171 = vsel %vm1132, %v1168, %v1170
        %v1172 = vrot.slane %v1088, 7
        %v1173 = vsel %vm1132, %v1170, %v1172
        %v1174 = vrot.slane %v1089, 7
        %v1175 = vsel %vm1132, %v1172, %v1174
        %v1176 = vrot.slane %v1090, 7
        %v1177 = vsel %vm1132, %v1174, %v1176
        %v1178 = vrot.slane %v1091, 7
        %v1179 = vsel %vm1132, %v1176, %v1178
        %v1180 = vrot.slane %v1092, 7
        %v1181 = vsel %vm1132, %v1178, %v1180
        %v1182 = vrot.slane %v1093, 7
        %v1183 = vsel %vm1132, %v1180, %v1182
        %v1184 = vrot.slane %v1094, 7
        %v1185 = vsel %vm1132, %v1182, %v1184
        %v1186 = vrot.slane %v1095, 7
        %v1187 = vsel %vm1132, %v1184, %v1186
        %v1188 = vrot.slane %v1096, 7
        %v1189 = vsel %vm1132, %v1186, %v1188
        %v1190 = vrot.slane %v1097, 7
        %v1191 = vsel %vm1132, %v1188, %v1190
        %v1192 = vrot.slane %v1098, 7
        %v1193 = vsel %vm1132, %v1190, %v1192
        %v1194 = vrot.slane %v1099, 7
        %v1195 = vsel %vm1132, %v1192, %v1194
        %v1229 = vmul.f32 %v1035, %v1133
        %v1230 = vmul.f32 %v1036, %v1135
        %v1231 = vmul.f32 %v1037, %v1137
        %v1232 = vmul.f32 %v1038, %v1139
        %v1233 = vmul.f32 %v1039, %v1141
        %v1234 = vmul.f32 %v1040, %v1143
        %v1235 = vmul.f32 %v1041, %v1145
        %v1236 = vmul.f32 %v1042, %v1147
        %v1237 = vmul.f32 %v1043, %v1149
        %v1238 = vmul.f32 %v1044, %v1151
        %v1239 = vmul.f32 %v1045, %v1153
        %v1240 = vmul.f32 %v1046, %v1155
        %v1241 = vmul.f32 %v1047, %v1157
        %v1242 = vmul.f32 %v1048, %v1159
        %v1243 = vmul.f32 %v1049, %v1161
        %v1244 = vmul.f32 %v1050, %v1163
        %v1245 = vmul.f32 %v1051, %v1165
        %v1246 = vmul.f32 %v1052, %v1167
        %v1247 = vmul.f32 %v1053, %v1169
        %v1248 = vmul.f32 %v1054, %v1171
        %v1249 = vmul.f32 %v1055, %v1173
        %v1250 = vmul.f32 %v1056, %v1175
        %v1251 = vmul.f32 %v1057, %v1177
        %v1252 = vmul.f32 %v1058, %v1179
        %v1253 = vmul.f32 %v1059, %v1181
        %v1254 = vmul.f32 %v1060, %v1183
        %v1255 = vmul.f32 %v1061, %v1185
        %v1256 = vmul.f32 %v1062, %v1187
        %v1257 = vmul.f32 %v1063, %v1189
        %v1258 = vmul.f32 %v1064, %v1191
        %v1259 = vmul.f32 %v1065, %v1193
        %v1260 = vmul.f32 %v1066, %v1195
        %v1261 = vmul.f32 %v1067, %v1194
        %v1262 = vpack.c.bf16 %v1230, %v1229
        %v1263 = vpack.c.bf16 %v1232, %v1231
        %v1264 = vpack.c.bf16 %v1234, %v1233
        %v1265 = vpack.c.bf16 %v1236, %v1235
        %v1266 = vpack.c.bf16 %v1238, %v1237
        %v1267 = vpack.c.bf16 %v1240, %v1239
        %v1268 = vpack.c.bf16 %v1242, %v1241
        %v1269 = vpack.c.bf16 %v1244, %v1243
        %v1270 = vpack.c.bf16 %v1246, %v1245
        %v1271 = vpack.c.bf16 %v1248, %v1247
        %v1272 = vpack.c.bf16 %v1250, %v1249
        %v1273 = vpack.c.bf16 %v1252, %v1251
        %v1274 = vpack.c.bf16 %v1254, %v1253
        %v1275 = vpack.c.bf16 %v1256, %v1255
        %v1276 = vpack.c.bf16 %v1258, %v1257
        %v1277 = vpack.c.bf16 %v1260, %v1259
        %v1278 = vpack.c.bf16 %v1261, %v1261
        %v1279 = vld [vmem:[%s2 + $0x10] sm:$0xf]
        %v1280 = vld [vmem:[%s2 + $0x14] sm:$0xf]
        %v1281 = vld [vmem:[%s2 + $0x18] sm:$0xf]
        %v1282 = vld [vmem:[%s2 + $0x1c] sm:$0xf]
        %vm1283 = vsmask.f32 7424
        %v1285 = vshrl.u32 %v1262, 16
        %v1287 = vshll.u32 %v1262, 16
        %v1289 = vrot.slane %v1287, 1
        %v1290 = vor.u32 %v1285, %v1289
        %v1292 = vshll.u32 %v1263, 16
        %v1294 = vrot.slane %v1292, 1
        %v1295 = vsel %vm1283, %v1290, %v1294
        %v1296 = vshrl.u32 %v1263, 16
        %v1298 = vor.u32 %v1296, %v1294
        %v1300 = vshll.u32 %v1264, 16
        %v1302 = vrot.slane %v1300, 1
        %v1303 = vsel %vm1283, %v1298, %v1302
        %v1304 = vshrl.u32 %v1264, 16
        %v1306 = vor.u32 %v1304, %v1302
        %v1308 = vshll.u32 %v1265, 16
        %v1310 = vrot.slane %v1308, 1
        %v1311 = vsel %vm1283, %v1306, %v1310
        %v1312 = vshrl.u32 %v1265, 16
        %v1314 = vor.u32 %v1312, %v1310
        %v1316 = vshll.u32 %v1266, 16
        %v1318 = vrot.slane %v1316, 1
        %v1319 = vsel %vm1283, %v1314, %v1318
        %v1320 = vshrl.u32 %v1266, 16
        %v1322 = vor.u32 %v1320, %v1318
        %v1324 = vshll.u32 %v1267, 16
        %v1326 = vrot.slane %v1324, 1
        %v1327 = vsel %vm1283, %v1322, %v1326
        %v1328 = vshrl.u32 %v1267, 16
        %v1330 = vor.u32 %v1328, %v1326
        %v1332 = vshll.u32 %v1268, 16
        %v1334 = vrot.slane %v1332, 1
        %v1335 = vsel %vm1283, %v1330, %v1334
        %v1336 = vshrl.u32 %v1268, 16
        %v1338 = vor.u32 %v1336, %v1334
        %v1340 = vshll.u32 %v1269, 16
        %v1342 = vrot.slane %v1340, 1
        %v1343 = vsel %vm1283, %v1338, %v1342
        %v1344 = vshrl.u32 %v1269, 16
        %v1346 = vor.u32 %v1344, %v1342
        %v1348 = vshll.u32 %v1270, 16
        %v1350 = vrot.slane %v1348, 1
        %v1351 = vsel %vm1283, %v1346, %v1350
        %v1352 = vshrl.u32 %v1270, 16
        %v1354 = vor.u32 %v1352, %v1350
        %v1356 = vshll.u32 %v1271, 16
        %v1358 = vrot.slane %v1356, 1
        %v1359 = vsel %vm1283, %v1354, %v1358
        %v1360 = vshrl.u32 %v1271, 16
        %v1362 = vor.u32 %v1360, %v1358
        %v1364 = vshll.u32 %v1272, 16
        %v1366 = vrot.slane %v1364, 1
        %v1367 = vsel %vm1283, %v1362, %v1366
        %v1368 = vshrl.u32 %v1272, 16
        %v1370 = vor.u32 %v1368, %v1366
        %v1372 = vshll.u32 %v1273, 16
        %v1374 = vrot.slane %v1372, 1
        %v1375 = vsel %vm1283, %v1370, %v1374
        %v1376 = vshrl.u32 %v1273, 16
        %v1378 = vor.u32 %v1376, %v1374
        %v1380 = vshll.u32 %v1274, 16
        %v1382 = vrot.slane %v1380, 1
        %v1383 = vsel %vm1283, %v1378, %v1382
        %v1384 = vshrl.u32 %v1274, 16
        %v1386 = vor.u32 %v1384, %v1382
        %v1388 = vshll.u32 %v1275, 16
        %v1390 = vrot.slane %v1388, 1
        %v1391 = vsel %vm1283, %v1386, %v1390
        %v1392 = vshrl.u32 %v1275, 16
        %v1394 = vor.u32 %v1392, %v1390
        %v1396 = vshll.u32 %v1276, 16
        %v1398 = vrot.slane %v1396, 1
        %v1399 = vsel %vm1283, %v1394, %v1398
        %v1400 = vshrl.u32 %v1276, 16
        %v1402 = vor.u32 %v1400, %v1398
        %v1404 = vshll.u32 %v1277, 16
        %v1406 = vrot.slane %v1404, 1
        %v1407 = vsel %vm1283, %v1402, %v1406
        %v1408 = vshrl.u32 %v1277, 16
        %v1410 = vor.u32 %v1408, %v1406
        %v1412 = vshll.u32 %v1278, 16
        %v1414 = vrot.slane %v1412, 1
        %v1415 = vsel %vm1283, %v1410, %v1414
        %v1420 = vunpack.c.l.b16 %v1279
        %v1421 = vunpack.c.l.b16 %v1280
        %v1422 = vunpack.c.l.b16 %v1281
        %v1423 = vunpack.c.l.b16 %v1282
        %v1424 = vpack.c.b16 %v1421, %v1420
        %v1425 = vpack.c.b16 %v1423, %v1422
        %vm1428 = vcmask 261120
        %v1430 = vsel %vm1428, %v1295, 0
        %v1433 = vsel %vm1428, %v1303, 0
        %v1436 = vsel %vm1428, %v1311, 0
        %v1439 = vsel %vm1428, %v1319, 0
        %v1442 = vsel %vm1428, %v1327, 0
        %v1445 = vsel %vm1428, %v1335, 0
        %v1448 = vsel %vm1428, %v1343, 0
        %v1451 = vsel %vm1428, %v1351, 0
        %v1454 = vsel %vm1428, %v1359, 0
        %v1457 = vsel %vm1428, %v1367, 0
        %v1460 = vsel %vm1428, %v1375, 0
        %v1463 = vsel %vm1428, %v1383, 0
        %v1466 = vsel %vm1428, %v1391, 0
        %v1469 = vsel %vm1428, %v1399, 0
        %v1472 = vsel %vm1428, %v1407, 0
        %v1475 = vsel %vm1428, %v1415, 0
        %1477 = vmatpush.bf16.msra.mxu0 0
        %1478 = vmatpush.bf16.msra.mxu0 0
        %1479 = vmatpush.bf16.msra.mxu0 0
        %1480 = vmatpush.bf16.msra.mxu0 0
        %1481 = vmatpush.bf16.msra.mxu0 0
        %1482 = vmatpush.bf16.msra.mxu0 0
        %1483 = vmatpush.bf16.msra.mxu0 %v1425
        %1484 = vmatpush.bf16.msra.mxu0 %v1424
        %1485 = vmatmul.bf16.gmra.mxu0 %v1430
        %v1486 = vpop.f32.mrf.mxu0
        %v1487 = vadd.f32 0.0, %v1486
        %v1488 = vpop.f32.mrf.mxu0
        %v1489 = vadd.f32 0.0, %v1488
        %1490 = vmatmul.bf16.gmra.mxu0 %v1433
        %v1491 = vpop.f32.mrf.mxu0
        %v1492 = vadd.f32 0.0, %v1491
        %v1493 = vpop.f32.mrf.mxu0
        %v1494 = vadd.f32 0.0, %v1493
        %1495 = vmatmul.bf16.gmra.mxu0 %v1436
        %v1496 = vpop.f32.mrf.mxu0
        %v1497 = vadd.f32 0.0, %v1496
        %v1498 = vpop.f32.mrf.mxu0
        %v1499 = vadd.f32 0.0, %v1498
        %1500 = vmatmul.bf16.gmra.mxu0 %v1439
        %v1501 = vpop.f32.mrf.mxu0
        %v1502 = vadd.f32 0.0, %v1501
        %v1503 = vpop.f32.mrf.mxu0
        %v1504 = vadd.f32 0.0, %v1503
        %1505 = vmatmul.bf16.gmra.mxu0 %v1442
        %v1506 = vpop.f32.mrf.mxu0
        %v1507 = vadd.f32 0.0, %v1506
        %v1508 = vpop.f32.mrf.mxu0
        %v1509 = vadd.f32 0.0, %v1508
        %1510 = vmatmul.bf16.gmra.mxu0 %v1445
        %v1511 = vpop.f32.mrf.mxu0
        %v1512 = vadd.f32 0.0, %v1511
        %v1513 = vpop.f32.mrf.mxu0
        %v1514 = vadd.f32 0.0, %v1513
        %1515 = vmatmul.bf16.gmra.mxu0 %v1448
        %v1516 = vpop.f32.mrf.mxu0
        %v1517 = vadd.f32 0.0, %v1516
        %v1518 = vpop.f32.mrf.mxu0
        %v1519 = vadd.f32 0.0, %v1518
        %1520 = vmatmul.bf16.gmra.mxu0 %v1451
        %v1521 = vpop.f32.mrf.mxu0
        %v1522 = vadd.f32 0.0, %v1521
        %v1523 = vpop.f32.mrf.mxu0
        %v1524 = vadd.f32 0.0, %v1523
        %1525 = vmatmul.bf16.gmra.mxu0 %v1454
        %v1526 = vpop.f32.mrf.mxu0
        %v1527 = vadd.f32 0.0, %v1526
        %v1528 = vpop.f32.mrf.mxu0
        %v1529 = vadd.f32 0.0, %v1528
        %1530 = vmatmul.bf16.gmra.mxu0 %v1457
        %v1531 = vpop.f32.mrf.mxu0
        %v1532 = vadd.f32 0.0, %v1531
        %v1533 = vpop.f32.mrf.mxu0
        %v1534 = vadd.f32 0.0, %v1533
        %1535 = vmatmul.bf16.gmra.mxu0 %v1460
        %v1536 = vpop.f32.mrf.mxu0
        %v1537 = vadd.f32 0.0, %v1536
        %v1538 = vpop.f32.mrf.mxu0
        %v1539 = vadd.f32 0.0, %v1538
        %1540 = vmatmul.bf16.gmra.mxu0 %v1463
        %v1541 = vpop.f32.mrf.mxu0
        %v1542 = vadd.f32 0.0, %v1541
        %v1543 = vpop.f32.mrf.mxu0
        %v1544 = vadd.f32 0.0, %v1543
        %1545 = vmatmul.bf16.gmra.mxu0 %v1466
        %v1546 = vpop.f32.mrf.mxu0
        %v1547 = vadd.f32 0.0, %v1546
        %v1548 = vpop.f32.mrf.mxu0
        %v1549 = vadd.f32 0.0, %v1548
        %1550 = vmatmul.bf16.gmra.mxu0 %v1469
        %v1551 = vpop.f32.mrf.mxu0
        %v1552 = vadd.f32 0.0, %v1551
        %v1553 = vpop.f32.mrf.mxu0
        %v1554 = vadd.f32 0.0, %v1553
        %1555 = vmatmul.bf16.gmra.mxu0 %v1472
        %v1556 = vpop.f32.mrf.mxu0
        %v1557 = vadd.f32 0.0, %v1556
        %v1558 = vpop.f32.mrf.mxu0
        %v1559 = vadd.f32 0.0, %v1558
        %1560 = vmatmul.bf16.gmra.mxu0 %v1475
        %v1561 = vpop.f32.mrf.mxu0
        %v1562 = vadd.f32 0.0, %v1561
        %v1563 = vpop.f32.mrf.mxu0
        %v1564 = vadd.f32 0.0, %v1563
        %1565 = vdwg.mxu0
        %v1570 = vunpack.c.l.b16 %v742
        %v1571 = vunpack.c.l.b16 %v743
        %v1572 = vunpack.c.l.b16 %v744
        %v1573 = vunpack.c.l.b16 %v745
        %v1574 = vpack.c.b16 %v1571, %v1570
        %v1575 = vpack.c.b16 %v1573, %v1572
        %v1579 = vsel %vm1428, %v726, 0
        %v1582 = vsel %vm1428, %v727, 0
        %v1585 = vsel %vm1428, %v728, 0
        %v1588 = vsel %vm1428, %v729, 0
        %v1591 = vsel %vm1428, %v730, 0
        %v1594 = vsel %vm1428, %v731, 0
        %v1597 = vsel %vm1428, %v732, 0
        %v1600 = vsel %vm1428, %v733, 0
        %v1603 = vsel %vm1428, %v734, 0
        %v1606 = vsel %vm1428, %v735, 0
        %v1609 = vsel %vm1428, %v736, 0
        %v1612 = vsel %vm1428, %v737, 0
        %v1615 = vsel %vm1428, %v738, 0
        %v1618 = vsel %vm1428, %v739, 0
        %v1621 = vsel %vm1428, %v740, 0
        %v1624 = vsel %vm1428, %v741, 0
        %1626 = vmatpush.bf16.msra.mxu0 0
        %1627 = vmatpush.bf16.msra.mxu0 0
        %1628 = vmatpush.bf16.msra.mxu0 0
        %1629 = vmatpush.bf16.msra.mxu0 0
        %1630 = vmatpush.bf16.msra.mxu0 0
        %1631 = vmatpush.bf16.msra.mxu0 0
        %1632 = vmatpush.bf16.msra.mxu0 %v1575
        %1633 = vmatpush.bf16.msra.mxu0 %v1574
        %1634 = vmatmul.bf16.gmra.mxu0 %v1579
        %v1635 = vpop.f32.mrf.mxu0
        %v1636 = vadd.f32 %v1487, %v1635
        %v1637 = vpop.f32.mrf.mxu0
        %v1638 = vadd.f32 %v1489, %v1637
        %1639 = vmatmul.bf16.gmra.mxu0 %v1582
        %v1640 = vpop.f32.mrf.mxu0
        %v1641 = vadd.f32 %v1492, %v1640
        %v1642 = vpop.f32.mrf.mxu0
        %v1643 = vadd.f32 %v1494, %v1642
        %1644 = vmatmul.bf16.gmra.mxu0 %v1585
        %v1645 = vpop.f32.mrf.mxu0
        %v1646 = vadd.f32 %v1497, %v1645
        %v1647 = vpop.f32.mrf.mxu0
        %v1648 = vadd.f32 %v1499, %v1647
        %1649 = vmatmul.bf16.gmra.mxu0 %v1588
        %v1650 = vpop.f32.mrf.mxu0
        %v1651 = vadd.f32 %v1502, %v1650
        %v1652 = vpop.f32.mrf.mxu0
        %v1653 = vadd.f32 %v1504, %v1652
        %1654 = vmatmul.bf16.gmra.mxu0 %v1591
        %v1655 = vpop.f32.mrf.mxu0
        %v1656 = vadd.f32 %v1507, %v1655
        %v1657 = vpop.f32.mrf.mxu0
        %v1658 = vadd.f32 %v1509, %v1657
        %1659 = vmatmul.bf16.gmra.mxu0 %v1594
        %v1660 = vpop.f32.mrf.mxu0
        %v1661 = vadd.f32 %v1512, %v1660
        %v1662 = vpop.f32.mrf.mxu0
        %v1663 = vadd.f32 %v1514, %v1662
        %1664 = vmatmul.bf16.gmra.mxu0 %v1597
        %v1665 = vpop.f32.mrf.mxu0
        %v1666 = vadd.f32 %v1517, %v1665
        %v1667 = vpop.f32.mrf.mxu0
        %v1668 = vadd.f32 %v1519, %v1667
        %1669 = vmatmul.bf16.gmra.mxu0 %v1600
        %v1670 = vpop.f32.mrf.mxu0
        %v1671 = vadd.f32 %v1522, %v1670
        %v1672 = vpop.f32.mrf.mxu0
        %v1673 = vadd.f32 %v1524, %v1672
        %1674 = vmatmul.bf16.gmra.mxu0 %v1603
        %v1675 = vpop.f32.mrf.mxu0
        %v1676 = vadd.f32 %v1527, %v1675
        %v1677 = vpop.f32.mrf.mxu0
        %v1678 = vadd.f32 %v1529, %v1677
        %1679 = vmatmul.bf16.gmra.mxu0 %v1606
        %v1680 = vpop.f32.mrf.mxu0
        %v1681 = vadd.f32 %v1532, %v1680
        %v1682 = vpop.f32.mrf.mxu0
        %v1683 = vadd.f32 %v1534, %v1682
        %1684 = vmatmul.bf16.gmra.mxu0 %v1609
        %v1685 = vpop.f32.mrf.mxu0
        %v1686 = vadd.f32 %v1537, %v1685
        %v1687 = vpop.f32.mrf.mxu0
        %v1688 = vadd.f32 %v1539, %v1687
        %1689 = vmatmul.bf16.gmra.mxu0 %v1612
        %v1690 = vpop.f32.mrf.mxu0
        %v1691 = vadd.f32 %v1542, %v1690
        %v1692 = vpop.f32.mrf.mxu0
        %v1693 = vadd.f32 %v1544, %v1692
        %1694 = vmatmul.bf16.gmra.mxu0 %v1615
        %v1695 = vpop.f32.mrf.mxu0
        %v1696 = vadd.f32 %v1547, %v1695
        %v1697 = vpop.f32.mrf.mxu0
        %v1698 = vadd.f32 %v1549, %v1697
        %1699 = vmatmul.bf16.gmra.mxu0 %v1618
        %v1700 = vpop.f32.mrf.mxu0
        %v1701 = vadd.f32 %v1552, %v1700
        %v1702 = vpop.f32.mrf.mxu0
        %v1703 = vadd.f32 %v1554, %v1702
        %1704 = vmatmul.bf16.gmra.mxu0 %v1621
        %v1705 = vpop.f32.mrf.mxu0
        %v1706 = vadd.f32 %v1557, %v1705
        %v1707 = vpop.f32.mrf.mxu0
        %v1708 = vadd.f32 %v1559, %v1707
        %1709 = vmatmul.bf16.gmra.mxu0 %v1624
        %v1710 = vpop.f32.mrf.mxu0
        %v1711 = vadd.f32 %v1562, %v1710
        %v1712 = vpop.f32.mrf.mxu0
        %v1713 = vadd.f32 %v1564, %v1712
        %1714 = vdwg.mxu0
        %v1715 = vld [vmem:[%s276] sm:$0xe]
        %1716 = vset.pattern.permute.xlu0 2
        %1717 = vperm.xlu0 %1716, %v310
        %v1718 = vpop.permute.xlu0 %1717
        %v1721 = vunpack.c.l.s4 839922192
        %v1722 = vunpack.c.0.s8 %v1721
        %v1723 = vperm.slane %v1718, %v1722
        %1724 = vset.pattern.permute.xlu0 2
        %1725 = vperm.xlu0 %1724, %v311
        %v1726 = vpop.permute.xlu0 %1725
        %v1729 = vunpack.c.l.s4 839922192
        %v1730 = vunpack.c.0.s8 %v1729
        %v1731 = vperm.slane %v1726, %v1730
        %1732 = vset.pattern.permute.xlu0 2
        %1733 = vperm.xlu0 %1732, %v312
        %v1734 = vpop.permute.xlu0 %1733
        %v1737 = vunpack.c.l.s4 839922192
        %v1738 = vunpack.c.0.s8 %v1737
        %v1739 = vperm.slane %v1734, %v1738
        %1740 = vset.pattern.permute.xlu0 2
        %1741 = vperm.xlu0 %1740, %v313
        %v1742 = vpop.permute.xlu0 %1741
        %v1745 = vunpack.c.l.s4 839922192
        %v1746 = vunpack.c.0.s8 %v1745
        %v1747 = vperm.slane %v1742, %v1746
        %1748 = vset.pattern.permute.xlu0 2
        %1749 = vperm.xlu0 %1748, %v314
        %v1750 = vpop.permute.xlu0 %1749
        %v1753 = vunpack.c.l.s4 839922192
        %v1754 = vunpack.c.0.s8 %v1753
        %v1755 = vperm.slane %v1750, %v1754
        %1756 = vset.pattern.permute.xlu0 2
        %1757 = vperm.xlu0 %1756, %v315
        %v1758 = vpop.permute.xlu0 %1757
        %v1761 = vunpack.c.l.s4 839922192
        %v1762 = vunpack.c.0.s8 %v1761
        %v1763 = vperm.slane %v1758, %v1762
        %1764 = vset.pattern.permute.xlu0 2
        %1765 = vperm.xlu0 %1764, %v316
        %v1766 = vpop.permute.xlu0 %1765
        %v1769 = vunpack.c.l.s4 839922192
        %v1770 = vunpack.c.0.s8 %v1769
        %v1771 = vperm.slane %v1766, %v1770
        %1772 = vset.pattern.permute.xlu0 2
        %1773 = vperm.xlu0 %1772, %v317
        %v1774 = vpop.permute.xlu0 %1773
        %v1777 = vunpack.c.l.s4 839922192
        %v1778 = vunpack.c.0.s8 %v1777
        %v1779 = vperm.slane %v1774, %v1778
        %1780 = vset.pattern.permute.xlu0 2
        %1781 = vperm.xlu0 %1780, %v318
        %v1782 = vpop.permute.xlu0 %1781
        %v1785 = vunpack.c.l.s4 839922192
        %v1786 = vunpack.c.0.s8 %v1785
        %v1787 = vperm.slane %v1782, %v1786
        %1788 = vset.pattern.permute.xlu0 2
        %1789 = vperm.xlu0 %1788, %v319
        %v1790 = vpop.permute.xlu0 %1789
        %v1793 = vunpack.c.l.s4 839922192
        %v1794 = vunpack.c.0.s8 %v1793
        %v1795 = vperm.slane %v1790, %v1794
        %1796 = vset.pattern.permute.xlu0 2
        %1797 = vperm.xlu0 %1796, %v320
        %v1798 = vpop.permute.xlu0 %1797
        %v1801 = vunpack.c.l.s4 839922192
        %v1802 = vunpack.c.0.s8 %v1801
        %v1803 = vperm.slane %v1798, %v1802
        %1804 = vset.pattern.permute.xlu0 2
        %1805 = vperm.xlu0 %1804, %v321
        %v1806 = vpop.permute.xlu0 %1805
        %v1809 = vunpack.c.l.s4 839922192
        %v1810 = vunpack.c.0.s8 %v1809
        %v1811 = vperm.slane %v1806, %v1810
        %1812 = vset.pattern.permute.xlu0 2
        %1813 = vperm.xlu0 %1812, %v322
        %v1814 = vpop.permute.xlu0 %1813
        %v1817 = vunpack.c.l.s4 839922192
        %v1818 = vunpack.c.0.s8 %v1817
        %v1819 = vperm.slane %v1814, %v1818
        %1820 = vset.pattern.permute.xlu0 2
        %1821 = vperm.xlu0 %1820, %v323
        %v1822 = vpop.permute.xlu0 %1821
        %v1825 = vunpack.c.l.s4 839922192
        %v1826 = vunpack.c.0.s8 %v1825
        %v1827 = vperm.slane %v1822, %v1826
        %1828 = vset.pattern.permute.xlu0 2
        %1829 = vperm.xlu0 %1828, %v324
        %v1830 = vpop.permute.xlu0 %1829
        %v1833 = vunpack.c.l.s4 839922192
        %v1834 = vunpack.c.0.s8 %v1833
        %v1835 = vperm.slane %v1830, %v1834
        %1836 = vset.pattern.permute.xlu0 2
        %1837 = vperm.xlu0 %1836, %v325
        %v1838 = vpop.permute.xlu0 %1837
        %v1841 = vunpack.c.l.s4 839922192
        %v1842 = vunpack.c.0.s8 %v1841
        %v1843 = vperm.slane %v1838, %v1842
        %1844 = vset.pattern.permute.xlu0 2
        %1845 = vperm.xlu0 %1844, %v326
        %v1846 = vpop.permute.xlu0 %1845
        %v1849 = vunpack.c.l.s4 839922192
        %v1850 = vunpack.c.0.s8 %v1849
        %v1851 = vperm.slane %v1846, %v1850
        %1852 = vset.pattern.permute.xlu0 2
        %1853 = vperm.xlu0 %1852, %v327
        %v1854 = vpop.permute.xlu0 %1853
        %v1857 = vunpack.c.l.s4 839922192
        %v1858 = vunpack.c.0.s8 %v1857
        %v1859 = vperm.slane %v1854, %v1858
        %1860 = vset.pattern.permute.xlu0 2
        %1861 = vperm.xlu0 %1860, %v328
        %v1862 = vpop.permute.xlu0 %1861
        %v1865 = vunpack.c.l.s4 839922192
        %v1866 = vunpack.c.0.s8 %v1865
        %v1867 = vperm.slane %v1862, %v1866
        %1868 = vset.pattern.permute.xlu0 2
        %1869 = vperm.xlu0 %1868, %v329
        %v1870 = vpop.permute.xlu0 %1869
        %v1873 = vunpack.c.l.s4 839922192
        %v1874 = vunpack.c.0.s8 %v1873
        %v1875 = vperm.slane %v1870, %v1874
        %1876 = vset.pattern.permute.xlu0 2
        %1877 = vperm.xlu0 %1876, %v330
        %v1878 = vpop.permute.xlu0 %1877
        %v1881 = vunpack.c.l.s4 839922192
        %v1882 = vunpack.c.0.s8 %v1881
        %v1883 = vperm.slane %v1878, %v1882
        %1884 = vset.pattern.permute.xlu0 2
        %1885 = vperm.xlu0 %1884, %v331
        %v1886 = vpop.permute.xlu0 %1885
        %v1889 = vunpack.c.l.s4 839922192
        %v1890 = vunpack.c.0.s8 %v1889
        %v1891 = vperm.slane %v1886, %v1890
        %1892 = vset.pattern.permute.xlu0 2
        %1893 = vperm.xlu0 %1892, %v332
        %v1894 = vpop.permute.xlu0 %1893
        %v1897 = vunpack.c.l.s4 839922192
        %v1898 = vunpack.c.0.s8 %v1897
        %v1899 = vperm.slane %v1894, %v1898
        %1900 = vset.pattern.permute.xlu0 2
        %1901 = vperm.xlu0 %1900, %v333
        %v1902 = vpop.permute.xlu0 %1901
        %v1905 = vunpack.c.l.s4 839922192
        %v1906 = vunpack.c.0.s8 %v1905
        %v1907 = vperm.slane %v1902, %v1906
        %1908 = vset.pattern.permute.xlu0 2
        %1909 = vperm.xlu0 %1908, %v334
        %v1910 = vpop.permute.xlu0 %1909
        %v1913 = vunpack.c.l.s4 839922192
        %v1914 = vunpack.c.0.s8 %v1913
        %v1915 = vperm.slane %v1910, %v1914
        %1916 = vset.pattern.permute.xlu0 2
        %1917 = vperm.xlu0 %1916, %v335
        %v1918 = vpop.permute.xlu0 %1917
        %v1921 = vunpack.c.l.s4 839922192
        %v1922 = vunpack.c.0.s8 %v1921
        %v1923 = vperm.slane %v1918, %v1922
        %1924 = vset.pattern.permute.xlu0 2
        %1925 = vperm.xlu0 %1924, %v336
        %v1926 = vpop.permute.xlu0 %1925
        %v1929 = vunpack.c.l.s4 839922192
        %v1930 = vunpack.c.0.s8 %v1929
        %v1931 = vperm.slane %v1926, %v1930
        %1932 = vset.pattern.permute.xlu0 2
        %1933 = vperm.xlu0 %1932, %v337
        %v1934 = vpop.permute.xlu0 %1933
        %v1937 = vunpack.c.l.s4 839922192
        %v1938 = vunpack.c.0.s8 %v1937
        %v1939 = vperm.slane %v1934, %v1938
        %1940 = vset.pattern.permute.xlu0 2
        %1941 = vperm.xlu0 %1940, %v338
        %v1942 = vpop.permute.xlu0 %1941
        %v1945 = vunpack.c.l.s4 839922192
        %v1946 = vunpack.c.0.s8 %v1945
        %v1947 = vperm.slane %v1942, %v1946
        %1948 = vset.pattern.permute.xlu0 2
        %1949 = vperm.xlu0 %1948, %v339
        %v1950 = vpop.permute.xlu0 %1949
        %v1953 = vunpack.c.l.s4 839922192
        %v1954 = vunpack.c.0.s8 %v1953
        %v1955 = vperm.slane %v1950, %v1954
        %1956 = vset.pattern.permute.xlu0 2
        %1957 = vperm.xlu0 %1956, %v340
        %v1958 = vpop.permute.xlu0 %1957
        %v1961 = vunpack.c.l.s4 839922192
        %v1962 = vunpack.c.0.s8 %v1961
        %v1963 = vperm.slane %v1958, %v1962
        %1964 = vset.pattern.permute.xlu0 2
        %1965 = vperm.xlu0 %1964, %v341
        %v1966 = vpop.permute.xlu0 %1965
        %v1969 = vunpack.c.l.s4 839922192
        %v1970 = vunpack.c.0.s8 %v1969
        %v1971 = vperm.slane %v1966, %v1970
        %v1972 = vunpack.c.l.bf16 %v1715
        %v1973 = vunpack.c.l.bf16 %v1723
        %v1974 = vunpack.c.l.bf16 %v1731
        %v1975 = vunpack.c.l.bf16 %v1739
        %v1976 = vunpack.c.l.bf16 %v1747
        %v1977 = vunpack.c.l.bf16 %v1755
        %v1978 = vunpack.c.l.bf16 %v1763
        %v1979 = vunpack.c.l.bf16 %v1771
        %v1980 = vunpack.c.l.bf16 %v1779
        %v1981 = vunpack.c.l.bf16 %v1787
        %v1982 = vunpack.c.l.bf16 %v1795
        %v1983 = vunpack.c.l.bf16 %v1803
        %v1984 = vunpack.c.l.bf16 %v1811
        %v1985 = vunpack.c.l.bf16 %v1819
        %v1986 = vunpack.c.l.bf16 %v1827
        %v1987 = vunpack.c.l.bf16 %v1835
        %v1988 = vunpack.c.l.bf16 %v1843
        %v1989 = vunpack.c.l.bf16 %v1851
        %v1990 = vunpack.c.l.bf16 %v1859
        %v1991 = vunpack.c.l.bf16 %v1867
        %v1992 = vunpack.c.l.bf16 %v1875
        %v1993 = vunpack.c.l.bf16 %v1883
        %v1994 = vunpack.c.l.bf16 %v1891
        %v1995 = vunpack.c.l.bf16 %v1899
        %v1996 = vunpack.c.l.bf16 %v1907
        %v1997 = vunpack.c.l.bf16 %v1915
        %v1998 = vunpack.c.l.bf16 %v1923
        %v1999 = vunpack.c.l.bf16 %v1931
        %v2000 = vunpack.c.l.bf16 %v1939
        %v2001 = vunpack.c.l.bf16 %v1947
        %v2002 = vunpack.c.l.bf16 %v1955
        %v2003 = vunpack.c.l.bf16 %v1963
        %v2004 = vunpack.c.l.bf16 %v1971
        %vm2037 = vcmask 1041408
        %v2038 = vrot.slane %v1973, 6
        %v2039 = vrot.slane %v1974, 6
        %v2040 = vsel %vm2037, %v2038, %v2039
        %v2041 = vrot.slane %v1975, 6
        %v2042 = vsel %vm2037, %v2039, %v2041
        %v2043 = vrot.slane %v1976, 6
        %v2044 = vsel %vm2037, %v2041, %v2043
        %v2045 = vrot.slane %v1977, 6
        %v2046 = vsel %vm2037, %v2043, %v2045
        %v2047 = vrot.slane %v1978, 6
        %v2048 = vsel %vm2037, %v2045, %v2047
        %v2049 = vrot.slane %v1979, 6
        %v2050 = vsel %vm2037, %v2047, %v2049
        %v2051 = vrot.slane %v1980, 6
        %v2052 = vsel %vm2037, %v2049, %v2051
        %v2053 = vrot.slane %v1981, 6
        %v2054 = vsel %vm2037, %v2051, %v2053
        %v2055 = vrot.slane %v1982, 6
        %v2056 = vsel %vm2037, %v2053, %v2055
        %v2057 = vrot.slane %v1983, 6
        %v2058 = vsel %vm2037, %v2055, %v2057
        %v2059 = vrot.slane %v1984, 6
        %v2060 = vsel %vm2037, %v2057, %v2059
        %v2061 = vrot.slane %v1985, 6
        %v2062 = vsel %vm2037, %v2059, %v2061
        %v2063 = vrot.slane %v1986, 6
        %v2064 = vsel %vm2037, %v2061, %v2063
        %v2065 = vrot.slane %v1987, 6
        %v2066 = vsel %vm2037, %v2063, %v2065
        %v2067 = vrot.slane %v1988, 6
        %v2068 = vsel %vm2037, %v2065, %v2067
        %v2069 = vrot.slane %v1989, 6
        %v2070 = vsel %vm2037, %v2067, %v2069
        %v2071 = vrot.slane %v1990, 6
        %v2072 = vsel %vm2037, %v2069, %v2071
        %v2073 = vrot.slane %v1991, 6
        %v2074 = vsel %vm2037, %v2071, %v2073
        %v2075 = vrot.slane %v1992, 6
        %v2076 = vsel %vm2037, %v2073, %v2075
        %v2077 = vrot.slane %v1993, 6
        %v2078 = vsel %vm2037, %v2075, %v2077
        %v2079 = vrot.slane %v1994, 6
        %v2080 = vsel %vm2037, %v2077, %v2079
        %v2081 = vrot.slane %v1995, 6
        %v2082 = vsel %vm2037, %v2079, %v2081
        %v2083 = vrot.slane %v1996, 6
        %v2084 = vsel %vm2037, %v2081, %v2083
        %v2085 = vrot.slane %v1997, 6
        %v2086 = vsel %vm2037, %v2083, %v2085
        %v2087 = vrot.slane %v1998, 6
        %v2088 = vsel %vm2037, %v2085, %v2087
        %v2089 = vrot.slane %v1999, 6
        %v2090 = vsel %vm2037, %v2087, %v2089
        %v2091 = vrot.slane %v2000, 6
        %v2092 = vsel %vm2037, %v2089, %v2091
        %v2093 = vrot.slane %v2001, 6
        %v2094 = vsel %vm2037, %v2091, %v2093
        %v2095 = vrot.slane %v2002, 6
        %v2096 = vsel %vm2037, %v2093, %v2095
        %v2097 = vrot.slane %v2003, 6
        %v2098 = vsel %vm2037, %v2095, %v2097
        %v2099 = vrot.slane %v2004, 6
        %v2100 = vsel %vm2037, %v2097, %v2099
        %v2134 = vmul.f32 %v1972, %v2038
        %v2135 = vmul.f32 %v1036, %v2040
        %v2136 = vmul.f32 %v1037, %v2042
        %v2137 = vmul.f32 %v1038, %v2044
        %v2138 = vmul.f32 %v1039, %v2046
        %v2139 = vmul.f32 %v1040, %v2048
        %v2140 = vmul.f32 %v1041, %v2050
        %v2141 = vmul.f32 %v1042, %v2052
        %v2142 = vmul.f32 %v1043, %v2054
        %v2143 = vmul.f32 %v1044, %v2056
        %v2144 = vmul.f32 %v1045, %v2058
        %v2145 = vmul.f32 %v1046, %v2060
        %v2146 = vmul.f32 %v1047, %v2062
        %v2147 = vmul.f32 %v1048, %v2064
        %v2148 = vmul.f32 %v1049, %v2066
        %v2149 = vmul.f32 %v1050, %v2068
        %v2150 = vmul.f32 %v1051, %v2070
        %v2151 = vmul.f32 %v1052, %v2072
        %v2152 = vmul.f32 %v1053, %v2074
        %v2153 = vmul.f32 %v1054, %v2076
        %v2154 = vmul.f32 %v1055, %v2078
        %v2155 = vmul.f32 %v1056, %v2080
        %v2156 = vmul.f32 %v1057, %v2082
        %v2157 = vmul.f32 %v1058, %v2084
        %v2158 = vmul.f32 %v1059, %v2086
        %v2159 = vmul.f32 %v1060, %v2088
        %v2160 = vmul.f32 %v1061, %v2090
        %v2161 = vmul.f32 %v1062, %v2092
        %v2162 = vmul.f32 %v1063, %v2094
        %v2163 = vmul.f32 %v1064, %v2096
        %v2164 = vmul.f32 %v1065, %v2098
        %v2165 = vmul.f32 %v1066, %v2100
        %v2166 = vmul.f32 %v1067, %v2099
        %v2167 = vpack.c.bf16 %v2135, %v2134
        %v2168 = vpack.c.bf16 %v2137, %v2136
        %v2169 = vpack.c.bf16 %v2139, %v2138
        %v2170 = vpack.c.bf16 %v2141, %v2140
        %v2171 = vpack.c.bf16 %v2143, %v2142
        %v2172 = vpack.c.bf16 %v2145, %v2144
        %v2173 = vpack.c.bf16 %v2147, %v2146
        %v2174 = vpack.c.bf16 %v2149, %v2148
        %v2175 = vpack.c.bf16 %v2151, %v2150
        %v2176 = vpack.c.bf16 %v2153, %v2152
        %v2177 = vpack.c.bf16 %v2155, %v2154
        %v2178 = vpack.c.bf16 %v2157, %v2156
        %v2179 = vpack.c.bf16 %v2159, %v2158
        %v2180 = vpack.c.bf16 %v2161, %v2160
        %v2181 = vpack.c.bf16 %v2163, %v2162
        %v2182 = vpack.c.bf16 %v2165, %v2164
        %v2183 = vpack.c.bf16 %v2166, %v2166
        %v2184 = vld [vmem:[%s2 + $0x20] sm:$0xf]
        %v2185 = vld [vmem:[%s2 + $0x24] sm:$0xf]
        %v2186 = vld [vmem:[%s2 + $0x28] sm:$0xf]
        %v2187 = vld [vmem:[%s2 + $0x2c] sm:$0xf]
        %vm2205 = vcmask 1046528
        %v2206 = vrot.slane %v2167, 1
        %v2207 = vrot.slane %v2168, 1
        %v2208 = vsel %vm2205, %v2206, %v2207
        %v2209 = vrot.slane %v2169, 1
        %v2210 = vsel %vm2205, %v2207, %v2209
        %v2211 = vrot.slane %v2170, 1
        %v2212 = vsel %vm2205, %v2209, %v2211
        %v2213 = vrot.slane %v2171, 1
        %v2214 = vsel %vm2205, %v2211, %v2213
        %v2215 = vrot.slane %v2172, 1
        %v2216 = vsel %vm2205, %v2213, %v2215
        %v2217 = vrot.slane %v2173, 1
        %v2218 = vsel %vm2205, %v2215, %v2217
        %v2219 = vrot.slane %v2174, 1
        %v2220 = vsel %vm2205, %v2217, %v2219
        %v2221 = vrot.slane %v2175, 1
        %v2222 = vsel %vm2205, %v2219, %v2221
        %v2223 = vrot.slane %v2176, 1
        %v2224 = vsel %vm2205, %v2221, %v2223
        %v2225 = vrot.slane %v2177, 1
        %v2226 = vsel %vm2205, %v2223, %v2225
        %v2227 = vrot.slane %v2178, 1
        %v2228 = vsel %vm2205, %v2225, %v2227
        %v2229 = vrot.slane %v2179, 1
        %v2230 = vsel %vm2205, %v2227, %v2229
        %v2231 = vrot.slane %v2180, 1
        %v2232 = vsel %vm2205, %v2229, %v2231
        %v2233 = vrot.slane %v2181, 1
        %v2234 = vsel %vm2205, %v2231, %v2233
        %v2235 = vrot.slane %v2182, 1
        %v2236 = vsel %vm2205, %v2233, %v2235
        %v2237 = vrot.slane %v2183, 1
        %v2238 = vsel %vm2205, %v2235, %v2237
        %v2243 = vunpack.c.l.b16 %v2184
        %v2244 = vunpack.c.l.b16 %v2185
        %v2245 = vunpack.c.l.b16 %v2186
        %v2246 = vunpack.c.l.b16 %v2187
        %v2247 = vpack.c.b16 %v2244, %v2243
        %v2248 = vpack.c.b16 %v2246, %v2245
        %v2252 = vsel %vm1428, %v2208, 0
        %v2255 = vsel %vm1428, %v2210, 0
        %v2258 = vsel %vm1428, %v2212, 0
        %v2261 = vsel %vm1428, %v2214, 0
        %v2264 = vsel %vm1428, %v2216, 0
        %v2267 = vsel %vm1428, %v2218, 0
        %v2270 = vsel %vm1428, %v2220, 0
        %v2273 = vsel %vm1428, %v2222, 0
        %v2276 = vsel %vm1428, %v2224, 0
        %v2279 = vsel %vm1428, %v2226, 0
        %v2282 = vsel %vm1428, %v2228, 0
        %v2285 = vsel %vm1428, %v2230, 0
        %v2288 = vsel %vm1428, %v2232, 0
        %v2291 = vsel %vm1428, %v2234, 0
        %v2294 = vsel %vm1428, %v2236, 0
        %v2297 = vsel %vm1428, %v2238, 0
        %2299 = vmatpush.bf16.msra.mxu0 0
        %2300 = vmatpush.bf16.msra.mxu0 0
        %2301 = vmatpush.bf16.msra.mxu0 0
        %2302 = vmatpush.bf16.msra.mxu0 0
        %2303 = vmatpush.bf16.msra.mxu0 0
        %2304 = vmatpush.bf16.msra.mxu0 0
        %2305 = vmatpush.bf16.msra.mxu0 %v2248
        %2306 = vmatpush.bf16.msra.mxu0 %v2247
        %2307 = vmatmul.bf16.gmra.mxu0 %v2252
        %v2308 = vpop.f32.mrf.mxu0
        %v2309 = vadd.f32 0.0, %v2308
        %v2310 = vpop.f32.mrf.mxu0
        %v2311 = vadd.f32 0.0, %v2310
        %2312 = vmatmul.bf16.gmra.mxu0 %v2255
        %v2313 = vpop.f32.mrf.mxu0
        %v2314 = vadd.f32 0.0, %v2313
        %v2315 = vpop.f32.mrf.mxu0
        %v2316 = vadd.f32 0.0, %v2315
        %2317 = vmatmul.bf16.gmra.mxu0 %v2258
        %v2318 = vpop.f32.mrf.mxu0
        %v2319 = vadd.f32 0.0, %v2318
        %v2320 = vpop.f32.mrf.mxu0
        %v2321 = vadd.f32 0.0, %v2320
        %2322 = vmatmul.bf16.gmra.mxu0 %v2261
        %v2323 = vpop.f32.mrf.mxu0
        %v2324 = vadd.f32 0.0, %v2323
        %v2325 = vpop.f32.mrf.mxu0
        %v2326 = vadd.f32 0.0, %v2325
        %2327 = vmatmul.bf16.gmra.mxu0 %v2264
        %v2328 = vpop.f32.mrf.mxu0
        %v2329 = vadd.f32 0.0, %v2328
        %v2330 = vpop.f32.mrf.mxu0
        %v2331 = vadd.f32 0.0, %v2330
        %2332 = vmatmul.bf16.gmra.mxu0 %v2267
        %v2333 = vpop.f32.mrf.mxu0
        %v2334 = vadd.f32 0.0, %v2333
        %v2335 = vpop.f32.mrf.mxu0
        %v2336 = vadd.f32 0.0, %v2335
        %2337 = vmatmul.bf16.gmra.mxu0 %v2270
        %v2338 = vpop.f32.mrf.mxu0
        %v2339 = vadd.f32 0.0, %v2338
        %v2340 = vpop.f32.mrf.mxu0
        %v2341 = vadd.f32 0.0, %v2340
        %2342 = vmatmul.bf16.gmra.mxu0 %v2273
        %v2343 = vpop.f32.mrf.mxu0
        %v2344 = vadd.f32 0.0, %v2343
        %v2345 = vpop.f32.mrf.mxu0
        %v2346 = vadd.f32 0.0, %v2345
        %2347 = vmatmul.bf16.gmra.mxu0 %v2276
        %v2348 = vpop.f32.mrf.mxu0
        %v2349 = vadd.f32 0.0, %v2348
        %v2350 = vpop.f32.mrf.mxu0
        %v2351 = vadd.f32 0.0, %v2350
        %2352 = vmatmul.bf16.gmra.mxu0 %v2279
        %v2353 = vpop.f32.mrf.mxu0
        %v2354 = vadd.f32 0.0, %v2353
        %v2355 = vpop.f32.mrf.mxu0
        %v2356 = vadd.f32 0.0, %v2355
        %2357 = vmatmul.bf16.gmra.mxu0 %v2282
        %v2358 = vpop.f32.mrf.mxu0
        %v2359 = vadd.f32 0.0, %v2358
        %v2360 = vpop.f32.mrf.mxu0
        %v2361 = vadd.f32 0.0, %v2360
        %2362 = vmatmul.bf16.gmra.mxu0 %v2285
        %v2363 = vpop.f32.mrf.mxu0
        %v2364 = vadd.f32 0.0, %v2363
        %v2365 = vpop.f32.mrf.mxu0
        %v2366 = vadd.f32 0.0, %v2365
        %2367 = vmatmul.bf16.gmra.mxu0 %v2288
        %v2368 = vpop.f32.mrf.mxu0
        %v2369 = vadd.f32 0.0, %v2368
        %v2370 = vpop.f32.mrf.mxu0
        %v2371 = vadd.f32 0.0, %v2370
        %2372 = vmatmul.bf16.gmra.mxu0 %v2291
        %v2373 = vpop.f32.mrf.mxu0
        %v2374 = vadd.f32 0.0, %v2373
        %v2375 = vpop.f32.mrf.mxu0
        %v2376 = vadd.f32 0.0, %v2375
        %2377 = vmatmul.bf16.gmra.mxu0 %v2294
        %v2378 = vpop.f32.mrf.mxu0
        %v2379 = vadd.f32 0.0, %v2378
        %v2380 = vpop.f32.mrf.mxu0
        %v2381 = vadd.f32 0.0, %v2380
        %2382 = vmatmul.bf16.gmra.mxu0 %v2297
        %v2383 = vpop.f32.mrf.mxu0
        %v2384 = vadd.f32 0.0, %v2383
        %v2385 = vpop.f32.mrf.mxu0
        %v2386 = vadd.f32 0.0, %v2385
        %2387 = vdwg.mxu0
        %v2388 = vadd.f32 %v1636, %v2309
        %v2389 = vadd.f32 %v1638, %v2311
        %v2390 = vadd.f32 %v1641, %v2314
        %v2391 = vadd.f32 %v1643, %v2316
        %v2392 = vadd.f32 %v1646, %v2319
        %v2393 = vadd.f32 %v1648, %v2321
        %v2394 = vadd.f32 %v1651, %v2324
        %v2395 = vadd.f32 %v1653, %v2326
        %v2396 = vadd.f32 %v1656, %v2329
        %v2397 = vadd.f32 %v1658, %v2331
        %v2398 = vadd.f32 %v1661, %v2334
        %v2399 = vadd.f32 %v1663, %v2336
        %v2400 = vadd.f32 %v1666, %v2339
        %v2401 = vadd.f32 %v1668, %v2341
        %v2402 = vadd.f32 %v1671, %v2344
        %v2403 = vadd.f32 %v1673, %v2346
        %v2404 = vadd.f32 %v1676, %v2349
        %v2405 = vadd.f32 %v1678, %v2351
        %v2406 = vadd.f32 %v1681, %v2354
        %v2407 = vadd.f32 %v1683, %v2356
        %v2408 = vadd.f32 %v1686, %v2359
        %v2409 = vadd.f32 %v1688, %v2361
        %v2410 = vadd.f32 %v1691, %v2364
        %v2411 = vadd.f32 %v1693, %v2366
        %v2412 = vadd.f32 %v1696, %v2369
        %v2413 = vadd.f32 %v1698, %v2371
        %v2414 = vadd.f32 %v1701, %v2374
        %v2415 = vadd.f32 %v1703, %v2376
        %v2416 = vadd.f32 %v1706, %v2379
        %v2417 = vadd.f32 %v1708, %v2381
        %v2418 = vadd.f32 %v1711, %v2384
        %v2419 = vadd.f32 %v1713, %v2386
        %v2420 = vld [vmem:[%s276 + $0x8] sm:$0xf]
        %v2421 = vld [vmem:[%s276 + $0xc] sm:$0xf]
        %v2422 = vld [vmem:[%s276 + $0x10] sm:$0xf]
        %v2423 = vld [vmem:[%s276 + $0x14] sm:$0xf]
        %v2424 = vld [vmem:[%s276 + $0x18] sm:$0xf]
        %v2425 = vld [vmem:[%s276 + $0x1c] sm:$0xf]
        %v2426 = vld [vmem:[%s276 + $0x20] sm:$0xf]
        %v2427 = vld [vmem:[%s276 + $0x24] sm:$0xf]
        %v2428 = vld [vmem:[%s276 + $0x28] sm:$0xf]
        %v2429 = vld [vmem:[%s276 + $0x2c] sm:$0xf]
        %v2430 = vld [vmem:[%s276 + $0x30] sm:$0xf]
        %v2431 = vld [vmem:[%s276 + $0x34] sm:$0xf]
        %v2432 = vld [vmem:[%s276 + $0x38] sm:$0xf]
        %v2433 = vld [vmem:[%s276 + $0x3c] sm:$0xf]
        %v2434 = vld [vmem:[%s276 + $0x40] sm:$0xf]
        %v2435 = vld [vmem:[%s276 + $0x44] sm:$0xf]
        %v2436 = vld [vmem:[%s276 + $0x48] sm:$0xf]
        %v2437 = vld [vmem:[%s276 + $0x4c] sm:$0xf]
        %v2438 = vld [vmem:[%s276 + $0x50] sm:$0xf]
        %v2439 = vld [vmem:[%s276 + $0x54] sm:$0xf]
        %v2440 = vld [vmem:[%s276 + $0x58] sm:$0xf]
        %v2441 = vld [vmem:[%s276 + $0x5c] sm:$0xf]
        %v2442 = vld [vmem:[%s276 + $0x60] sm:$0xf]
        %v2443 = vld [vmem:[%s276 + $0x64] sm:$0xf]
        %v2444 = vld [vmem:[%s276 + $0x68] sm:$0xf]
        %v2445 = vld [vmem:[%s276 + $0x6c] sm:$0xf]
        %v2446 = vld [vmem:[%s276 + $0x70] sm:$0xf]
        %v2447 = vld [vmem:[%s276 + $0x74] sm:$0xf]
        %v2448 = vld [vmem:[%s276 + $0x78] sm:$0xf]
        %v2449 = vld [vmem:[%s276 + $0x7c] sm:$0xf]
        %v2450 = vld [vmem:[%s276 + $0x80] sm:$0xf]
        %v2451 = vld [vmem:[%s276 + $0x84] sm:$0xf]
        %2452 = vset.pattern.permute.xlu0 3
        %2453 = vperm.xlu0 %2452, %v310
        %v2454 = vpop.permute.xlu0 %2453
        %v2457 = vunpack.c.l.s4 839922192
        %v2458 = vunpack.c.0.s8 %v2457
        %v2459 = vperm.slane %v2454, %v2458
        %2460 = vset.pattern.permute.xlu0 3
        %2461 = vperm.xlu0 %2460, %v311
        %v2462 = vpop.permute.xlu0 %2461
        %v2465 = vunpack.c.l.s4 839922192
        %v2466 = vunpack.c.0.s8 %v2465
        %v2467 = vperm.slane %v2462, %v2466
        %2468 = vset.pattern.permute.xlu0 3
        %2469 = vperm.xlu0 %2468, %v312
        %v2470 = vpop.permute.xlu0 %2469
        %v2473 = vunpack.c.l.s4 839922192
        %v2474 = vunpack.c.0.s8 %v2473
        %v2475 = vperm.slane %v2470, %v2474
        %2476 = vset.pattern.permute.xlu0 3
        %2477 = vperm.xlu0 %2476, %v313
        %v2478 = vpop.permute.xlu0 %2477
        %v2481 = vunpack.c.l.s4 839922192
        %v2482 = vunpack.c.0.s8 %v2481
        %v2483 = vperm.slane %v2478, %v2482
        %2484 = vset.pattern.permute.xlu0 3
        %2485 = vperm.xlu0 %2484, %v314
        %v2486 = vpop.permute.xlu0 %2485
        %v2489 = vunpack.c.l.s4 839922192
        %v2490 = vunpack.c.0.s8 %v2489
        %v2491 = vperm.slane %v2486, %v2490
        %2492 = vset.pattern.permute.xlu0 3
        %2493 = vperm.xlu0 %2492, %v315
        %v2494 = vpop.permute.xlu0 %2493
        %v2497 = vunpack.c.l.s4 839922192
        %v2498 = vunpack.c.0.s8 %v2497
        %v2499 = vperm.slane %v2494, %v2498
        %2500 = vset.pattern.permute.xlu0 3
        %2501 = vperm.xlu0 %2500, %v316
        %v2502 = vpop.permute.xlu0 %2501
        %v2505 = vunpack.c.l.s4 839922192
        %v2506 = vunpack.c.0.s8 %v2505
        %v2507 = vperm.slane %v2502, %v2506
        %2508 = vset.pattern.permute.xlu0 3
        %2509 = vperm.xlu0 %2508, %v317
        %v2510 = vpop.permute.xlu0 %2509
        %v2513 = vunpack.c.l.s4 839922192
        %v2514 = vunpack.c.0.s8 %v2513
        %v2515 = vperm.slane %v2510, %v2514
        %2516 = vset.pattern.permute.xlu0 3
        %2517 = vperm.xlu0 %2516, %v318
        %v2518 = vpop.permute.xlu0 %2517
        %v2521 = vunpack.c.l.s4 839922192
        %v2522 = vunpack.c.0.s8 %v2521
        %v2523 = vperm.slane %v2518, %v2522
        %2524 = vset.pattern.permute.xlu0 3
        %2525 = vperm.xlu0 %2524, %v319
        %v2526 = vpop.permute.xlu0 %2525
        %v2529 = vunpack.c.l.s4 839922192
        %v2530 = vunpack.c.0.s8 %v2529
        %v2531 = vperm.slane %v2526, %v2530
        %2532 = vset.pattern.permute.xlu0 3
        %2533 = vperm.xlu0 %2532, %v320
        %v2534 = vpop.permute.xlu0 %2533
        %v2537 = vunpack.c.l.s4 839922192
        %v2538 = vunpack.c.0.s8 %v2537
        %v2539 = vperm.slane %v2534, %v2538
        %2540 = vset.pattern.permute.xlu0 3
        %2541 = vperm.xlu0 %2540, %v321
        %v2542 = vpop.permute.xlu0 %2541
        %v2545 = vunpack.c.l.s4 839922192
        %v2546 = vunpack.c.0.s8 %v2545
        %v2547 = vperm.slane %v2542, %v2546
        %2548 = vset.pattern.permute.xlu0 3
        %2549 = vperm.xlu0 %2548, %v322
        %v2550 = vpop.permute.xlu0 %2549
        %v2553 = vunpack.c.l.s4 839922192
        %v2554 = vunpack.c.0.s8 %v2553
        %v2555 = vperm.slane %v2550, %v2554
        %2556 = vset.pattern.permute.xlu0 3
        %2557 = vperm.xlu0 %2556, %v323
        %v2558 = vpop.permute.xlu0 %2557
        %v2561 = vunpack.c.l.s4 839922192
        %v2562 = vunpack.c.0.s8 %v2561
        %v2563 = vperm.slane %v2558, %v2562
        %2564 = vset.pattern.permute.xlu0 3
        %2565 = vperm.xlu0 %2564, %v324
        %v2566 = vpop.permute.xlu0 %2565
        %v2569 = vunpack.c.l.s4 839922192
        %v2570 = vunpack.c.0.s8 %v2569
        %v2571 = vperm.slane %v2566, %v2570
        %2572 = vset.pattern.permute.xlu0 3
        %2573 = vperm.xlu0 %2572, %v325
        %v2574 = vpop.permute.xlu0 %2573
        %v2577 = vunpack.c.l.s4 839922192
        %v2578 = vunpack.c.0.s8 %v2577
        %v2579 = vperm.slane %v2574, %v2578
        %2580 = vset.pattern.permute.xlu0 3
        %2581 = vperm.xlu0 %2580, %v326
        %v2582 = vpop.permute.xlu0 %2581
        %v2585 = vunpack.c.l.s4 839922192
        %v2586 = vunpack.c.0.s8 %v2585
        %v2587 = vperm.slane %v2582, %v2586
        %2588 = vset.pattern.permute.xlu0 3
        %2589 = vperm.xlu0 %2588, %v327
        %v2590 = vpop.permute.xlu0 %2589
        %v2593 = vunpack.c.l.s4 839922192
        %v2594 = vunpack.c.0.s8 %v2593
        %v2595 = vperm.slane %v2590, %v2594
        %2596 = vset.pattern.permute.xlu0 3
        %2597 = vperm.xlu0 %2596, %v328
        %v2598 = vpop.permute.xlu0 %2597
        %v2601 = vunpack.c.l.s4 839922192
        %v2602 = vunpack.c.0.s8 %v2601
        %v2603 = vperm.slane %v2598, %v2602
        %2604 = vset.pattern.permute.xlu0 3
        %2605 = vperm.xlu0 %2604, %v329
        %v2606 = vpop.permute.xlu0 %2605
        %v2609 = vunpack.c.l.s4 839922192
        %v2610 = vunpack.c.0.s8 %v2609
        %v2611 = vperm.slane %v2606, %v2610
        %2612 = vset.pattern.permute.xlu0 3
        %2613 = vperm.xlu0 %2612, %v330
        %v2614 = vpop.permute.xlu0 %2613
        %v2617 = vunpack.c.l.s4 839922192
        %v2618 = vunpack.c.0.s8 %v2617
        %v2619 = vperm.slane %v2614, %v2618
        %2620 = vset.pattern.permute.xlu0 3
        %2621 = vperm.xlu0 %2620, %v331
        %v2622 = vpop.permute.xlu0 %2621
        %v2625 = vunpack.c.l.s4 839922192
        %v2626 = vunpack.c.0.s8 %v2625
        %v2627 = vperm.slane %v2622, %v2626
        %2628 = vset.pattern.permute.xlu0 3
        %2629 = vperm.xlu0 %2628, %v332
        %v2630 = vpop.permute.xlu0 %2629
        %v2633 = vunpack.c.l.s4 839922192
        %v2634 = vunpack.c.0.s8 %v2633
        %v2635 = vperm.slane %v2630, %v2634
        %2636 = vset.pattern.permute.xlu0 3
        %2637 = vperm.xlu0 %2636, %v333
        %v2638 = vpop.permute.xlu0 %2637
        %v2641 = vunpack.c.l.s4 839922192
        %v2642 = vunpack.c.0.s8 %v2641
        %v2643 = vperm.slane %v2638, %v2642
        %2644 = vset.pattern.permute.xlu0 3
        %2645 = vperm.xlu0 %2644, %v334
        %v2646 = vpop.permute.xlu0 %2645
        %v2649 = vunpack.c.l.s4 839922192
        %v2650 = vunpack.c.0.s8 %v2649
        %v2651 = vperm.slane %v2646, %v2650
        %2652 = vset.pattern.permute.xlu0 3
        %2653 = vperm.xlu0 %2652, %v335
        %v2654 = vpop.permute.xlu0 %2653
        %v2657 = vunpack.c.l.s4 839922192
        %v2658 = vunpack.c.0.s8 %v2657
        %v2659 = vperm.slane %v2654, %v2658
        %2660 = vset.pattern.permute.xlu0 3
        %2661 = vperm.xlu0 %2660, %v336
        %v2662 = vpop.permute.xlu0 %2661
        %v2665 = vunpack.c.l.s4 839922192
        %v2666 = vunpack.c.0.s8 %v2665
        %v2667 = vperm.slane %v2662, %v2666
        %2668 = vset.pattern.permute.xlu0 3
        %2669 = vperm.xlu0 %2668, %v337
        %v2670 = vpop.permute.xlu0 %2669
        %v2673 = vunpack.c.l.s4 839922192
        %v2674 = vunpack.c.0.s8 %v2673
        %v2675 = vperm.slane %v2670, %v2674
        %2676 = vset.pattern.permute.xlu0 3
        %2677 = vperm.xlu0 %2676, %v338
        %v2678 = vpop.permute.xlu0 %2677
        %v2681 = vunpack.c.l.s4 839922192
        %v2682 = vunpack.c.0.s8 %v2681
        %v2683 = vperm.slane %v2678, %v2682
        %2684 = vset.pattern.permute.xlu0 3
        %2685 = vperm.xlu0 %2684, %v339
        %v2686 = vpop.permute.xlu0 %2685
        %v2689 = vunpack.c.l.s4 839922192
        %v2690 = vunpack.c.0.s8 %v2689
        %v2691 = vperm.slane %v2686, %v2690
        %2692 = vset.pattern.permute.xlu0 3
        %2693 = vperm.xlu0 %2692, %v340
        %v2694 = vpop.permute.xlu0 %2693
        %v2697 = vunpack.c.l.s4 839922192
        %v2698 = vunpack.c.0.s8 %v2697
        %v2699 = vperm.slane %v2694, %v2698
        %2700 = vset.pattern.permute.xlu0 3
        %2701 = vperm.xlu0 %2700, %v341
        %v2702 = vpop.permute.xlu0 %2701
        %v2705 = vunpack.c.l.s4 839922192
        %v2706 = vunpack.c.0.s8 %v2705
        %v2707 = vperm.slane %v2702, %v2706
        %v2708 = vunpack.c.l.bf16 %v2420
        %v2709 = vunpack.c.l.bf16 %v2421
        %v2710 = vunpack.c.l.bf16 %v2422
        %v2711 = vunpack.c.l.bf16 %v2423
        %v2712 = vunpack.c.l.bf16 %v2424
        %v2713 = vunpack.c.l.bf16 %v2425
        %v2714 = vunpack.c.l.bf16 %v2426
        %v2715 = vunpack.c.l.bf16 %v2427
        %v2716 = vunpack.c.l.bf16 %v2428
        %v2717 = vunpack.c.l.bf16 %v2429
        %v2718 = vunpack.c.l.bf16 %v2430
        %v2719 = vunpack.c.l.bf16 %v2431
        %v2720 = vunpack.c.l.bf16 %v2432
        %v2721 = vunpack.c.l.bf16 %v2433
        %v2722 = vunpack.c.l.bf16 %v2434
        %v2723 = vunpack.c.l.bf16 %v2435
        %v2724 = vunpack.c.l.bf16 %v2436
        %v2725 = vunpack.c.l.bf16 %v2437
        %v2726 = vunpack.c.l.bf16 %v2438
        %v2727 = vunpack.c.l.bf16 %v2439
        %v2728 = vunpack.c.l.bf16 %v2440
        %v2729 = vunpack.c.l.bf16 %v2441
        %v2730 = vunpack.c.l.bf16 %v2442
        %v2731 = vunpack.c.l.bf16 %v2443
        %v2732 = vunpack.c.l.bf16 %v2444
        %v2733 = vunpack.c.l.bf16 %v2445
        %v2734 = vunpack.c.l.bf16 %v2446
        %v2735 = vunpack.c.l.bf16 %v2447
        %v2736 = vunpack.c.l.bf16 %v2448
        %v2737 = vunpack.c.l.bf16 %v2449
        %v2738 = vunpack.c.l.bf16 %v2450
        %v2739 = vunpack.c.l.bf16 %v2451
        %v2740 = vunpack.c.l.bf16 %v2459
        %v2741 = vunpack.c.l.bf16 %v2467
        %v2742 = vunpack.c.l.bf16 %v2475
        %v2743 = vunpack.c.l.bf16 %v2483
        %v2744 = vunpack.c.l.bf16 %v2491
        %v2745 = vunpack.c.l.bf16 %v2499
        %v2746 = vunpack.c.l.bf16 %v2507
        %v2747 = vunpack.c.l.bf16 %v2515
        %v2748 = vunpack.c.l.bf16 %v2523
        %v2749 = vunpack.c.l.bf16 %v2531
        %v2750 = vunpack.c.l.bf16 %v2539
        %v2751 = vunpack.c.l.bf16 %v2547
        %v2752 = vunpack.c.l.bf16 %v2555
        %v2753 = vunpack.c.l.bf16 %v2563
        %v2754 = vunpack.c.l.bf16 %v2571
        %v2755 = vunpack.c.l.bf16 %v2579
        %v2756 = vunpack.c.l.bf16 %v2587
        %v2757 = vunpack.c.l.bf16 %v2595
        %v2758 = vunpack.c.l.bf16 %v2603
        %v2759 = vunpack.c.l.bf16 %v2611
        %v2760 = vunpack.c.l.bf16 %v2619
        %v2761 = vunpack.c.l.bf16 %v2627
        %v2762 = vunpack.c.l.bf16 %v2635
        %v2763 = vunpack.c.l.bf16 %v2643
        %v2764 = vunpack.c.l.bf16 %v2651
        %v2765 = vunpack.c.l.bf16 %v2659
        %v2766 = vunpack.c.l.bf16 %v2667
        %v2767 = vunpack.c.l.bf16 %v2675
        %v2768 = vunpack.c.l.bf16 %v2683
        %v2769 = vunpack.c.l.bf16 %v2691
        %v2770 = vunpack.c.l.bf16 %v2699
        %v2771 = vunpack.c.l.bf16 %v2707
        %v2772 = vmul.f32 %v2708, %v2740
        %v2773 = vmul.f32 %v2709, %v2741
        %v2774 = vmul.f32 %v2710, %v2742
        %v2775 = vmul.f32 %v2711, %v2743
        %v2776 = vmul.f32 %v2712, %v2744
        %v2777 = vmul.f32 %v2713, %v2745
        %v2778 = vmul.f32 %v2714, %v2746
        %v2779 = vmul.f32 %v2715, %v2747
        %v2780 = vmul.f32 %v2716, %v2748
        %v2781 = vmul.f32 %v2717, %v2749
        %v2782 = vmul.f32 %v2718, %v2750
        %v2783 = vmul.f32 %v2719, %v2751
        %v2784 = vmul.f32 %v2720, %v2752
        %v2785 = vmul.f32 %v2721, %v2753
        %v2786 = vmul.f32 %v2722, %v2754
        %v2787 = vmul.f32 %v2723, %v2755
        %v2788 = vmul.f32 %v2724, %v2756
        %v2789 = vmul.f32 %v2725, %v2757
        %v2790 = vmul.f32 %v2726, %v2758
        %v2791 = vmul.f32 %v2727, %v2759
        %v2792 = vmul.f32 %v2728, %v2760
        %v2793 = vmul.f32 %v2729, %v2761
        %v2794 = vmul.f32 %v2730, %v2762
        %v2795 = vmul.f32 %v2731, %v2763
        %v2796 = vmul.f32 %v2732, %v2764
        %v2797 = vmul.f32 %v2733, %v2765
        %v2798 = vmul.f32 %v2734, %v2766
        %v2799 = vmul.f32 %v2735, %v2767
        %v2800 = vmul.f32 %v2736, %v2768
        %v2801 = vmul.f32 %v2737, %v2769
        %v2802 = vmul.f32 %v2738, %v2770
        %v2803 = vmul.f32 %v2739, %v2771
        %v2804 = vpack.c.bf16 %v2773, %v2772
        %v2805 = vpack.c.bf16 %v2775, %v2774
        %v2806 = vpack.c.bf16 %v2777, %v2776
        %v2807 = vpack.c.bf16 %v2779, %v2778
        %v2808 = vpack.c.bf16 %v2781, %v2780
        %v2809 = vpack.c.bf16 %v2783, %v2782
        %v2810 = vpack.c.bf16 %v2785, %v2784
        %v2811 = vpack.c.bf16 %v2787, %v2786
        %v2812 = vpack.c.bf16 %v2789, %v2788
        %v2813 = vpack.c.bf16 %v2791, %v2790
        %v2814 = vpack.c.bf16 %v2793, %v2792
        %v2815 = vpack.c.bf16 %v2795, %v2794
        %v2816 = vpack.c.bf16 %v2797, %v2796
        %v2817 = vpack.c.bf16 %v2799, %v2798
        %v2818 = vpack.c.bf16 %v2801, %v2800
        %v2819 = vpack.c.bf16 %v2803, %v2802
        %v2820 = vld [vmem:[%s2 + $0x30] sm:$0xf]
        %v2821 = vld [vmem:[%s2 + $0x34] sm:$0xf]
        %v2822 = vld [vmem:[%s2 + $0x38] sm:$0xf]
        %v2823 = vld [vmem:[%s2 + $0x3c] sm:$0xf]
        %v2828 = vunpack.c.l.b16 %v2820
        %v2829 = vunpack.c.l.b16 %v2821
        %v2830 = vunpack.c.l.b16 %v2822
        %v2831 = vunpack.c.l.b16 %v2823
        %v2832 = vpack.c.b16 %v2829, %v2828
        %v2833 = vpack.c.b16 %v2831, %v2830
        %v2837 = vsel %vm1428, %v2804, 0
        %v2840 = vsel %vm1428, %v2805, 0
        %v2843 = vsel %vm1428, %v2806, 0
        %v2846 = vsel %vm1428, %v2807, 0
        %v2849 = vsel %vm1428, %v2808, 0
        %v2852 = vsel %vm1428, %v2809, 0
        %v2855 = vsel %vm1428, %v2810, 0
        %v2858 = vsel %vm1428, %v2811, 0
        %v2861 = vsel %vm1428, %v2812, 0
        %v2864 = vsel %vm1428, %v2813, 0
        %v2867 = vsel %vm1428, %v2814, 0
        %v2870 = vsel %vm1428, %v2815, 0
        %v2873 = vsel %vm1428, %v2816, 0
        %v2876 = vsel %vm1428, %v2817, 0
        %v2879 = vsel %vm1428, %v2818, 0
        %v2882 = vsel %vm1428, %v2819, 0
        %2884 = vmatpush.bf16.msra.mxu0 0
        %2885 = vmatpush.bf16.msra.mxu0 0
        %2886 = vmatpush.bf16.msra.mxu0 0
        %2887 = vmatpush.bf16.msra.mxu0 0
        %2888 = vmatpush.bf16.msra.mxu0 0
        %2889 = vmatpush.bf16.msra.mxu0 0
        %2890 = vmatpush.bf16.msra.mxu0 %v2833
        %2891 = vmatpush.bf16.msra.mxu0 %v2832
        %2892 = vmatmul.bf16.gmra.mxu0 %v2837
        %v2893 = vpop.f32.mrf.mxu0
        %v2894 = vadd.f32 0.0, %v2893
        %v2895 = vpop.f32.mrf.mxu0
        %v2896 = vadd.f32 0.0, %v2895
        %2897 = vmatmul.bf16.gmra.mxu0 %v2840
        %v2898 = vpop.f32.mrf.mxu0
        %v2899 = vadd.f32 0.0, %v2898
        %v2900 = vpop.f32.mrf.mxu0
        %v2901 = vadd.f32 0.0, %v2900
        %2902 = vmatmul.bf16.gmra.mxu0 %v2843
        %v2903 = vpop.f32.mrf.mxu0
        %v2904 = vadd.f32 0.0, %v2903
        %v2905 = vpop.f32.mrf.mxu0
        %v2906 = vadd.f32 0.0, %v2905
        %2907 = vmatmul.bf16.gmra.mxu0 %v2846
        %v2908 = vpop.f32.mrf.mxu0
        %v2909 = vadd.f32 0.0, %v2908
        %v2910 = vpop.f32.mrf.mxu0
        %v2911 = vadd.f32 0.0, %v2910
        %2912 = vmatmul.bf16.gmra.mxu0 %v2849
        %v2913 = vpop.f32.mrf.mxu0
        %v2914 = vadd.f32 0.0, %v2913
        %v2915 = vpop.f32.mrf.mxu0
        %v2916 = vadd.f32 0.0, %v2915
        %2917 = vmatmul.bf16.gmra.mxu0 %v2852
        %v2918 = vpop.f32.mrf.mxu0
        %v2919 = vadd.f32 0.0, %v2918
        %v2920 = vpop.f32.mrf.mxu0
        %v2921 = vadd.f32 0.0, %v2920
        %2922 = vmatmul.bf16.gmra.mxu0 %v2855
        %v2923 = vpop.f32.mrf.mxu0
        %v2924 = vadd.f32 0.0, %v2923
        %v2925 = vpop.f32.mrf.mxu0
        %v2926 = vadd.f32 0.0, %v2925
        %2927 = vmatmul.bf16.gmra.mxu0 %v2858
        %v2928 = vpop.f32.mrf.mxu0
        %v2929 = vadd.f32 0.0, %v2928
        %v2930 = vpop.f32.mrf.mxu0
        %v2931 = vadd.f32 0.0, %v2930
        %2932 = vmatmul.bf16.gmra.mxu0 %v2861
        %v2933 = vpop.f32.mrf.mxu0
        %v2934 = vadd.f32 0.0, %v2933
        %v2935 = vpop.f32.mrf.mxu0
        %v2936 = vadd.f32 0.0, %v2935
        %2937 = vmatmul.bf16.gmra.mxu0 %v2864
        %v2938 = vpop.f32.mrf.mxu0
        %v2939 = vadd.f32 0.0, %v2938
        %v2940 = vpop.f32.mrf.mxu0
        %v2941 = vadd.f32 0.0, %v2940
        %2942 = vmatmul.bf16.gmra.mxu0 %v2867
        %v2943 = vpop.f32.mrf.mxu0
        %v2944 = vadd.f32 0.0, %v2943
        %v2945 = vpop.f32.mrf.mxu0
        %v2946 = vadd.f32 0.0, %v2945
        %2947 = vmatmul.bf16.gmra.mxu0 %v2870
        %v2948 = vpop.f32.mrf.mxu0
        %v2949 = vadd.f32 0.0, %v2948
        %v2950 = vpop.f32.mrf.mxu0
        %v2951 = vadd.f32 0.0, %v2950
        %2952 = vmatmul.bf16.gmra.mxu0 %v2873
        %v2953 = vpop.f32.mrf.mxu0
        %v2954 = vadd.f32 0.0, %v2953
        %v2955 = vpop.f32.mrf.mxu0
        %v2956 = vadd.f32 0.0, %v2955
        %2957 = vmatmul.bf16.gmra.mxu0 %v2876
        %v2958 = vpop.f32.mrf.mxu0
        %v2959 = vadd.f32 0.0, %v2958
        %v2960 = vpop.f32.mrf.mxu0
        %v2961 = vadd.f32 0.0, %v2960
        %2962 = vmatmul.bf16.gmra.mxu0 %v2879
        %v2963 = vpop.f32.mrf.mxu0
        %v2964 = vadd.f32 0.0, %v2963
        %v2965 = vpop.f32.mrf.mxu0
        %v2966 = vadd.f32 0.0, %v2965
        %2967 = vmatmul.bf16.gmra.mxu0 %v2882
        %v2968 = vpop.f32.mrf.mxu0
        %v2969 = vadd.f32 0.0, %v2968
        %v2970 = vpop.f32.mrf.mxu0
        %v2971 = vadd.f32 0.0, %v2970
        %2972 = vdwg.mxu0
        %v2973 = vadd.f32 %v2388, %v2894
        %v2974 = vadd.f32 %v2389, %v2896
        %v2975 = vadd.f32 %v2390, %v2899
        %v2976 = vadd.f32 %v2391, %v2901
        %v2977 = vadd.f32 %v2392, %v2904
        %v2978 = vadd.f32 %v2393, %v2906
        %v2979 = vadd.f32 %v2394, %v2909
        %v2980 = vadd.f32 %v2395, %v2911
        %v2981 = vadd.f32 %v2396, %v2914
        %v2982 = vadd.f32 %v2397, %v2916
        %v2983 = vadd.f32 %v2398, %v2919
        %v2984 = vadd.f32 %v2399, %v2921
        %v2985 = vadd.f32 %v2400, %v2924
        %v2986 = vadd.f32 %v2401, %v2926
        %v2987 = vadd.f32 %v2402, %v2929
        %v2988 = vadd.f32 %v2403, %v2931
        %v2989 = vadd.f32 %v2404, %v2934
        %v2990 = vadd.f32 %v2405, %v2936
        %v2991 = vadd.f32 %v2406, %v2939
        %v2992 = vadd.f32 %v2407, %v2941
        %v2993 = vadd.f32 %v2408, %v2944
        %v2994 = vadd.f32 %v2409, %v2946
        %v2995 = vadd.f32 %v2410, %v2949
        %v2996 = vadd.f32 %v2411, %v2951
        %v2997 = vadd.f32 %v2412, %v2954
        %v2998 = vadd.f32 %v2413, %v2956
        %v2999 = vadd.f32 %v2414, %v2959
        %v3000 = vadd.f32 %v2415, %v2961
        %v3001 = vadd.f32 %v2416, %v2964
        %v3002 = vadd.f32 %v2417, %v2966
        %v3003 = vadd.f32 %v2418, %v2969
        %v3004 = vadd.f32 %v2419, %v2971
        %v3005 = vld [vmem:[%s276 + $0x8] sm:$0xf]
        %v3006 = vld [vmem:[%s276 + $0xc] sm:$0xf]
        %v3007 = vld [vmem:[%s276 + $0x10] sm:$0xf]
        %v3008 = vld [vmem:[%s276 + $0x14] sm:$0xf]
        %v3009 = vld [vmem:[%s276 + $0x18] sm:$0xf]
        %v3010 = vld [vmem:[%s276 + $0x1c] sm:$0xf]
        %v3011 = vld [vmem:[%s276 + $0x20] sm:$0xf]
        %v3012 = vld [vmem:[%s276 + $0x24] sm:$0xf]
        %v3013 = vld [vmem:[%s276 + $0x28] sm:$0xf]
        %v3014 = vld [vmem:[%s276 + $0x2c] sm:$0xf]
        %v3015 = vld [vmem:[%s276 + $0x30] sm:$0xf]
        %v3016 = vld [vmem:[%s276 + $0x34] sm:$0xf]
        %v3017 = vld [vmem:[%s276 + $0x38] sm:$0xf]
        %v3018 = vld [vmem:[%s276 + $0x3c] sm:$0xf]
        %v3019 = vld [vmem:[%s276 + $0x40] sm:$0xf]
        %v3020 = vld [vmem:[%s276 + $0x44] sm:$0xf]
        %v3021 = vld [vmem:[%s276 + $0x48] sm:$0xf]
        %v3022 = vld [vmem:[%s276 + $0x4c] sm:$0xf]
        %v3023 = vld [vmem:[%s276 + $0x50] sm:$0xf]
        %v3024 = vld [vmem:[%s276 + $0x54] sm:$0xf]
        %v3025 = vld [vmem:[%s276 + $0x58] sm:$0xf]
        %v3026 = vld [vmem:[%s276 + $0x5c] sm:$0xf]
        %v3027 = vld [vmem:[%s276 + $0x60] sm:$0xf]
        %v3028 = vld [vmem:[%s276 + $0x64] sm:$0xf]
        %v3029 = vld [vmem:[%s276 + $0x68] sm:$0xf]
        %v3030 = vld [vmem:[%s276 + $0x6c] sm:$0xf]
        %v3031 = vld [vmem:[%s276 + $0x70] sm:$0xf]
        %v3032 = vld [vmem:[%s276 + $0x74] sm:$0xf]
        %v3033 = vld [vmem:[%s276 + $0x78] sm:$0xf]
        %v3034 = vld [vmem:[%s276 + $0x7c] sm:$0xf]
        %v3035 = vld [vmem:[%s276 + $0x80] sm:$0xf]
        %v3036 = vld [vmem:[%s276 + $0x84] sm:$0xf]
        %v3037 = vld [vmem:[%s276 + $0x88] sm:$0x1]
        %3038 = vset.pattern.permute.xlu0 4
        %3039 = vperm.xlu0 %3038, %v310
        %v3040 = vpop.permute.xlu0 %3039
        %v3043 = vunpack.c.l.s4 839922192
        %v3044 = vunpack.c.0.s8 %v3043
        %v3045 = vperm.slane %v3040, %v3044
        %3046 = vset.pattern.permute.xlu0 4
        %3047 = vperm.xlu0 %3046, %v311
        %v3048 = vpop.permute.xlu0 %3047
        %v3051 = vunpack.c.l.s4 839922192
        %v3052 = vunpack.c.0.s8 %v3051
        %v3053 = vperm.slane %v3048, %v3052
        %3054 = vset.pattern.permute.xlu0 4
        %3055 = vperm.xlu0 %3054, %v312
        %v3056 = vpop.permute.xlu0 %3055
        %v3059 = vunpack.c.l.s4 839922192
        %v3060 = vunpack.c.0.s8 %v3059
        %v3061 = vperm.slane %v3056, %v3060
        %3062 = vset.pattern.permute.xlu0 4
        %3063 = vperm.xlu0 %3062, %v313
        %v3064 = vpop.permute.xlu0 %3063
        %v3067 = vunpack.c.l.s4 839922192
        %v3068 = vunpack.c.0.s8 %v3067
        %v3069 = vperm.slane %v3064, %v3068
        %3070 = vset.pattern.permute.xlu0 4
        %3071 = vperm.xlu0 %3070, %v314
        %v3072 = vpop.permute.xlu0 %3071
        %v3075 = vunpack.c.l.s4 839922192
        %v3076 = vunpack.c.0.s8 %v3075
        %v3077 = vperm.slane %v3072, %v3076
        %3078 = vset.pattern.permute.xlu0 4
        %3079 = vperm.xlu0 %3078, %v315
        %v3080 = vpop.permute.xlu0 %3079
        %v3083 = vunpack.c.l.s4 839922192
        %v3084 = vunpack.c.0.s8 %v3083
        %v3085 = vperm.slane %v3080, %v3084
        %3086 = vset.pattern.permute.xlu0 4
        %3087 = vperm.xlu0 %3086, %v316
        %v3088 = vpop.permute.xlu0 %3087
        %v3091 = vunpack.c.l.s4 839922192
        %v3092 = vunpack.c.0.s8 %v3091
        %v3093 = vperm.slane %v3088, %v3092
        %3094 = vset.pattern.permute.xlu0 4
        %3095 = vperm.xlu0 %3094, %v317
        %v3096 = vpop.permute.xlu0 %3095
        %v3099 = vunpack.c.l.s4 839922192
        %v3100 = vunpack.c.0.s8 %v3099
        %v3101 = vperm.slane %v3096, %v3100
        %3102 = vset.pattern.permute.xlu0 4
        %3103 = vperm.xlu0 %3102, %v318
        %v3104 = vpop.permute.xlu0 %3103
        %v3107 = vunpack.c.l.s4 839922192
        %v3108 = vunpack.c.0.s8 %v3107
        %v3109 = vperm.slane %v3104, %v3108
        %3110 = vset.pattern.permute.xlu0 4
        %3111 = vperm.xlu0 %3110, %v319
        %v3112 = vpop.permute.xlu0 %3111
        %v3115 = vunpack.c.l.s4 839922192
        %v3116 = vunpack.c.0.s8 %v3115
        %v3117 = vperm.slane %v3112, %v3116
        %3118 = vset.pattern.permute.xlu0 4
        %3119 = vperm.xlu0 %3118, %v320
        %v3120 = vpop.permute.xlu0 %3119
        %v3123 = vunpack.c.l.s4 839922192
        %v3124 = vunpack.c.0.s8 %v3123
        %v3125 = vperm.slane %v3120, %v3124
        %3126 = vset.pattern.permute.xlu0 4
        %3127 = vperm.xlu0 %3126, %v321
        %v3128 = vpop.permute.xlu0 %3127
        %v3131 = vunpack.c.l.s4 839922192
        %v3132 = vunpack.c.0.s8 %v3131
        %v3133 = vperm.slane %v3128, %v3132
        %3134 = vset.pattern.permute.xlu0 4
        %3135 = vperm.xlu0 %3134, %v322
        %v3136 = vpop.permute.xlu0 %3135
        %v3139 = vunpack.c.l.s4 839922192
        %v3140 = vunpack.c.0.s8 %v3139
        %v3141 = vperm.slane %v3136, %v3140
        %3142 = vset.pattern.permute.xlu0 4
        %3143 = vperm.xlu0 %3142, %v323
        %v3144 = vpop.permute.xlu0 %3143
        %v3147 = vunpack.c.l.s4 839922192
        %v3148 = vunpack.c.0.s8 %v3147
        %v3149 = vperm.slane %v3144, %v3148
        %3150 = vset.pattern.permute.xlu0 4
        %3151 = vperm.xlu0 %3150, %v324
        %v3152 = vpop.permute.xlu0 %3151
        %v3155 = vunpack.c.l.s4 839922192
        %v3156 = vunpack.c.0.s8 %v3155
        %v3157 = vperm.slane %v3152, %v3156
        %3158 = vset.pattern.permute.xlu0 4
        %3159 = vperm.xlu0 %3158, %v325
        %v3160 = vpop.permute.xlu0 %3159
        %v3163 = vunpack.c.l.s4 839922192
        %v3164 = vunpack.c.0.s8 %v3163
        %v3165 = vperm.slane %v3160, %v3164
        %3166 = vset.pattern.permute.xlu0 4
        %3167 = vperm.xlu0 %3166, %v326
        %v3168 = vpop.permute.xlu0 %3167
        %v3171 = vunpack.c.l.s4 839922192
        %v3172 = vunpack.c.0.s8 %v3171
        %v3173 = vperm.slane %v3168, %v3172
        %3174 = vset.pattern.permute.xlu0 4
        %3175 = vperm.xlu0 %3174, %v327
        %v3176 = vpop.permute.xlu0 %3175
        %v3179 = vunpack.c.l.s4 839922192
        %v3180 = vunpack.c.0.s8 %v3179
        %v3181 = vperm.slane %v3176, %v3180
        %3182 = vset.pattern.permute.xlu0 4
        %3183 = vperm.xlu0 %3182, %v328
        %v3184 = vpop.permute.xlu0 %3183
        %v3187 = vunpack.c.l.s4 839922192
        %v3188 = vunpack.c.0.s8 %v3187
        %v3189 = vperm.slane %v3184, %v3188
        %3190 = vset.pattern.permute.xlu0 4
        %3191 = vperm.xlu0 %3190, %v329
        %v3192 = vpop.permute.xlu0 %3191
        %v3195 = vunpack.c.l.s4 839922192
        %v3196 = vunpack.c.0.s8 %v3195
        %v3197 = vperm.slane %v3192, %v3196
        %3198 = vset.pattern.permute.xlu0 4
        %3199 = vperm.xlu0 %3198, %v330
        %v3200 = vpop.permute.xlu0 %3199
        %v3203 = vunpack.c.l.s4 839922192
        %v3204 = vunpack.c.0.s8 %v3203
        %v3205 = vperm.slane %v3200, %v3204
        %3206 = vset.pattern.permute.xlu0 4
        %3207 = vperm.xlu0 %3206, %v331
        %v3208 = vpop.permute.xlu0 %3207
        %v3211 = vunpack.c.l.s4 839922192
        %v3212 = vunpack.c.0.s8 %v3211
        %v3213 = vperm.slane %v3208, %v3212
        %3214 = vset.pattern.permute.xlu0 4
        %3215 = vperm.xlu0 %3214, %v332
        %v3216 = vpop.permute.xlu0 %3215
        %v3219 = vunpack.c.l.s4 839922192
        %v3220 = vunpack.c.0.s8 %v3219
        %v3221 = vperm.slane %v3216, %v3220
        %3222 = vset.pattern.permute.xlu0 4
        %3223 = vperm.xlu0 %3222, %v333
        %v3224 = vpop.permute.xlu0 %3223
        %v3227 = vunpack.c.l.s4 839922192
        %v3228 = vunpack.c.0.s8 %v3227
        %v3229 = vperm.slane %v3224, %v3228
        %3230 = vset.pattern.permute.xlu0 4
        %3231 = vperm.xlu0 %3230, %v334
        %v3232 = vpop.permute.xlu0 %3231
        %v3235 = vunpack.c.l.s4 839922192
        %v3236 = vunpack.c.0.s8 %v3235
        %v3237 = vperm.slane %v3232, %v3236
        %3238 = vset.pattern.permute.xlu0 4
        %3239 = vperm.xlu0 %3238, %v335
        %v3240 = vpop.permute.xlu0 %3239
        %v3243 = vunpack.c.l.s4 839922192
        %v3244 = vunpack.c.0.s8 %v3243
        %v3245 = vperm.slane %v3240, %v3244
        %3246 = vset.pattern.permute.xlu0 4
        %3247 = vperm.xlu0 %3246, %v336
        %v3248 = vpop.permute.xlu0 %3247
        %v3251 = vunpack.c.l.s4 839922192
        %v3252 = vunpack.c.0.s8 %v3251
        %v3253 = vperm.slane %v3248, %v3252
        %3254 = vset.pattern.permute.xlu0 4
        %3255 = vperm.xlu0 %3254, %v337
        %v3256 = vpop.permute.xlu0 %3255
        %v3259 = vunpack.c.l.s4 839922192
        %v3260 = vunpack.c.0.s8 %v3259
        %v3261 = vperm.slane %v3256, %v3260
        %3262 = vset.pattern.permute.xlu0 4
        %3263 = vperm.xlu0 %3262, %v338
        %v3264 = vpop.permute.xlu0 %3263
        %v3267 = vunpack.c.l.s4 839922192
        %v3268 = vunpack.c.0.s8 %v3267
        %v3269 = vperm.slane %v3264, %v3268
        %3270 = vset.pattern.permute.xlu0 4
        %3271 = vperm.xlu0 %3270, %v339
        %v3272 = vpop.permute.xlu0 %3271
        %v3275 = vunpack.c.l.s4 839922192
        %v3276 = vunpack.c.0.s8 %v3275
        %v3277 = vperm.slane %v3272, %v3276
        %3278 = vset.pattern.permute.xlu0 4
        %3279 = vperm.xlu0 %3278, %v340
        %v3280 = vpop.permute.xlu0 %3279
        %v3283 = vunpack.c.l.s4 839922192
        %v3284 = vunpack.c.0.s8 %v3283
        %v3285 = vperm.slane %v3280, %v3284
        %3286 = vset.pattern.permute.xlu0 4
        %3287 = vperm.xlu0 %3286, %v341
        %v3288 = vpop.permute.xlu0 %3287
        %v3291 = vunpack.c.l.s4 839922192
        %v3292 = vunpack.c.0.s8 %v3291
        %v3293 = vperm.slane %v3288, %v3292
        %v3294 = vunpack.c.l.bf16 %v3005
        %v3295 = vunpack.c.l.bf16 %v3006
        %v3296 = vunpack.c.l.bf16 %v3007
        %v3297 = vunpack.c.l.bf16 %v3008
        %v3298 = vunpack.c.l.bf16 %v3009
        %v3299 = vunpack.c.l.bf16 %v3010
        %v3300 = vunpack.c.l.bf16 %v3011
        %v3301 = vunpack.c.l.bf16 %v3012
        %v3302 = vunpack.c.l.bf16 %v3013
        %v3303 = vunpack.c.l.bf16 %v3014
        %v3304 = vunpack.c.l.bf16 %v3015
        %v3305 = vunpack.c.l.bf16 %v3016
        %v3306 = vunpack.c.l.bf16 %v3017
        %v3307 = vunpack.c.l.bf16 %v3018
        %v3308 = vunpack.c.l.bf16 %v3019
        %v3309 = vunpack.c.l.bf16 %v3020
        %v3310 = vunpack.c.l.bf16 %v3021
        %v3311 = vunpack.c.l.bf16 %v3022
        %v3312 = vunpack.c.l.bf16 %v3023
        %v3313 = vunpack.c.l.bf16 %v3024
        %v3314 = vunpack.c.l.bf16 %v3025
        %v3315 = vunpack.c.l.bf16 %v3026
        %v3316 = vunpack.c.l.bf16 %v3027
        %v3317 = vunpack.c.l.bf16 %v3028
        %v3318 = vunpack.c.l.bf16 %v3029
        %v3319 = vunpack.c.l.bf16 %v3030
        %v3320 = vunpack.c.l.bf16 %v3031
        %v3321 = vunpack.c.l.bf16 %v3032
        %v3322 = vunpack.c.l.bf16 %v3033
        %v3323 = vunpack.c.l.bf16 %v3034
        %v3324 = vunpack.c.l.bf16 %v3035
        %v3325 = vunpack.c.l.bf16 %v3036
        %v3326 = vunpack.c.l.bf16 %v3037
        %v3327 = vunpack.c.l.bf16 %v3045
        %v3328 = vunpack.c.l.bf16 %v3053
        %v3329 = vunpack.c.l.bf16 %v3061
        %v3330 = vunpack.c.l.bf16 %v3069
        %v3331 = vunpack.c.l.bf16 %v3077
        %v3332 = vunpack.c.l.bf16 %v3085
        %v3333 = vunpack.c.l.bf16 %v3093
        %v3334 = vunpack.c.l.bf16 %v3101
        %v3335 = vunpack.c.l.bf16 %v3109
        %v3336 = vunpack.c.l.bf16 %v3117
        %v3337 = vunpack.c.l.bf16 %v3125
        %v3338 = vunpack.c.l.bf16 %v3133
        %v3339 = vunpack.c.l.bf16 %v3141
        %v3340 = vunpack.c.l.bf16 %v3149
        %v3341 = vunpack.c.l.bf16 %v3157
        %v3342 = vunpack.c.l.bf16 %v3165
        %v3343 = vunpack.c.l.bf16 %v3173
        %v3344 = vunpack.c.l.bf16 %v3181
        %v3345 = vunpack.c.l.bf16 %v3189
        %v3346 = vunpack.c.l.bf16 %v3197
        %v3347 = vunpack.c.l.bf16 %v3205
        %v3348 = vunpack.c.l.bf16 %v3213
        %v3349 = vunpack.c.l.bf16 %v3221
        %v3350 = vunpack.c.l.bf16 %v3229
        %v3351 = vunpack.c.l.bf16 %v3237
        %v3352 = vunpack.c.l.bf16 %v3245
        %v3353 = vunpack.c.l.bf16 %v3253
        %v3354 = vunpack.c.l.bf16 %v3261
        %v3355 = vunpack.c.l.bf16 %v3269
        %v3356 = vunpack.c.l.bf16 %v3277
        %v3357 = vunpack.c.l.bf16 %v3285
        %v3358 = vunpack.c.l.bf16 %v3293
        %v3391 = vrot.slane %v3327, 7
        %v3392 = vrot.slane %v3328, 7
        %v3393 = vsel %vm1132, %v3391, %v3392
        %v3394 = vrot.slane %v3329, 7
        %v3395 = vsel %vm1132, %v3392, %v3394
        %v3396 = vrot.slane %v3330, 7
        %v3397 = vsel %vm1132, %v3394, %v3396
        %v3398 = vrot.slane %v3331, 7
        %v3399 = vsel %vm1132, %v3396, %v3398
        %v3400 = vrot.slane %v3332, 7
        %v3401 = vsel %vm1132, %v3398, %v3400
        %v3402 = vrot.slane %v3333, 7
        %v3403 = vsel %vm1132, %v3400, %v3402
        %v3404 = vrot.slane %v3334, 7
        %v3405 = vsel %vm1132, %v3402, %v3404
        %v3406 = vrot.slane %v3335, 7
        %v3407 = vsel %vm1132, %v3404, %v3406
        %v3408 = vrot.slane %v3336, 7
        %v3409 = vsel %vm1132, %v3406, %v3408
        %v3410 = vrot.slane %v3337, 7
        %v3411 = vsel %vm1132, %v3408, %v3410
        %v3412 = vrot.slane %v3338, 7
        %v3413 = vsel %vm1132, %v3410, %v3412
        %v3414 = vrot.slane %v3339, 7
        %v3415 = vsel %vm1132, %v3412, %v3414
        %v3416 = vrot.slane %v3340, 7
        %v3417 = vsel %vm1132, %v3414, %v3416
        %v3418 = vrot.slane %v3341, 7
        %v3419 = vsel %vm1132, %v3416, %v3418
        %v3420 = vrot.slane %v3342, 7
        %v3421 = vsel %vm1132, %v3418, %v3420
        %v3422 = vrot.slane %v3343, 7
        %v3423 = vsel %vm1132, %v3420, %v3422
        %v3424 = vrot.slane %v3344, 7
        %v3425 = vsel %vm1132, %v3422, %v3424
        %v3426 = vrot.slane %v3345, 7
        %v3427 = vsel %vm1132, %v3424, %v3426
        %v3428 = vrot.slane %v3346, 7
        %v3429 = vsel %vm1132, %v3426, %v3428
        %v3430 = vrot.slane %v3347, 7
        %v3431 = vsel %vm1132, %v3428, %v3430
        %v3432 = vrot.slane %v3348, 7
        %v3433 = vsel %vm1132, %v3430, %v3432
        %v3434 = vrot.slane %v3349, 7
        %v3435 = vsel %vm1132, %v3432, %v3434
        %v3436 = vrot.slane %v3350, 7
        %v3437 = vsel %vm1132, %v3434, %v3436
        %v3438 = vrot.slane %v3351, 7
        %v3439 = vsel %vm1132, %v3436, %v3438
        %v3440 = vrot.slane %v3352, 7
        %v3441 = vsel %vm1132, %v3438, %v3440
        %v3442 = vrot.slane %v3353, 7
        %v3443 = vsel %vm1132, %v3440, %v3442
        %v3444 = vrot.slane %v3354, 7
        %v3445 = vsel %vm1132, %v3442, %v3444
        %v3446 = vrot.slane %v3355, 7
        %v3447 = vsel %vm1132, %v3444, %v3446
        %v3448 = vrot.slane %v3356, 7
        %v3449 = vsel %vm1132, %v3446, %v3448
        %v3450 = vrot.slane %v3357, 7
        %v3451 = vsel %vm1132, %v3448, %v3450
        %v3452 = vrot.slane %v3358, 7
        %v3453 = vsel %vm1132, %v3450, %v3452
        %v3487 = vmul.f32 %v3294, %v3391
        %v3488 = vmul.f32 %v3295, %v3393
        %v3489 = vmul.f32 %v3296, %v3395
        %v3490 = vmul.f32 %v3297, %v3397
        %v3491 = vmul.f32 %v3298, %v3399
        %v3492 = vmul.f32 %v3299, %v3401
        %v3493 = vmul.f32 %v3300, %v3403
        %v3494 = vmul.f32 %v3301, %v3405
        %v3495 = vmul.f32 %v3302, %v3407
        %v3496 = vmul.f32 %v3303, %v3409
        %v3497 = vmul.f32 %v3304, %v3411
        %v3498 = vmul.f32 %v3305, %v3413
        %v3499 = vmul.f32 %v3306, %v3415
        %v3500 = vmul.f32 %v3307, %v3417
        %v3501 = vmul.f32 %v3308, %v3419
        %v3502 = vmul.f32 %v3309, %v3421
        %v3503 = vmul.f32 %v3310, %v3423
        %v3504 = vmul.f32 %v3311, %v3425
        %v3505 = vmul.f32 %v3312, %v3427
        %v3506 = vmul.f32 %v3313, %v3429
        %v3507 = vmul.f32 %v3314, %v3431
        %v3508 = vmul.f32 %v3315, %v3433
        %v3509 = vmul.f32 %v3316, %v3435
        %v3510 = vmul.f32 %v3317, %v3437
        %v3511 = vmul.f32 %v3318, %v3439
        %v3512 = vmul.f32 %v3319, %v3441
        %v3513 = vmul.f32 %v3320, %v3443
        %v3514 = vmul.f32 %v3321, %v3445
        %v3515 = vmul.f32 %v3322, %v3447
        %v3516 = vmul.f32 %v3323, %v3449
        %v3517 = vmul.f32 %v3324, %v3451
        %v3518 = vmul.f32 %v3325, %v3453
        %v3519 = vmul.f32 %v3326, %v3452
        %v3520 = vpack.c.bf16 %v3488, %v3487
        %v3521 = vpack.c.bf16 %v3490, %v3489
        %v3522 = vpack.c.bf16 %v3492, %v3491
        %v3523 = vpack.c.bf16 %v3494, %v3493
        %v3524 = vpack.c.bf16 %v3496, %v3495
        %v3525 = vpack.c.bf16 %v3498, %v3497
        %v3526 = vpack.c.bf16 %v3500, %v3499
        %v3527 = vpack.c.bf16 %v3502, %v3501
        %v3528 = vpack.c.bf16 %v3504, %v3503
        %v3529 = vpack.c.bf16 %v3506, %v3505
        %v3530 = vpack.c.bf16 %v3508, %v3507
        %v3531 = vpack.c.bf16 %v3510, %v3509
        %v3532 = vpack.c.bf16 %v3512, %v3511
        %v3533 = vpack.c.bf16 %v3514, %v3513
        %v3534 = vpack.c.bf16 %v3516, %v3515
        %v3535 = vpack.c.bf16 %v3518, %v3517
        %v3536 = vpack.c.bf16 %v3519, %v3519
        %v3537 = vld [vmem:[%s2 + $0x40] sm:$0xf]
        %v3538 = vld [vmem:[%s2 + $0x44] sm:$0xf]
        %v3539 = vld [vmem:[%s2 + $0x48] sm:$0xf]
        %v3540 = vld [vmem:[%s2 + $0x4c] sm:$0xf]
        %v3542 = vshrl.u32 %v3520, 16
        %v3544 = vshll.u32 %v3520, 16
        %v3546 = vrot.slane %v3544, 1
        %v3547 = vor.u32 %v3542, %v3546
        %v3549 = vshll.u32 %v3521, 16
        %v3551 = vrot.slane %v3549, 1
        %v3552 = vsel %vm1283, %v3547, %v3551
        %v3553 = vshrl.u32 %v3521, 16
        %v3555 = vor.u32 %v3553, %v3551
        %v3557 = vshll.u32 %v3522, 16
        %v3559 = vrot.slane %v3557, 1
        %v3560 = vsel %vm1283, %v3555, %v3559
        %v3561 = vshrl.u32 %v3522, 16
        %v3563 = vor.u32 %v3561, %v3559
        %v3565 = vshll.u32 %v3523, 16
        %v3567 = vrot.slane %v3565, 1
        %v3568 = vsel %vm1283, %v3563, %v3567
        %v3569 = vshrl.u32 %v3523, 16
        %v3571 = vor.u32 %v3569, %v3567
        %v3573 = vshll.u32 %v3524, 16
        %v3575 = vrot.slane %v3573, 1
        %v3576 = vsel %vm1283, %v3571, %v3575
        %v3577 = vshrl.u32 %v3524, 16
        %v3579 = vor.u32 %v3577, %v3575
        %v3581 = vshll.u32 %v3525, 16
        %v3583 = vrot.slane %v3581, 1
        %v3584 = vsel %vm1283, %v3579, %v3583
        %v3585 = vshrl.u32 %v3525, 16
        %v3587 = vor.u32 %v3585, %v3583
        %v3589 = vshll.u32 %v3526, 16
        %v3591 = vrot.slane %v3589, 1
        %v3592 = vsel %vm1283, %v3587, %v3591
        %v3593 = vshrl.u32 %v3526, 16
        %v3595 = vor.u32 %v3593, %v3591
        %v3597 = vshll.u32 %v3527, 16
        %v3599 = vrot.slane %v3597, 1
        %v3600 = vsel %vm1283, %v3595, %v3599
        %v3601 = vshrl.u32 %v3527, 16
        %v3603 = vor.u32 %v3601, %v3599
        %v3605 = vshll.u32 %v3528, 16
        %v3607 = vrot.slane %v3605, 1
        %v3608 = vsel %vm1283, %v3603, %v3607
        %v3609 = vshrl.u32 %v3528, 16
        %v3611 = vor.u32 %v3609, %v3607
        %v3613 = vshll.u32 %v3529, 16
        %v3615 = vrot.slane %v3613, 1
        %v3616 = vsel %vm1283, %v3611, %v3615
        %v3617 = vshrl.u32 %v3529, 16
        %v3619 = vor.u32 %v3617, %v3615
        %v3621 = vshll.u32 %v3530, 16
        %v3623 = vrot.slane %v3621, 1
        %v3624 = vsel %vm1283, %v3619, %v3623
        %v3625 = vshrl.u32 %v3530, 16
        %v3627 = vor.u32 %v3625, %v3623
        %v3629 = vshll.u32 %v3531, 16
        %v3631 = vrot.slane %v3629, 1
        %v3632 = vsel %vm1283, %v3627, %v3631
        %v3633 = vshrl.u32 %v3531, 16
        %v3635 = vor.u32 %v3633, %v3631
        %v3637 = vshll.u32 %v3532, 16
        %v3639 = vrot.slane %v3637, 1
        %v3640 = vsel %vm1283, %v3635, %v3639
        %v3641 = vshrl.u32 %v3532, 16
        %v3643 = vor.u32 %v3641, %v3639
        %v3645 = vshll.u32 %v3533, 16
        %v3647 = vrot.slane %v3645, 1
        %v3648 = vsel %vm1283, %v3643, %v3647
        %v3649 = vshrl.u32 %v3533, 16
        %v3651 = vor.u32 %v3649, %v3647
        %v3653 = vshll.u32 %v3534, 16
        %v3655 = vrot.slane %v3653, 1
        %v3656 = vsel %vm1283, %v3651, %v3655
        %v3657 = vshrl.u32 %v3534, 16
        %v3659 = vor.u32 %v3657, %v3655
        %v3661 = vshll.u32 %v3535, 16
        %v3663 = vrot.slane %v3661, 1
        %v3664 = vsel %vm1283, %v3659, %v3663
        %v3665 = vshrl.u32 %v3535, 16
        %v3667 = vor.u32 %v3665, %v3663
        %v3669 = vshll.u32 %v3536, 16
        %v3671 = vrot.slane %v3669, 1
        %v3672 = vsel %vm1283, %v3667, %v3671
        %v3677 = vunpack.c.l.b16 %v3537
        %v3678 = vunpack.c.l.b16 %v3538
        %v3679 = vunpack.c.l.b16 %v3539
        %v3680 = vunpack.c.l.b16 %v3540
        %v3681 = vpack.c.b16 %v3678, %v3677
        %v3682 = vpack.c.b16 %v3680, %v3679
        %v3686 = vsel %vm1428, %v3552, 0
        %v3689 = vsel %vm1428, %v3560, 0
        %v3692 = vsel %vm1428, %v3568, 0
        %v3695 = vsel %vm1428, %v3576, 0
        %v3698 = vsel %vm1428, %v3584, 0
        %v3701 = vsel %vm1428, %v3592, 0
        %v3704 = vsel %vm1428, %v3600, 0
        %v3707 = vsel %vm1428, %v3608, 0
        %v3710 = vsel %vm1428, %v3616, 0
        %v3713 = vsel %vm1428, %v3624, 0
        %v3716 = vsel %vm1428, %v3632, 0
        %v3719 = vsel %vm1428, %v3640, 0
        %v3722 = vsel %vm1428, %v3648, 0
        %v3725 = vsel %vm1428, %v3656, 0
        %v3728 = vsel %vm1428, %v3664, 0
        %v3731 = vsel %vm1428, %v3672, 0
        %3733 = vmatpush.bf16.msra.mxu0 0
        %3734 = vmatpush.bf16.msra.mxu0 0
        %3735 = vmatpush.bf16.msra.mxu0 0
        %3736 = vmatpush.bf16.msra.mxu0 0
        %3737 = vmatpush.bf16.msra.mxu0 0
        %3738 = vmatpush.bf16.msra.mxu0 0
        %3739 = vmatpush.bf16.msra.mxu0 %v3682
        %3740 = vmatpush.bf16.msra.mxu0 %v3681
        %3741 = vmatmul.bf16.gmra.mxu0 %v3686
        %v3742 = vpop.f32.mrf.mxu0
        %v3743 = vadd.f32 0.0, %v3742
        %v3744 = vpop.f32.mrf.mxu0
        %v3745 = vadd.f32 0.0, %v3744
        %3746 = vmatmul.bf16.gmra.mxu0 %v3689
        %v3747 = vpop.f32.mrf.mxu0
        %v3748 = vadd.f32 0.0, %v3747
        %v3749 = vpop.f32.mrf.mxu0
        %v3750 = vadd.f32 0.0, %v3749
        %3751 = vmatmul.bf16.gmra.mxu0 %v3692
        %v3752 = vpop.f32.mrf.mxu0
        %v3753 = vadd.f32 0.0, %v3752
        %v3754 = vpop.f32.mrf.mxu0
        %v3755 = vadd.f32 0.0, %v3754
        %3756 = vmatmul.bf16.gmra.mxu0 %v3695
        %v3757 = vpop.f32.mrf.mxu0
        %v3758 = vadd.f32 0.0, %v3757
        %v3759 = vpop.f32.mrf.mxu0
        %v3760 = vadd.f32 0.0, %v3759
        %3761 = vmatmul.bf16.gmra.mxu0 %v3698
        %v3762 = vpop.f32.mrf.mxu0
        %v3763 = vadd.f32 0.0, %v3762
        %v3764 = vpop.f32.mrf.mxu0
        %v3765 = vadd.f32 0.0, %v3764
        %3766 = vmatmul.bf16.gmra.mxu0 %v3701
        %v3767 = vpop.f32.mrf.mxu0
        %v3768 = vadd.f32 0.0, %v3767
        %v3769 = vpop.f32.mrf.mxu0
        %v3770 = vadd.f32 0.0, %v3769
        %3771 = vmatmul.bf16.gmra.mxu0 %v3704
        %v3772 = vpop.f32.mrf.mxu0
        %v3773 = vadd.f32 0.0, %v3772
        %v3774 = vpop.f32.mrf.mxu0
        %v3775 = vadd.f32 0.0, %v3774
        %3776 = vmatmul.bf16.gmra.mxu0 %v3707
        %v3777 = vpop.f32.mrf.mxu0
        %v3778 = vadd.f32 0.0, %v3777
        %v3779 = vpop.f32.mrf.mxu0
        %v3780 = vadd.f32 0.0, %v3779
        %3781 = vmatmul.bf16.gmra.mxu0 %v3710
        %v3782 = vpop.f32.mrf.mxu0
        %v3783 = vadd.f32 0.0, %v3782
        %v3784 = vpop.f32.mrf.mxu0
        %v3785 = vadd.f32 0.0, %v3784
        %3786 = vmatmul.bf16.gmra.mxu0 %v3713
        %v3787 = vpop.f32.mrf.mxu0
        %v3788 = vadd.f32 0.0, %v3787
        %v3789 = vpop.f32.mrf.mxu0
        %v3790 = vadd.f32 0.0, %v3789
        %3791 = vmatmul.bf16.gmra.mxu0 %v3716
        %v3792 = vpop.f32.mrf.mxu0
        %v3793 = vadd.f32 0.0, %v3792
        %v3794 = vpop.f32.mrf.mxu0
        %v3795 = vadd.f32 0.0, %v3794
        %3796 = vmatmul.bf16.gmra.mxu0 %v3719
        %v3797 = vpop.f32.mrf.mxu0
        %v3798 = vadd.f32 0.0, %v3797
        %v3799 = vpop.f32.mrf.mxu0
        %v3800 = vadd.f32 0.0, %v3799
        %3801 = vmatmul.bf16.gmra.mxu0 %v3722
        %v3802 = vpop.f32.mrf.mxu0
        %v3803 = vadd.f32 0.0, %v3802
        %v3804 = vpop.f32.mrf.mxu0
        %v3805 = vadd.f32 0.0, %v3804
        %3806 = vmatmul.bf16.gmra.mxu0 %v3725
        %v3807 = vpop.f32.mrf.mxu0
        %v3808 = vadd.f32 0.0, %v3807
        %v3809 = vpop.f32.mrf.mxu0
        %v3810 = vadd.f32 0.0, %v3809
        %3811 = vmatmul.bf16.gmra.mxu0 %v3728
        %v3812 = vpop.f32.mrf.mxu0
        %v3813 = vadd.f32 0.0, %v3812
        %v3814 = vpop.f32.mrf.mxu0
        %v3815 = vadd.f32 0.0, %v3814
        %3816 = vmatmul.bf16.gmra.mxu0 %v3731
        %v3817 = vpop.f32.mrf.mxu0
        %v3818 = vadd.f32 0.0, %v3817
        %v3819 = vpop.f32.mrf.mxu0
        %v3820 = vadd.f32 0.0, %v3819
        %3821 = vdwg.mxu0
        %v3822 = vadd.f32 %v2973, %v3743
        %v3823 = vadd.f32 %v2974, %v3745
        %v3824 = vadd.f32 %v2975, %v3748
        %v3825 = vadd.f32 %v2976, %v3750
        %v3826 = vadd.f32 %v2977, %v3753
        %v3827 = vadd.f32 %v2978, %v3755
        %v3828 = vadd.f32 %v2979, %v3758
        %v3829 = vadd.f32 %v2980, %v3760
        %v3830 = vadd.f32 %v2981, %v3763
        %v3831 = vadd.f32 %v2982, %v3765
        %v3832 = vadd.f32 %v2983, %v3768
        %v3833 = vadd.f32 %v2984, %v3770
        %v3834 = vadd.f32 %v2985, %v3773
        %v3835 = vadd.f32 %v2986, %v3775
        %v3836 = vadd.f32 %v2987, %v3778
        %v3837 = vadd.f32 %v2988, %v3780
        %v3838 = vadd.f32 %v2989, %v3783
        %v3839 = vadd.f32 %v2990, %v3785
        %v3840 = vadd.f32 %v2991, %v3788
        %v3841 = vadd.f32 %v2992, %v3790
        %v3842 = vadd.f32 %v2993, %v3793
        %v3843 = vadd.f32 %v2994, %v3795
        %v3844 = vadd.f32 %v2995, %v3798
        %v3845 = vadd.f32 %v2996, %v3800
        %v3846 = vadd.f32 %v2997, %v3803
        %v3847 = vadd.f32 %v2998, %v3805
        %v3848 = vadd.f32 %v2999, %v3808
        %v3849 = vadd.f32 %v3000, %v3810
        %v3850 = vadd.f32 %v3001, %v3813
        %v3851 = vadd.f32 %v3002, %v3815
        %v3852 = vadd.f32 %v3003, %v3818
        %v3853 = vadd.f32 %v3004, %v3820
        %v3854 = vld [vmem:[%s276 + $0x8] sm:$0xe]
        %3855 = vset.pattern.permute.xlu0 5
        %3856 = vperm.xlu0 %3855, %v310
        %v3857 = vpop.permute.xlu0 %3856
        %v3860 = vunpack.c.l.s4 839922192
        %v3861 = vunpack.c.0.s8 %v3860
        %v3862 = vperm.slane %v3857, %v3861
        %3863 = vset.pattern.permute.xlu0 5
        %3864 = vperm.xlu0 %3863, %v311
        %v3865 = vpop.permute.xlu0 %3864
        %v3868 = vunpack.c.l.s4 839922192
        %v3869 = vunpack.c.0.s8 %v3868
        %v3870 = vperm.slane %v3865, %v3869
        %3871 = vset.pattern.permute.xlu0 5
        %3872 = vperm.xlu0 %3871, %v312
        %v3873 = vpop.permute.xlu0 %3872
        %v3876 = vunpack.c.l.s4 839922192
        %v3877 = vunpack.c.0.s8 %v3876
        %v3878 = vperm.slane %v3873, %v3877
        %3879 = vset.pattern.permute.xlu0 5
        %3880 = vperm.xlu0 %3879, %v313
        %v3881 = vpop.permute.xlu0 %3880
        %v3884 = vunpack.c.l.s4 839922192
        %v3885 = vunpack.c.0.s8 %v3884
        %v3886 = vperm.slane %v3881, %v3885
        %3887 = vset.pattern.permute.xlu0 5
        %3888 = vperm.xlu0 %3887, %v314
        %v3889 = vpop.permute.xlu0 %3888
        %v3892 = vunpack.c.l.s4 839922192
        %v3893 = vunpack.c.0.s8 %v3892
        %v3894 = vperm.slane %v3889, %v3893
        %3895 = vset.pattern.permute.xlu0 5
        %3896 = vperm.xlu0 %3895, %v315
        %v3897 = vpop.permute.xlu0 %3896
        %v3900 = vunpack.c.l.s4 839922192
        %v3901 = vunpack.c.0.s8 %v3900
        %v3902 = vperm.slane %v3897, %v3901
        %3903 = vset.pattern.permute.xlu0 5
        %3904 = vperm.xlu0 %3903, %v316
        %v3905 = vpop.permute.xlu0 %3904
        %v3908 = vunpack.c.l.s4 839922192
        %v3909 = vunpack.c.0.s8 %v3908
        %v3910 = vperm.slane %v3905, %v3909
        %3911 = vset.pattern.permute.xlu0 5
        %3912 = vperm.xlu0 %3911, %v317
        %v3913 = vpop.permute.xlu0 %3912
        %v3916 = vunpack.c.l.s4 839922192
        %v3917 = vunpack.c.0.s8 %v3916
        %v3918 = vperm.slane %v3913, %v3917
        %3919 = vset.pattern.permute.xlu0 5
        %3920 = vperm.xlu0 %3919, %v318
        %v3921 = vpop.permute.xlu0 %3920
        %v3924 = vunpack.c.l.s4 839922192
        %v3925 = vunpack.c.0.s8 %v3924
        %v3926 = vperm.slane %v3921, %v3925
        %3927 = vset.pattern.permute.xlu0 5
        %3928 = vperm.xlu0 %3927, %v319
        %v3929 = vpop.permute.xlu0 %3928
        %v3932 = vunpack.c.l.s4 839922192
        %v3933 = vunpack.c.0.s8 %v3932
        %v3934 = vperm.slane %v3929, %v3933
        %3935 = vset.pattern.permute.xlu0 5
        %3936 = vperm.xlu0 %3935, %v320
        %v3937 = vpop.permute.xlu0 %3936
        %v3940 = vunpack.c.l.s4 839922192
        %v3941 = vunpack.c.0.s8 %v3940
        %v3942 = vperm.slane %v3937, %v3941
        %3943 = vset.pattern.permute.xlu0 5
        %3944 = vperm.xlu0 %3943, %v321
        %v3945 = vpop.permute.xlu0 %3944
        %v3948 = vunpack.c.l.s4 839922192
        %v3949 = vunpack.c.0.s8 %v3948
        %v3950 = vperm.slane %v3945, %v3949
        %3951 = vset.pattern.permute.xlu0 5
        %3952 = vperm.xlu0 %3951, %v322
        %v3953 = vpop.permute.xlu0 %3952
        %v3956 = vunpack.c.l.s4 839922192
        %v3957 = vunpack.c.0.s8 %v3956
        %v3958 = vperm.slane %v3953, %v3957
        %3959 = vset.pattern.permute.xlu0 5
        %3960 = vperm.xlu0 %3959, %v323
        %v3961 = vpop.permute.xlu0 %3960
        %v3964 = vunpack.c.l.s4 839922192
        %v3965 = vunpack.c.0.s8 %v3964
        %v3966 = vperm.slane %v3961, %v3965
        %3967 = vset.pattern.permute.xlu0 5
        %3968 = vperm.xlu0 %3967, %v324
        %v3969 = vpop.permute.xlu0 %3968
        %v3972 = vunpack.c.l.s4 839922192
        %v3973 = vunpack.c.0.s8 %v3972
        %v3974 = vperm.slane %v3969, %v3973
        %3975 = vset.pattern.permute.xlu0 5
        %3976 = vperm.xlu0 %3975, %v325
        %v3977 = vpop.permute.xlu0 %3976
        %v3980 = vunpack.c.l.s4 839922192
        %v3981 = vunpack.c.0.s8 %v3980
        %v3982 = vperm.slane %v3977, %v3981
        %3983 = vset.pattern.permute.xlu0 5
        %3984 = vperm.xlu0 %3983, %v326
        %v3985 = vpop.permute.xlu0 %3984
        %v3988 = vunpack.c.l.s4 839922192
        %v3989 = vunpack.c.0.s8 %v3988
        %v3990 = vperm.slane %v3985, %v3989
        %3991 = vset.pattern.permute.xlu0 5
        %3992 = vperm.xlu0 %3991, %v327
        %v3993 = vpop.permute.xlu0 %3992
        %v3996 = vunpack.c.l.s4 839922192
        %v3997 = vunpack.c.0.s8 %v3996
        %v3998 = vperm.slane %v3993, %v3997
        %3999 = vset.pattern.permute.xlu0 5
        %4000 = vperm.xlu0 %3999, %v328
        %v4001 = vpop.permute.xlu0 %4000
        %v4004 = vunpack.c.l.s4 839922192
        %v4005 = vunpack.c.0.s8 %v4004
        %v4006 = vperm.slane %v4001, %v4005
        %4007 = vset.pattern.permute.xlu0 5
        %4008 = vperm.xlu0 %4007, %v329
        %v4009 = vpop.permute.xlu0 %4008
        %v4012 = vunpack.c.l.s4 839922192
        %v4013 = vunpack.c.0.s8 %v4012
        %v4014 = vperm.slane %v4009, %v4013
        %4015 = vset.pattern.permute.xlu0 5
        %4016 = vperm.xlu0 %4015, %v330
        %v4017 = vpop.permute.xlu0 %4016
        %v4020 = vunpack.c.l.s4 839922192
        %v4021 = vunpack.c.0.s8 %v4020
        %v4022 = vperm.slane %v4017, %v4021
        %4023 = vset.pattern.permute.xlu0 5
        %4024 = vperm.xlu0 %4023, %v331
        %v4025 = vpop.permute.xlu0 %4024
        %v4028 = vunpack.c.l.s4 839922192
        %v4029 = vunpack.c.0.s8 %v4028
        %v4030 = vperm.slane %v4025, %v4029
        %4031 = vset.pattern.permute.xlu0 5
        %4032 = vperm.xlu0 %4031, %v332
        %v4033 = vpop.permute.xlu0 %4032
        %v4036 = vunpack.c.l.s4 839922192
        %v4037 = vunpack.c.0.s8 %v4036
        %v4038 = vperm.slane %v4033, %v4037
        %4039 = vset.pattern.permute.xlu0 5
        %4040 = vperm.xlu0 %4039, %v333
        %v4041 = vpop.permute.xlu0 %4040
        %v4044 = vunpack.c.l.s4 839922192
        %v4045 = vunpack.c.0.s8 %v4044
        %v4046 = vperm.slane %v4041, %v4045
        %4047 = vset.pattern.permute.xlu0 5
        %4048 = vperm.xlu0 %4047, %v334
        %v4049 = vpop.permute.xlu0 %4048
        %v4052 = vunpack.c.l.s4 839922192
        %v4053 = vunpack.c.0.s8 %v4052
        %v4054 = vperm.slane %v4049, %v4053
        %4055 = vset.pattern.permute.xlu0 5
        %4056 = vperm.xlu0 %4055, %v335
        %v4057 = vpop.permute.xlu0 %4056
        %v4060 = vunpack.c.l.s4 839922192
        %v4061 = vunpack.c.0.s8 %v4060
        %v4062 = vperm.slane %v4057, %v4061
        %4063 = vset.pattern.permute.xlu0 5
        %4064 = vperm.xlu0 %4063, %v336
        %v4065 = vpop.permute.xlu0 %4064
        %v4068 = vunpack.c.l.s4 839922192
        %v4069 = vunpack.c.0.s8 %v4068
        %v4070 = vperm.slane %v4065, %v4069
        %4071 = vset.pattern.permute.xlu0 5
        %4072 = vperm.xlu0 %4071, %v337
        %v4073 = vpop.permute.xlu0 %4072
        %v4076 = vunpack.c.l.s4 839922192
        %v4077 = vunpack.c.0.s8 %v4076
        %v4078 = vperm.slane %v4073, %v4077
        %4079 = vset.pattern.permute.xlu0 5
        %4080 = vperm.xlu0 %4079, %v338
        %v4081 = vpop.permute.xlu0 %4080
        %v4084 = vunpack.c.l.s4 839922192
        %v4085 = vunpack.c.0.s8 %v4084
        %v4086 = vperm.slane %v4081, %v4085
        %4087 = vset.pattern.permute.xlu0 5
        %4088 = vperm.xlu0 %4087, %v339
        %v4089 = vpop.permute.xlu0 %4088
        %v4092 = vunpack.c.l.s4 839922192
        %v4093 = vunpack.c.0.s8 %v4092
        %v4094 = vperm.slane %v4089, %v4093
        %4095 = vset.pattern.permute.xlu0 5
        %4096 = vperm.xlu0 %4095, %v340
        %v4097 = vpop.permute.xlu0 %4096
        %v4100 = vunpack.c.l.s4 839922192
        %v4101 = vunpack.c.0.s8 %v4100
        %v4102 = vperm.slane %v4097, %v4101
        %4103 = vset.pattern.permute.xlu0 5
        %4104 = vperm.xlu0 %4103, %v341
        %v4105 = vpop.permute.xlu0 %4104
        %v4108 = vunpack.c.l.s4 839922192
        %v4109 = vunpack.c.0.s8 %v4108
        %v4110 = vperm.slane %v4105, %v4109
        %v4111 = vunpack.c.l.bf16 %v3854
        %v4112 = vunpack.c.l.bf16 %v3862
        %v4113 = vunpack.c.l.bf16 %v3870
        %v4114 = vunpack.c.l.bf16 %v3878
        %v4115 = vunpack.c.l.bf16 %v3886
        %v4116 = vunpack.c.l.bf16 %v3894
        %v4117 = vunpack.c.l.bf16 %v3902
        %v4118 = vunpack.c.l.bf16 %v3910
        %v4119 = vunpack.c.l.bf16 %v3918
        %v4120 = vunpack.c.l.bf16 %v3926
        %v4121 = vunpack.c.l.bf16 %v3934
        %v4122 = vunpack.c.l.bf16 %v3942
        %v4123 = vunpack.c.l.bf16 %v3950
        %v4124 = vunpack.c.l.bf16 %v3958
        %v4125 = vunpack.c.l.bf16 %v3966
        %v4126 = vunpack.c.l.bf16 %v3974
        %v4127 = vunpack.c.l.bf16 %v3982
        %v4128 = vunpack.c.l.bf16 %v3990
        %v4129 = vunpack.c.l.bf16 %v3998
        %v4130 = vunpack.c.l.bf16 %v4006
        %v4131 = vunpack.c.l.bf16 %v4014
        %v4132 = vunpack.c.l.bf16 %v4022
        %v4133 = vunpack.c.l.bf16 %v4030
        %v4134 = vunpack.c.l.bf16 %v4038
        %v4135 = vunpack.c.l.bf16 %v4046
        %v4136 = vunpack.c.l.bf16 %v4054
        %v4137 = vunpack.c.l.bf16 %v4062
        %v4138 = vunpack.c.l.bf16 %v4070
        %v4139 = vunpack.c.l.bf16 %v4078
        %v4140 = vunpack.c.l.bf16 %v4086
        %v4141 = vunpack.c.l.bf16 %v4094
        %v4142 = vunpack.c.l.bf16 %v4102
        %v4143 = vunpack.c.l.bf16 %v4110
        %v4176 = vrot.slane %v4112, 6
        %v4177 = vrot.slane %v4113, 6
        %v4178 = vsel %vm2037, %v4176, %v4177
        %v4179 = vrot.slane %v4114, 6
        %v4180 = vsel %vm2037, %v4177, %v4179
        %v4181 = vrot.slane %v4115, 6
        %v4182 = vsel %vm2037, %v4179, %v4181
        %v4183 = vrot.slane %v4116, 6
        %v4184 = vsel %vm2037, %v4181, %v4183
        %v4185 = vrot.slane %v4117, 6
        %v4186 = vsel %vm2037, %v4183, %v4185
        %v4187 = vrot.slane %v4118, 6
        %v4188 = vsel %vm2037, %v4185, %v4187
        %v4189 = vrot.slane %v4119, 6
        %v4190 = vsel %vm2037, %v4187, %v4189
        %v4191 = vrot.slane %v4120, 6
        %v4192 = vsel %vm2037, %v4189, %v4191
        %v4193 = vrot.slane %v4121, 6
        %v4194 = vsel %vm2037, %v4191, %v4193
        %v4195 = vrot.slane %v4122, 6
        %v4196 = vsel %vm2037, %v4193, %v4195
        %v4197 = vrot.slane %v4123, 6
        %v4198 = vsel %vm2037, %v4195, %v4197
        %v4199 = vrot.slane %v4124, 6
        %v4200 = vsel %vm2037, %v4197, %v4199
        %v4201 = vrot.slane %v4125, 6
        %v4202 = vsel %vm2037, %v4199, %v4201
        %v4203 = vrot.slane %v4126, 6
        %v4204 = vsel %vm2037, %v4201, %v4203
        %v4205 = vrot.slane %v4127, 6
        %v4206 = vsel %vm2037, %v4203, %v4205
        %v4207 = vrot.slane %v4128, 6
        %v4208 = vsel %vm2037, %v4205, %v4207
        %v4209 = vrot.slane %v4129, 6
        %v4210 = vsel %vm2037, %v4207, %v4209
        %v4211 = vrot.slane %v4130, 6
        %v4212 = vsel %vm2037, %v4209, %v4211
        %v4213 = vrot.slane %v4131, 6
        %v4214 = vsel %vm2037, %v4211, %v4213
        %v4215 = vrot.slane %v4132, 6
        %v4216 = vsel %vm2037, %v4213, %v4215
        %v4217 = vrot.slane %v4133, 6
        %v4218 = vsel %vm2037, %v4215, %v4217
        %v4219 = vrot.slane %v4134, 6
        %v4220 = vsel %vm2037, %v4217, %v4219
        %v4221 = vrot.slane %v4135, 6
        %v4222 = vsel %vm2037, %v4219, %v4221
        %v4223 = vrot.slane %v4136, 6
        %v4224 = vsel %vm2037, %v4221, %v4223
        %v4225 = vrot.slane %v4137, 6
        %v4226 = vsel %vm2037, %v4223, %v4225
        %v4227 = vrot.slane %v4138, 6
        %v4228 = vsel %vm2037, %v4225, %v4227
        %v4229 = vrot.slane %v4139, 6
        %v4230 = vsel %vm2037, %v4227, %v4229
        %v4231 = vrot.slane %v4140, 6
        %v4232 = vsel %vm2037, %v4229, %v4231
        %v4233 = vrot.slane %v4141, 6
        %v4234 = vsel %vm2037, %v4231, %v4233
        %v4235 = vrot.slane %v4142, 6
        %v4236 = vsel %vm2037, %v4233, %v4235
        %v4237 = vrot.slane %v4143, 6
        %v4238 = vsel %vm2037, %v4235, %v4237
        %v4272 = vmul.f32 %v4111, %v4176
        %v4273 = vmul.f32 %v3295, %v4178
        %v4274 = vmul.f32 %v3296, %v4180
        %v4275 = vmul.f32 %v3297, %v4182
        %v4276 = vmul.f32 %v3298, %v4184
        %v4277 = vmul.f32 %v3299, %v4186
        %v4278 = vmul.f32 %v3300, %v4188
        %v4279 = vmul.f32 %v3301, %v4190
        %v4280 = vmul.f32 %v3302, %v4192
        %v4281 = vmul.f32 %v3303, %v4194
        %v4282 = vmul.f32 %v3304, %v4196
        %v4283 = vmul.f32 %v3305, %v4198
        %v4284 = vmul.f32 %v3306, %v4200
        %v4285 = vmul.f32 %v3307, %v4202
        %v4286 = vmul.f32 %v3308, %v4204
        %v4287 = vmul.f32 %v3309, %v4206
        %v4288 = vmul.f32 %v3310, %v4208
        %v4289 = vmul.f32 %v3311, %v4210
        %v4290 = vmul.f32 %v3312, %v4212
        %v4291 = vmul.f32 %v3313, %v4214
        %v4292 = vmul.f32 %v3314, %v4216
        %v4293 = vmul.f32 %v3315, %v4218
        %v4294 = vmul.f32 %v3316, %v4220
        %v4295 = vmul.f32 %v3317, %v4222
        %v4296 = vmul.f32 %v3318, %v4224
        %v4297 = vmul.f32 %v3319, %v4226
        %v4298 = vmul.f32 %v3320, %v4228
        %v4299 = vmul.f32 %v3321, %v4230
        %v4300 = vmul.f32 %v3322, %v4232
        %v4301 = vmul.f32 %v3323, %v4234
        %v4302 = vmul.f32 %v3324, %v4236
        %v4303 = vmul.f32 %v3325, %v4238
        %v4304 = vmul.f32 %v3326, %v4237
        %v4305 = vpack.c.bf16 %v4273, %v4272
        %v4306 = vpack.c.bf16 %v4275, %v4274
        %v4307 = vpack.c.bf16 %v4277, %v4276
        %v4308 = vpack.c.bf16 %v4279, %v4278
        %v4309 = vpack.c.bf16 %v4281, %v4280
        %v4310 = vpack.c.bf16 %v4283, %v4282
        %v4311 = vpack.c.bf16 %v4285, %v4284
        %v4312 = vpack.c.bf16 %v4287, %v4286
        %v4313 = vpack.c.bf16 %v4289, %v4288
        %v4314 = vpack.c.bf16 %v4291, %v4290
        %v4315 = vpack.c.bf16 %v4293, %v4292
        %v4316 = vpack.c.bf16 %v4295, %v4294
        %v4317 = vpack.c.bf16 %v4297, %v4296
        %v4318 = vpack.c.bf16 %v4299, %v4298
        %v4319 = vpack.c.bf16 %v4301, %v4300
        %v4320 = vpack.c.bf16 %v4303, %v4302
        %v4321 = vpack.c.bf16 %v4304, %v4304
        %v4322 = vld [vmem:[%s2 + $0x50] sm:$0xf]
        %v4323 = vld [vmem:[%s2 + $0x54] sm:$0xf]
        %v4324 = vld [vmem:[%s2 + $0x58] sm:$0xf]
        %v4325 = vld [vmem:[%s2 + $0x5c] sm:$0xf]
        %v4343 = vrot.slane %v4305, 1
        %v4344 = vrot.slane %v4306, 1
        %v4345 = vsel %vm2205, %v4343, %v4344
        %v4346 = vrot.slane %v4307, 1
        %v4347 = vsel %vm2205, %v4344, %v4346
        %v4348 = vrot.slane %v4308, 1
        %v4349 = vsel %vm2205, %v4346, %v4348
        %v4350 = vrot.slane %v4309, 1
        %v4351 = vsel %vm2205, %v4348, %v4350
        %v4352 = vrot.slane %v4310, 1
        %v4353 = vsel %vm2205, %v4350, %v4352
        %v4354 = vrot.slane %v4311, 1
        %v4355 = vsel %vm2205, %v4352, %v4354
        %v4356 = vrot.slane %v4312, 1
        %v4357 = vsel %vm2205, %v4354, %v4356
        %v4358 = vrot.slane %v4313, 1
        %v4359 = vsel %vm2205, %v4356, %v4358
        %v4360 = vrot.slane %v4314, 1
        %v4361 = vsel %vm2205, %v4358, %v4360
        %v4362 = vrot.slane %v4315, 1
        %v4363 = vsel %vm2205, %v4360, %v4362
        %v4364 = vrot.slane %v4316, 1
        %v4365 = vsel %vm2205, %v4362, %v4364
        %v4366 = vrot.slane %v4317, 1
        %v4367 = vsel %vm2205, %v4364, %v4366
        %v4368 = vrot.slane %v4318, 1
        %v4369 = vsel %vm2205, %v4366, %v4368
        %v4370 = vrot.slane %v4319, 1
        %v4371 = vsel %vm2205, %v4368, %v4370
        %v4372 = vrot.slane %v4320, 1
        %v4373 = vsel %vm2205, %v4370, %v4372
        %v4374 = vrot.slane %v4321, 1
        %v4375 = vsel %vm2205, %v4372, %v4374
        %v4380 = vunpack.c.l.b16 %v4322
        %v4381 = vunpack.c.l.b16 %v4323
        %v4382 = vunpack.c.l.b16 %v4324
        %v4383 = vunpack.c.l.b16 %v4325
        %v4384 = vpack.c.b16 %v4381, %v4380
        %v4385 = vpack.c.b16 %v4383, %v4382
        %v4389 = vsel %vm1428, %v4345, 0
        %v4392 = vsel %vm1428, %v4347, 0
        %v4395 = vsel %vm1428, %v4349, 0
        %v4398 = vsel %vm1428, %v4351, 0
        %v4401 = vsel %vm1428, %v4353, 0
        %v4404 = vsel %vm1428, %v4355, 0
        %v4407 = vsel %vm1428, %v4357, 0
        %v4410 = vsel %vm1428, %v4359, 0
        %v4413 = vsel %vm1428, %v4361, 0
        %v4416 = vsel %vm1428, %v4363, 0
        %v4419 = vsel %vm1428, %v4365, 0
        %v4422 = vsel %vm1428, %v4367, 0
        %v4425 = vsel %vm1428, %v4369, 0
        %v4428 = vsel %vm1428, %v4371, 0
        %v4431 = vsel %vm1428, %v4373, 0
        %v4434 = vsel %vm1428, %v4375, 0
        %4436 = vmatpush.bf16.msra.mxu0 0
        %4437 = vmatpush.bf16.msra.mxu0 0
        %4438 = vmatpush.bf16.msra.mxu0 0
        %4439 = vmatpush.bf16.msra.mxu0 0
        %4440 = vmatpush.bf16.msra.mxu0 0
        %4441 = vmatpush.bf16.msra.mxu0 0
        %4442 = vmatpush.bf16.msra.mxu0 %v4385
        %4443 = vmatpush.bf16.msra.mxu0 %v4384
        %4444 = vmatmul.bf16.gmra.mxu0 %v4389
        %v4445 = vpop.f32.mrf.mxu0
        %v4446 = vadd.f32 0.0, %v4445
        %v4447 = vpop.f32.mrf.mxu0
        %v4448 = vadd.f32 0.0, %v4447
        %4449 = vmatmul.bf16.gmra.mxu0 %v4392
        %v4450 = vpop.f32.mrf.mxu0
        %v4451 = vadd.f32 0.0, %v4450
        %v4452 = vpop.f32.mrf.mxu0
        %v4453 = vadd.f32 0.0, %v4452
        %4454 = vmatmul.bf16.gmra.mxu0 %v4395
        %v4455 = vpop.f32.mrf.mxu0
        %v4456 = vadd.f32 0.0, %v4455
        %v4457 = vpop.f32.mrf.mxu0
        %v4458 = vadd.f32 0.0, %v4457
        %4459 = vmatmul.bf16.gmra.mxu0 %v4398
        %v4460 = vpop.f32.mrf.mxu0
        %v4461 = vadd.f32 0.0, %v4460
        %v4462 = vpop.f32.mrf.mxu0
        %v4463 = vadd.f32 0.0, %v4462
        %4464 = vmatmul.bf16.gmra.mxu0 %v4401
        %v4465 = vpop.f32.mrf.mxu0
        %v4466 = vadd.f32 0.0, %v4465
        %v4467 = vpop.f32.mrf.mxu0
        %v4468 = vadd.f32 0.0, %v4467
        %4469 = vmatmul.bf16.gmra.mxu0 %v4404
        %v4470 = vpop.f32.mrf.mxu0
        %v4471 = vadd.f32 0.0, %v4470
        %v4472 = vpop.f32.mrf.mxu0
        %v4473 = vadd.f32 0.0, %v4472
        %4474 = vmatmul.bf16.gmra.mxu0 %v4407
        %v4475 = vpop.f32.mrf.mxu0
        %v4476 = vadd.f32 0.0, %v4475
        %v4477 = vpop.f32.mrf.mxu0
        %v4478 = vadd.f32 0.0, %v4477
        %4479 = vmatmul.bf16.gmra.mxu0 %v4410
        %v4480 = vpop.f32.mrf.mxu0
        %v4481 = vadd.f32 0.0, %v4480
        %v4482 = vpop.f32.mrf.mxu0
        %v4483 = vadd.f32 0.0, %v4482
        %4484 = vmatmul.bf16.gmra.mxu0 %v4413
        %v4485 = vpop.f32.mrf.mxu0
        %v4486 = vadd.f32 0.0, %v4485
        %v4487 = vpop.f32.mrf.mxu0
        %v4488 = vadd.f32 0.0, %v4487
        %4489 = vmatmul.bf16.gmra.mxu0 %v4416
        %v4490 = vpop.f32.mrf.mxu0
        %v4491 = vadd.f32 0.0, %v4490
        %v4492 = vpop.f32.mrf.mxu0
        %v4493 = vadd.f32 0.0, %v4492
        %4494 = vmatmul.bf16.gmra.mxu0 %v4419
        %v4495 = vpop.f32.mrf.mxu0
        %v4496 = vadd.f32 0.0, %v4495
        %v4497 = vpop.f32.mrf.mxu0
        %v4498 = vadd.f32 0.0, %v4497
        %4499 = vmatmul.bf16.gmra.mxu0 %v4422
        %v4500 = vpop.f32.mrf.mxu0
        %v4501 = vadd.f32 0.0, %v4500
        %v4502 = vpop.f32.mrf.mxu0
        %v4503 = vadd.f32 0.0, %v4502
        %4504 = vmatmul.bf16.gmra.mxu0 %v4425
        %v4505 = vpop.f32.mrf.mxu0
        %v4506 = vadd.f32 0.0, %v4505
        %v4507 = vpop.f32.mrf.mxu0
        %v4508 = vadd.f32 0.0, %v4507
        %4509 = vmatmul.bf16.gmra.mxu0 %v4428
        %v4510 = vpop.f32.mrf.mxu0
        %v4511 = vadd.f32 0.0, %v4510
        %v4512 = vpop.f32.mrf.mxu0
        %v4513 = vadd.f32 0.0, %v4512
        %4514 = vmatmul.bf16.gmra.mxu0 %v4431
        %v4515 = vpop.f32.mrf.mxu0
        %v4516 = vadd.f32 0.0, %v4515
        %v4517 = vpop.f32.mrf.mxu0
        %v4518 = vadd.f32 0.0, %v4517
        %4519 = vmatmul.bf16.gmra.mxu0 %v4434
        %v4520 = vpop.f32.mrf.mxu0
        %v4521 = vadd.f32 0.0, %v4520
        %v4522 = vpop.f32.mrf.mxu0
        %v4523 = vadd.f32 0.0, %v4522
        %4524 = vdwg.mxu0
        %v4525 = vadd.f32 %v3822, %v4446
        %v4526 = vadd.f32 %v3823, %v4448
        %v4527 = vadd.f32 %v3824, %v4451
        %v4528 = vadd.f32 %v3825, %v4453
        %v4529 = vadd.f32 %v3826, %v4456
        %v4530 = vadd.f32 %v3827, %v4458
        %v4531 = vadd.f32 %v3828, %v4461
        %v4532 = vadd.f32 %v3829, %v4463
        %v4533 = vadd.f32 %v3830, %v4466
        %v4534 = vadd.f32 %v3831, %v4468
        %v4535 = vadd.f32 %v3832, %v4471
        %v4536 = vadd.f32 %v3833, %v4473
        %v4537 = vadd.f32 %v3834, %v4476
        %v4538 = vadd.f32 %v3835, %v4478
        %v4539 = vadd.f32 %v3836, %v4481
        %v4540 = vadd.f32 %v3837, %v4483
        %v4541 = vadd.f32 %v3838, %v4486
        %v4542 = vadd.f32 %v3839, %v4488
        %v4543 = vadd.f32 %v3840, %v4491
        %v4544 = vadd.f32 %v3841, %v4493
        %v4545 = vadd.f32 %v3842, %v4496
        %v4546 = vadd.f32 %v3843, %v4498
        %v4547 = vadd.f32 %v3844, %v4501
        %v4548 = vadd.f32 %v3845, %v4503
        %v4549 = vadd.f32 %v3846, %v4506
        %v4550 = vadd.f32 %v3847, %v4508
        %v4551 = vadd.f32 %v3848, %v4511
        %v4552 = vadd.f32 %v3849, %v4513
        %v4553 = vadd.f32 %v3850, %v4516
        %v4554 = vadd.f32 %v3851, %v4518
        %v4555 = vadd.f32 %v3852, %v4521
        %v4556 = vadd.f32 %v3853, %v4523
        %v4557 = vld [vmem:[%s276 + $0x10] sm:$0xf]
        %v4558 = vld [vmem:[%s276 + $0x14] sm:$0xf]
        %v4559 = vld [vmem:[%s276 + $0x18] sm:$0xf]
        %v4560 = vld [vmem:[%s276 + $0x1c] sm:$0xf]
        %v4561 = vld [vmem:[%s276 + $0x20] sm:$0xf]
        %v4562 = vld [vmem:[%s276 + $0x24] sm:$0xf]
        %v4563 = vld [vmem:[%s276 + $0x28] sm:$0xf]
        %v4564 = vld [vmem:[%s276 + $0x2c] sm:$0xf]
        %v4565 = vld [vmem:[%s276 + $0x30] sm:$0xf]
        %v4566 = vld [vmem:[%s276 + $0x34] sm:$0xf]
        %v4567 = vld [vmem:[%s276 + $0x38] sm:$0xf]
        %v4568 = vld [vmem:[%s276 + $0x3c] sm:$0xf]
        %v4569 = vld [vmem:[%s276 + $0x40] sm:$0xf]
        %v4570 = vld [vmem:[%s276 + $0x44] sm:$0xf]
        %v4571 = vld [vmem:[%s276 + $0x48] sm:$0xf]
        %v4572 = vld [vmem:[%s276 + $0x4c] sm:$0xf]
        %v4573 = vld [vmem:[%s276 + $0x50] sm:$0xf]
        %v4574 = vld [vmem:[%s276 + $0x54] sm:$0xf]
        %v4575 = vld [vmem:[%s276 + $0x58] sm:$0xf]
        %v4576 = vld [vmem:[%s276 + $0x5c] sm:$0xf]
        %v4577 = vld [vmem:[%s276 + $0x60] sm:$0xf]
        %v4578 = vld [vmem:[%s276 + $0x64] sm:$0xf]
        %v4579 = vld [vmem:[%s276 + $0x68] sm:$0xf]
        %v4580 = vld [vmem:[%s276 + $0x6c] sm:$0xf]
        %v4581 = vld [vmem:[%s276 + $0x70] sm:$0xf]
        %v4582 = vld [vmem:[%s276 + $0x74] sm:$0xf]
        %v4583 = vld [vmem:[%s276 + $0x78] sm:$0xf]
        %v4584 = vld [vmem:[%s276 + $0x7c] sm:$0xf]
        %v4585 = vld [vmem:[%s276 + $0x80] sm:$0xf]
        %v4586 = vld [vmem:[%s276 + $0x84] sm:$0xf]
        %v4587 = vld [vmem:[%s276 + $0x88] sm:$0xf]
        %v4588 = vld [vmem:[%s276 + $0x8c] sm:$0xf]
        %4589 = vset.pattern.permute.xlu0 6
        %4590 = vperm.xlu0 %4589, %v310
        %v4591 = vpop.permute.xlu0 %4590
        %v4594 = vunpack.c.l.s4 839922192
        %v4595 = vunpack.c.0.s8 %v4594
        %v4596 = vperm.slane %v4591, %v4595
        %4597 = vset.pattern.permute.xlu0 6
        %4598 = vperm.xlu0 %4597, %v311
        %v4599 = vpop.permute.xlu0 %4598
        %v4602 = vunpack.c.l.s4 839922192
        %v4603 = vunpack.c.0.s8 %v4602
        %v4604 = vperm.slane %v4599, %v4603
        %4605 = vset.pattern.permute.xlu0 6
        %4606 = vperm.xlu0 %4605, %v312
        %v4607 = vpop.permute.xlu0 %4606
        %v4610 = vunpack.c.l.s4 839922192
        %v4611 = vunpack.c.0.s8 %v4610
        %v4612 = vperm.slane %v4607, %v4611
        %4613 = vset.pattern.permute.xlu0 6
        %4614 = vperm.xlu0 %4613, %v313
        %v4615 = vpop.permute.xlu0 %4614
        %v4618 = vunpack.c.l.s4 839922192
        %v4619 = vunpack.c.0.s8 %v4618
        %v4620 = vperm.slane %v4615, %v4619
        %4621 = vset.pattern.permute.xlu0 6
        %4622 = vperm.xlu0 %4621, %v314
        %v4623 = vpop.permute.xlu0 %4622
        %v4626 = vunpack.c.l.s4 839922192
        %v4627 = vunpack.c.0.s8 %v4626
        %v4628 = vperm.slane %v4623, %v4627
        %4629 = vset.pattern.permute.xlu0 6
        %4630 = vperm.xlu0 %4629, %v315
        %v4631 = vpop.permute.xlu0 %4630
        %v4634 = vunpack.c.l.s4 839922192
        %v4635 = vunpack.c.0.s8 %v4634
        %v4636 = vperm.slane %v4631, %v4635
        %4637 = vset.pattern.permute.xlu0 6
        %4638 = vperm.xlu0 %4637, %v316
        %v4639 = vpop.permute.xlu0 %4638
        %v4642 = vunpack.c.l.s4 839922192
        %v4643 = vunpack.c.0.s8 %v4642
        %v4644 = vperm.slane %v4639, %v4643
        %4645 = vset.pattern.permute.xlu0 6
        %4646 = vperm.xlu0 %4645, %v317
        %v4647 = vpop.permute.xlu0 %4646
        %v4650 = vunpack.c.l.s4 839922192
        %v4651 = vunpack.c.0.s8 %v4650
        %v4652 = vperm.slane %v4647, %v4651
        %4653 = vset.pattern.permute.xlu0 6
        %4654 = vperm.xlu0 %4653, %v318
        %v4655 = vpop.permute.xlu0 %4654
        %v4658 = vunpack.c.l.s4 839922192
        %v4659 = vunpack.c.0.s8 %v4658
        %v4660 = vperm.slane %v4655, %v4659
        %4661 = vset.pattern.permute.xlu0 6
        %4662 = vperm.xlu0 %4661, %v319
        %v4663 = vpop.permute.xlu0 %4662
        %v4666 = vunpack.c.l.s4 839922192
        %v4667 = vunpack.c.0.s8 %v4666
        %v4668 = vperm.slane %v4663, %v4667
        %4669 = vset.pattern.permute.xlu0 6
        %4670 = vperm.xlu0 %4669, %v320
        %v4671 = vpop.permute.xlu0 %4670
        %v4674 = vunpack.c.l.s4 839922192
        %v4675 = vunpack.c.0.s8 %v4674
        %v4676 = vperm.slane %v4671, %v4675
        %4677 = vset.pattern.permute.xlu0 6
        %4678 = vperm.xlu0 %4677, %v321
        %v4679 = vpop.permute.xlu0 %4678
        %v4682 = vunpack.c.l.s4 839922192
        %v4683 = vunpack.c.0.s8 %v4682
        %v4684 = vperm.slane %v4679, %v4683
        %4685 = vset.pattern.permute.xlu0 6
        %4686 = vperm.xlu0 %4685, %v322
        %v4687 = vpop.permute.xlu0 %4686
        %v4690 = vunpack.c.l.s4 839922192
        %v4691 = vunpack.c.0.s8 %v4690
        %v4692 = vperm.slane %v4687, %v4691
        %4693 = vset.pattern.permute.xlu0 6
        %4694 = vperm.xlu0 %4693, %v323
        %v4695 = vpop.permute.xlu0 %4694
        %v4698 = vunpack.c.l.s4 839922192
        %v4699 = vunpack.c.0.s8 %v4698
        %v4700 = vperm.slane %v4695, %v4699
        %4701 = vset.pattern.permute.xlu0 6
        %4702 = vperm.xlu0 %4701, %v324
        %v4703 = vpop.permute.xlu0 %4702
        %v4706 = vunpack.c.l.s4 839922192
        %v4707 = vunpack.c.0.s8 %v4706
        %v4708 = vperm.slane %v4703, %v4707
        %4709 = vset.pattern.permute.xlu0 6
        %4710 = vperm.xlu0 %4709, %v325
        %v4711 = vpop.permute.xlu0 %4710
        %v4714 = vunpack.c.l.s4 839922192
        %v4715 = vunpack.c.0.s8 %v4714
        %v4716 = vperm.slane %v4711, %v4715
        %4717 = vset.pattern.permute.xlu0 6
        %4718 = vperm.xlu0 %4717, %v326
        %v4719 = vpop.permute.xlu0 %4718
        %v4722 = vunpack.c.l.s4 839922192
        %v4723 = vunpack.c.0.s8 %v4722
        %v4724 = vperm.slane %v4719, %v4723
        %4725 = vset.pattern.permute.xlu0 6
        %4726 = vperm.xlu0 %4725, %v327
        %v4727 = vpop.permute.xlu0 %4726
        %v4730 = vunpack.c.l.s4 839922192
        %v4731 = vunpack.c.0.s8 %v4730
        %v4732 = vperm.slane %v4727, %v4731
        %4733 = vset.pattern.permute.xlu0 6
        %4734 = vperm.xlu0 %4733, %v328
        %v4735 = vpop.permute.xlu0 %4734
        %v4738 = vunpack.c.l.s4 839922192
        %v4739 = vunpack.c.0.s8 %v4738
        %v4740 = vperm.slane %v4735, %v4739
        %4741 = vset.pattern.permute.xlu0 6
        %4742 = vperm.xlu0 %4741, %v329
        %v4743 = vpop.permute.xlu0 %4742
        %v4746 = vunpack.c.l.s4 839922192
        %v4747 = vunpack.c.0.s8 %v4746
        %v4748 = vperm.slane %v4743, %v4747
        %4749 = vset.pattern.permute.xlu0 6
        %4750 = vperm.xlu0 %4749, %v330
        %v4751 = vpop.permute.xlu0 %4750
        %v4754 = vunpack.c.l.s4 839922192
        %v4755 = vunpack.c.0.s8 %v4754
        %v4756 = vperm.slane %v4751, %v4755
        %4757 = vset.pattern.permute.xlu0 6
        %4758 = vperm.xlu0 %4757, %v331
        %v4759 = vpop.permute.xlu0 %4758
        %v4762 = vunpack.c.l.s4 839922192
        %v4763 = vunpack.c.0.s8 %v4762
        %v4764 = vperm.slane %v4759, %v4763
        %4765 = vset.pattern.permute.xlu0 6
        %4766 = vperm.xlu0 %4765, %v332
        %v4767 = vpop.permute.xlu0 %4766
        %v4770 = vunpack.c.l.s4 839922192
        %v4771 = vunpack.c.0.s8 %v4770
        %v4772 = vperm.slane %v4767, %v4771
        %4773 = vset.pattern.permute.xlu0 6
        %4774 = vperm.xlu0 %4773, %v333
        %v4775 = vpop.permute.xlu0 %4774
        %v4778 = vunpack.c.l.s4 839922192
        %v4779 = vunpack.c.0.s8 %v4778
        %v4780 = vperm.slane %v4775, %v4779
        %4781 = vset.pattern.permute.xlu0 6
        %4782 = vperm.xlu0 %4781, %v334
        %v4783 = vpop.permute.xlu0 %4782
        %v4786 = vunpack.c.l.s4 839922192
        %v4787 = vunpack.c.0.s8 %v4786
        %v4788 = vperm.slane %v4783, %v4787
        %4789 = vset.pattern.permute.xlu0 6
        %4790 = vperm.xlu0 %4789, %v335
        %v4791 = vpop.permute.xlu0 %4790
        %v4794 = vunpack.c.l.s4 839922192
        %v4795 = vunpack.c.0.s8 %v4794
        %v4796 = vperm.slane %v4791, %v4795
        %4797 = vset.pattern.permute.xlu0 6
        %4798 = vperm.xlu0 %4797, %v336
        %v4799 = vpop.permute.xlu0 %4798
        %v4802 = vunpack.c.l.s4 839922192
        %v4803 = vunpack.c.0.s8 %v4802
        %v4804 = vperm.slane %v4799, %v4803
        %4805 = vset.pattern.permute.xlu0 6
        %4806 = vperm.xlu0 %4805, %v337
        %v4807 = vpop.permute.xlu0 %4806
        %v4810 = vunpack.c.l.s4 839922192
        %v4811 = vunpack.c.0.s8 %v4810
        %v4812 = vperm.slane %v4807, %v4811
        %4813 = vset.pattern.permute.xlu0 6
        %4814 = vperm.xlu0 %4813, %v338
        %v4815 = vpop.permute.xlu0 %4814
        %v4818 = vunpack.c.l.s4 839922192
        %v4819 = vunpack.c.0.s8 %v4818
        %v4820 = vperm.slane %v4815, %v4819
        %4821 = vset.pattern.permute.xlu0 6
        %4822 = vperm.xlu0 %4821, %v339
        %v4823 = vpop.permute.xlu0 %4822
        %v4826 = vunpack.c.l.s4 839922192
        %v4827 = vunpack.c.0.s8 %v4826
        %v4828 = vperm.slane %v4823, %v4827
        %4829 = vset.pattern.permute.xlu0 6
        %4830 = vperm.xlu0 %4829, %v340
        %v4831 = vpop.permute.xlu0 %4830
        %v4834 = vunpack.c.l.s4 839922192
        %v4835 = vunpack.c.0.s8 %v4834
        %v4836 = vperm.slane %v4831, %v4835
        %4837 = vset.pattern.permute.xlu0 6
        %4838 = vperm.xlu0 %4837, %v341
        %v4839 = vpop.permute.xlu0 %4838
        %v4842 = vunpack.c.l.s4 839922192
        %v4843 = vunpack.c.0.s8 %v4842
        %v4844 = vperm.slane %v4839, %v4843
        %v4845 = vunpack.c.l.bf16 %v4557
        %v4846 = vunpack.c.l.bf16 %v4558
        %v4847 = vunpack.c.l.bf16 %v4559
        %v4848 = vunpack.c.l.bf16 %v4560
        %v4849 = vunpack.c.l.bf16 %v4561
        %v4850 = vunpack.c.l.bf16 %v4562
        %v4851 = vunpack.c.l.bf16 %v4563
        %v4852 = vunpack.c.l.bf16 %v4564
        %v4853 = vunpack.c.l.bf16 %v4565
        %v4854 = vunpack.c.l.bf16 %v4566
        %v4855 = vunpack.c.l.bf16 %v4567
        %v4856 = vunpack.c.l.bf16 %v4568
        %v4857 = vunpack.c.l.bf16 %v4569
        %v4858 = vunpack.c.l.bf16 %v4570
        %v4859 = vunpack.c.l.bf16 %v4571
        %v4860 = vunpack.c.l.bf16 %v4572
        %v4861 = vunpack.c.l.bf16 %v4573
        %v4862 = vunpack.c.l.bf16 %v4574
        %v4863 = vunpack.c.l.bf16 %v4575
        %v4864 = vunpack.c.l.bf16 %v4576
        %v4865 = vunpack.c.l.bf16 %v4577
        %v4866 = vunpack.c.l.bf16 %v4578
        %v4867 = vunpack.c.l.bf16 %v4579
        %v4868 = vunpack.c.l.bf16 %v4580
        %v4869 = vunpack.c.l.bf16 %v4581
        %v4870 = vunpack.c.l.bf16 %v4582
        %v4871 = vunpack.c.l.bf16 %v4583
        %v4872 = vunpack.c.l.bf16 %v4584
        %v4873 = vunpack.c.l.bf16 %v4585
        %v4874 = vunpack.c.l.bf16 %v4586
        %v4875 = vunpack.c.l.bf16 %v4587
        %v4876 = vunpack.c.l.bf16 %v4588
        %v4877 = vunpack.c.l.bf16 %v4596
        %v4878 = vunpack.c.l.bf16 %v4604
        %v4879 = vunpack.c.l.bf16 %v4612
        %v4880 = vunpack.c.l.bf16 %v4620
        %v4881 = vunpack.c.l.bf16 %v4628
        %v4882 = vunpack.c.l.bf16 %v4636
        %v4883 = vunpack.c.l.bf16 %v4644
        %v4884 = vunpack.c.l.bf16 %v4652
        %v4885 = vunpack.c.l.bf16 %v4660
        %v4886 = vunpack.c.l.bf16 %v4668
        %v4887 = vunpack.c.l.bf16 %v4676
        %v4888 = vunpack.c.l.bf16 %v4684
        %v4889 = vunpack.c.l.bf16 %v4692
        %v4890 = vunpack.c.l.bf16 %v4700
        %v4891 = vunpack.c.l.bf16 %v4708
        %v4892 = vunpack.c.l.bf16 %v4716
        %v4893 = vunpack.c.l.bf16 %v4724
        %v4894 = vunpack.c.l.bf16 %v4732
        %v4895 = vunpack.c.l.bf16 %v4740
        %v4896 = vunpack.c.l.bf16 %v4748
        %v4897 = vunpack.c.l.bf16 %v4756
        %v4898 = vunpack.c.l.bf16 %v4764
        %v4899 = vunpack.c.l.bf16 %v4772
        %v4900 = vunpack.c.l.bf16 %v4780
        %v4901 = vunpack.c.l.bf16 %v4788
        %v4902 = vunpack.c.l.bf16 %v4796
        %v4903 = vunpack.c.l.bf16 %v4804
        %v4904 = vunpack.c.l.bf16 %v4812
        %v4905 = vunpack.c.l.bf16 %v4820
        %v4906 = vunpack.c.l.bf16 %v4828
        %v4907 = vunpack.c.l.bf16 %v4836
        %v4908 = vunpack.c.l.bf16 %v4844
        %v4909 = vmul.f32 %v4845, %v4877
        %v4910 = vmul.f32 %v4846, %v4878
        %v4911 = vmul.f32 %v4847, %v4879
        %v4912 = vmul.f32 %v4848, %v4880
        %v4913 = vmul.f32 %v4849, %v4881
        %v4914 = vmul.f32 %v4850, %v4882
        %v4915 = vmul.f32 %v4851, %v4883
        %v4916 = vmul.f32 %v4852, %v4884
        %v4917 = vmul.f32 %v4853, %v4885
        %v4918 = vmul.f32 %v4854, %v4886
        %v4919 = vmul.f32 %v4855, %v4887
        %v4920 = vmul.f32 %v4856, %v4888
        %v4921 = vmul.f32 %v4857, %v4889
        %v4922 = vmul.f32 %v4858, %v4890
        %v4923 = vmul.f32 %v4859, %v4891
        %v4924 = vmul.f32 %v4860, %v4892
        %v4925 = vmul.f32 %v4861, %v4893
        %v4926 = vmul.f32 %v4862, %v4894
        %v4927 = vmul.f32 %v4863, %v4895
        %v4928 = vmul.f32 %v4864, %v4896
        %v4929 = vmul.f32 %v4865, %v4897
        %v4930 = vmul.f32 %v4866, %v4898
        %v4931 = vmul.f32 %v4867, %v4899
        %v4932 = vmul.f32 %v4868, %v4900
        %v4933 = vmul.f32 %v4869, %v4901
        %v4934 = vmul.f32 %v4870, %v4902
        %v4935 = vmul.f32 %v4871, %v4903
        %v4936 = vmul.f32 %v4872, %v4904
        %v4937 = vmul.f32 %v4873, %v4905
        %v4938 = vmul.f32 %v4874, %v4906
        %v4939 = vmul.f32 %v4875, %v4907
        %v4940 = vmul.f32 %v4876, %v4908
        %v4941 = vpack.c.bf16 %v4910, %v4909
        %v4942 = vpack.c.bf16 %v4912, %v4911
        %v4943 = vpack.c.bf16 %v4914, %v4913
        %v4944 = vpack.c.bf16 %v4916, %v4915
        %v4945 = vpack.c.bf16 %v4918, %v4917
        %v4946 = vpack.c.bf16 %v4920, %v4919
        %v4947 = vpack.c.bf16 %v4922, %v4921
        %v4948 = vpack.c.bf16 %v4924, %v4923
        %v4949 = vpack.c.bf16 %v4926, %v4925
        %v4950 = vpack.c.bf16 %v4928, %v4927
        %v4951 = vpack.c.bf16 %v4930, %v4929
        %v4952 = vpack.c.bf16 %v4932, %v4931
        %v4953 = vpack.c.bf16 %v4934, %v4933
        %v4954 = vpack.c.bf16 %v4936, %v4935
        %v4955 = vpack.c.bf16 %v4938, %v4937
        %v4956 = vpack.c.bf16 %v4940, %v4939
        %v4957 = vld [vmem:[%s2 + $0x60] sm:$0xf]
        %v4958 = vld [vmem:[%s2 + $0x64] sm:$0xf]
        %v4959 = vld [vmem:[%s2 + $0x68] sm:$0xf]
        %v4960 = vld [vmem:[%s2 + $0x6c] sm:$0xf]
        %v4965 = vunpack.c.l.b16 %v4957
        %v4966 = vunpack.c.l.b16 %v4958
        %v4967 = vunpack.c.l.b16 %v4959
        %v4968 = vunpack.c.l.b16 %v4960
        %v4969 = vpack.c.b16 %v4966, %v4965
        %v4970 = vpack.c.b16 %v4968, %v4967
        %v4974 = vsel %vm1428, %v4941, 0
        %v4977 = vsel %vm1428, %v4942, 0
        %v4980 = vsel %vm1428, %v4943, 0
        %v4983 = vsel %vm1428, %v4944, 0
        %v4986 = vsel %vm1428, %v4945, 0
        %v4989 = vsel %vm1428, %v4946, 0
        %v4992 = vsel %vm1428, %v4947, 0
        %v4995 = vsel %vm1428, %v4948, 0
        %v4998 = vsel %vm1428, %v4949, 0
        %v5001 = vsel %vm1428, %v4950, 0
        %v5004 = vsel %vm1428, %v4951, 0
        %v5007 = vsel %vm1428, %v4952, 0
        %v5010 = vsel %vm1428, %v4953, 0
        %v5013 = vsel %vm1428, %v4954, 0
        %v5016 = vsel %vm1428, %v4955, 0
        %v5019 = vsel %vm1428, %v4956, 0
        %5021 = vmatpush.bf16.msra.mxu0 0
        %5022 = vmatpush.bf16.msra.mxu0 0
        %5023 = vmatpush.bf16.msra.mxu0 0
        %5024 = vmatpush.bf16.msra.mxu0 0
        %5025 = vmatpush.bf16.msra.mxu0 0
        %5026 = vmatpush.bf16.msra.mxu0 0
        %5027 = vmatpush.bf16.msra.mxu0 %v4970
        %5028 = vmatpush.bf16.msra.mxu0 %v4969
        %5029 = vmatmul.bf16.gmra.mxu0 %v4974
        %v5030 = vpop.f32.mrf.mxu0
        %v5031 = vadd.f32 0.0, %v5030
        %v5032 = vpop.f32.mrf.mxu0
        %v5033 = vadd.f32 0.0, %v5032
        %5034 = vmatmul.bf16.gmra.mxu0 %v4977
        %v5035 = vpop.f32.mrf.mxu0
        %v5036 = vadd.f32 0.0, %v5035
        %v5037 = vpop.f32.mrf.mxu0
        %v5038 = vadd.f32 0.0, %v5037
        %5039 = vmatmul.bf16.gmra.mxu0 %v4980
        %v5040 = vpop.f32.mrf.mxu0
        %v5041 = vadd.f32 0.0, %v5040
        %v5042 = vpop.f32.mrf.mxu0
        %v5043 = vadd.f32 0.0, %v5042
        %5044 = vmatmul.bf16.gmra.mxu0 %v4983
        %v5045 = vpop.f32.mrf.mxu0
        %v5046 = vadd.f32 0.0, %v5045
        %v5047 = vpop.f32.mrf.mxu0
        %v5048 = vadd.f32 0.0, %v5047
        %5049 = vmatmul.bf16.gmra.mxu0 %v4986
        %v5050 = vpop.f32.mrf.mxu0
        %v5051 = vadd.f32 0.0, %v5050
        %v5052 = vpop.f32.mrf.mxu0
        %v5053 = vadd.f32 0.0, %v5052
        %5054 = vmatmul.bf16.gmra.mxu0 %v4989
        %v5055 = vpop.f32.mrf.mxu0
        %v5056 = vadd.f32 0.0, %v5055
        %v5057 = vpop.f32.mrf.mxu0
        %v5058 = vadd.f32 0.0, %v5057
        %5059 = vmatmul.bf16.gmra.mxu0 %v4992
        %v5060 = vpop.f32.mrf.mxu0
        %v5061 = vadd.f32 0.0, %v5060
        %v5062 = vpop.f32.mrf.mxu0
        %v5063 = vadd.f32 0.0, %v5062
        %5064 = vmatmul.bf16.gmra.mxu0 %v4995
        %v5065 = vpop.f32.mrf.mxu0
        %v5066 = vadd.f32 0.0, %v5065
        %v5067 = vpop.f32.mrf.mxu0
        %v5068 = vadd.f32 0.0, %v5067
        %5069 = vmatmul.bf16.gmra.mxu0 %v4998
        %v5070 = vpop.f32.mrf.mxu0
        %v5071 = vadd.f32 0.0, %v5070
        %v5072 = vpop.f32.mrf.mxu0
        %v5073 = vadd.f32 0.0, %v5072
        %5074 = vmatmul.bf16.gmra.mxu0 %v5001
        %v5075 = vpop.f32.mrf.mxu0
        %v5076 = vadd.f32 0.0, %v5075
        %v5077 = vpop.f32.mrf.mxu0
        %v5078 = vadd.f32 0.0, %v5077
        %5079 = vmatmul.bf16.gmra.mxu0 %v5004
        %v5080 = vpop.f32.mrf.mxu0
        %v5081 = vadd.f32 0.0, %v5080
        %v5082 = vpop.f32.mrf.mxu0
        %v5083 = vadd.f32 0.0, %v5082
        %5084 = vmatmul.bf16.gmra.mxu0 %v5007
        %v5085 = vpop.f32.mrf.mxu0
        %v5086 = vadd.f32 0.0, %v5085
        %v5087 = vpop.f32.mrf.mxu0
        %v5088 = vadd.f32 0.0, %v5087
        %5089 = vmatmul.bf16.gmra.mxu0 %v5010
        %v5090 = vpop.f32.mrf.mxu0
        %v5091 = vadd.f32 0.0, %v5090
        %v5092 = vpop.f32.mrf.mxu0
        %v5093 = vadd.f32 0.0, %v5092
        %5094 = vmatmul.bf16.gmra.mxu0 %v5013
        %v5095 = vpop.f32.mrf.mxu0
        %v5096 = vadd.f32 0.0, %v5095
        %v5097 = vpop.f32.mrf.mxu0
        %v5098 = vadd.f32 0.0, %v5097
        %5099 = vmatmul.bf16.gmra.mxu0 %v5016
        %v5100 = vpop.f32.mrf.mxu0
        %v5101 = vadd.f32 0.0, %v5100
        %v5102 = vpop.f32.mrf.mxu0
        %v5103 = vadd.f32 0.0, %v5102
        %5104 = vmatmul.bf16.gmra.mxu0 %v5019
        %v5105 = vpop.f32.mrf.mxu0
        %v5106 = vadd.f32 0.0, %v5105
        %v5107 = vpop.f32.mrf.mxu0
        %v5108 = vadd.f32 0.0, %v5107
        %5109 = vdwg.mxu0
        %v5110 = vadd.f32 %v4525, %v5031
        %v5111 = vadd.f32 %v4526, %v5033
        %v5112 = vadd.f32 %v4527, %v5036
        %v5113 = vadd.f32 %v4528, %v5038
        %v5114 = vadd.f32 %v4529, %v5041
        %v5115 = vadd.f32 %v4530, %v5043
        %v5116 = vadd.f32 %v4531, %v5046
        %v5117 = vadd.f32 %v4532, %v5048
        %v5118 = vadd.f32 %v4533, %v5051
        %v5119 = vadd.f32 %v4534, %v5053
        %v5120 = vadd.f32 %v4535, %v5056
        %v5121 = vadd.f32 %v4536, %v5058
        %v5122 = vadd.f32 %v4537, %v5061
        %v5123 = vadd.f32 %v4538, %v5063
        %v5124 = vadd.f32 %v4539, %v5066
        %v5125 = vadd.f32 %v4540, %v5068
        %v5126 = vadd.f32 %v4541, %v5071
        %v5127 = vadd.f32 %v4542, %v5073
        %v5128 = vadd.f32 %v4543, %v5076
        %v5129 = vadd.f32 %v4544, %v5078
        %v5130 = vadd.f32 %v4545, %v5081
        %v5131 = vadd.f32 %v4546, %v5083
        %v5132 = vadd.f32 %v4547, %v5086
        %v5133 = vadd.f32 %v4548, %v5088
        %v5134 = vadd.f32 %v4549, %v5091
        %v5135 = vadd.f32 %v4550, %v5093
        %v5136 = vadd.f32 %v4551, %v5096
        %v5137 = vadd.f32 %v4552, %v5098
        %v5138 = vadd.f32 %v4553, %v5101
        %v5139 = vadd.f32 %v4554, %v5103
        %v5140 = vadd.f32 %v4555, %v5106
        %v5141 = vadd.f32 %v4556, %v5108
        %v5142 = vld [vmem:[%s276 + $0x10] sm:$0xf]
        %v5143 = vld [vmem:[%s276 + $0x14] sm:$0xf]
        %v5144 = vld [vmem:[%s276 + $0x18] sm:$0xf]
        %v5145 = vld [vmem:[%s276 + $0x1c] sm:$0xf]
        %v5146 = vld [vmem:[%s276 + $0x20] sm:$0xf]
        %v5147 = vld [vmem:[%s276 + $0x24] sm:$0xf]
        %v5148 = vld [vmem:[%s276 + $0x28] sm:$0xf]
        %v5149 = vld [vmem:[%s276 + $0x2c] sm:$0xf]
        %v5150 = vld [vmem:[%s276 + $0x30] sm:$0xf]
        %v5151 = vld [vmem:[%s276 + $0x34] sm:$0xf]
        %v5152 = vld [vmem:[%s276 + $0x38] sm:$0xf]
        %v5153 = vld [vmem:[%s276 + $0x3c] sm:$0xf]
        %v5154 = vld [vmem:[%s276 + $0x40] sm:$0xf]
        %v5155 = vld [vmem:[%s276 + $0x44] sm:$0xf]
        %v5156 = vld [vmem:[%s276 + $0x48] sm:$0xf]
        %v5157 = vld [vmem:[%s276 + $0x4c] sm:$0xf]
        %v5158 = vld [vmem:[%s276 + $0x50] sm:$0xf]
        %v5159 = vld [vmem:[%s276 + $0x54] sm:$0xf]
        %v5160 = vld [vmem:[%s276 + $0x58] sm:$0xf]
        %v5161 = vld [vmem:[%s276 + $0x5c] sm:$0xf]
        %v5162 = vld [vmem:[%s276 + $0x60] sm:$0xf]
        %v5163 = vld [vmem:[%s276 + $0x64] sm:$0xf]
        %v5164 = vld [vmem:[%s276 + $0x68] sm:$0xf]
        %v5165 = vld [vmem:[%s276 + $0x6c] sm:$0xf]
        %v5166 = vld [vmem:[%s276 + $0x70] sm:$0xf]
        %v5167 = vld [vmem:[%s276 + $0x74] sm:$0xf]
        %v5168 = vld [vmem:[%s276 + $0x78] sm:$0xf]
        %v5169 = vld [vmem:[%s276 + $0x7c] sm:$0xf]
        %v5170 = vld [vmem:[%s276 + $0x80] sm:$0xf]
        %v5171 = vld [vmem:[%s276 + $0x84] sm:$0xf]
        %v5172 = vld [vmem:[%s276 + $0x88] sm:$0xf]
        %v5173 = vld [vmem:[%s276 + $0x8c] sm:$0xf]
        %v5174 = vld [vmem:[%s276 + $0x90] sm:$0x1]
        %5175 = vset.pattern.permute.xlu0 7
        %5176 = vperm.xlu0 %5175, %v310
        %v5177 = vpop.permute.xlu0 %5176
        %v5180 = vunpack.c.l.s4 839922192
        %v5181 = vunpack.c.0.s8 %v5180
        %v5182 = vperm.slane %v5177, %v5181
        %5183 = vset.pattern.permute.xlu0 7
        %5184 = vperm.xlu0 %5183, %v311
        %v5185 = vpop.permute.xlu0 %5184
        %v5188 = vunpack.c.l.s4 839922192
        %v5189 = vunpack.c.0.s8 %v5188
        %v5190 = vperm.slane %v5185, %v5189
        %5191 = vset.pattern.permute.xlu0 7
        %5192 = vperm.xlu0 %5191, %v312
        %v5193 = vpop.permute.xlu0 %5192
        %v5196 = vunpack.c.l.s4 839922192
        %v5197 = vunpack.c.0.s8 %v5196
        %v5198 = vperm.slane %v5193, %v5197
        %5199 = vset.pattern.permute.xlu0 7
        %5200 = vperm.xlu0 %5199, %v313
        %v5201 = vpop.permute.xlu0 %5200
        %v5204 = vunpack.c.l.s4 839922192
        %v5205 = vunpack.c.0.s8 %v5204
        %v5206 = vperm.slane %v5201, %v5205
        %5207 = vset.pattern.permute.xlu0 7
        %5208 = vperm.xlu0 %5207, %v314
        %v5209 = vpop.permute.xlu0 %5208
        %v5212 = vunpack.c.l.s4 839922192
        %v5213 = vunpack.c.0.s8 %v5212
        %v5214 = vperm.slane %v5209, %v5213
        %5215 = vset.pattern.permute.xlu0 7
        %5216 = vperm.xlu0 %5215, %v315
        %v5217 = vpop.permute.xlu0 %5216
        %v5220 = vunpack.c.l.s4 839922192
        %v5221 = vunpack.c.0.s8 %v5220
        %v5222 = vperm.slane %v5217, %v5221
        %5223 = vset.pattern.permute.xlu0 7
        %5224 = vperm.xlu0 %5223, %v316
        %v5225 = vpop.permute.xlu0 %5224
        %v5228 = vunpack.c.l.s4 839922192
        %v5229 = vunpack.c.0.s8 %v5228
        %v5230 = vperm.slane %v5225, %v5229
        %5231 = vset.pattern.permute.xlu0 7
        %5232 = vperm.xlu0 %5231, %v317
        %v5233 = vpop.permute.xlu0 %5232
        %v5236 = vunpack.c.l.s4 839922192
        %v5237 = vunpack.c.0.s8 %v5236
        %v5238 = vperm.slane %v5233, %v5237
        %5239 = vset.pattern.permute.xlu0 7
        %5240 = vperm.xlu0 %5239, %v318
        %v5241 = vpop.permute.xlu0 %5240
        %v5244 = vunpack.c.l.s4 839922192
        %v5245 = vunpack.c.0.s8 %v5244
        %v5246 = vperm.slane %v5241, %v5245
        %5247 = vset.pattern.permute.xlu0 7
        %5248 = vperm.xlu0 %5247, %v319
        %v5249 = vpop.permute.xlu0 %5248
        %v5252 = vunpack.c.l.s4 839922192
        %v5253 = vunpack.c.0.s8 %v5252
        %v5254 = vperm.slane %v5249, %v5253
        %5255 = vset.pattern.permute.xlu0 7
        %5256 = vperm.xlu0 %5255, %v320
        %v5257 = vpop.permute.xlu0 %5256
        %v5260 = vunpack.c.l.s4 839922192
        %v5261 = vunpack.c.0.s8 %v5260
        %v5262 = vperm.slane %v5257, %v5261
        %5263 = vset.pattern.permute.xlu0 7
        %5264 = vperm.xlu0 %5263, %v321
        %v5265 = vpop.permute.xlu0 %5264
        %v5268 = vunpack.c.l.s4 839922192
        %v5269 = vunpack.c.0.s8 %v5268
        %v5270 = vperm.slane %v5265, %v5269
        %5271 = vset.pattern.permute.xlu0 7
        %5272 = vperm.xlu0 %5271, %v322
        %v5273 = vpop.permute.xlu0 %5272
        %v5276 = vunpack.c.l.s4 839922192
        %v5277 = vunpack.c.0.s8 %v5276
        %v5278 = vperm.slane %v5273, %v5277
        %5279 = vset.pattern.permute.xlu0 7
        %5280 = vperm.xlu0 %5279, %v323
        %v5281 = vpop.permute.xlu0 %5280
        %v5284 = vunpack.c.l.s4 839922192
        %v5285 = vunpack.c.0.s8 %v5284
        %v5286 = vperm.slane %v5281, %v5285
        %5287 = vset.pattern.permute.xlu0 7
        %5288 = vperm.xlu0 %5287, %v324
        %v5289 = vpop.permute.xlu0 %5288
        %v5292 = vunpack.c.l.s4 839922192
        %v5293 = vunpack.c.0.s8 %v5292
        %v5294 = vperm.slane %v5289, %v5293
        %5295 = vset.pattern.permute.xlu0 7
        %5296 = vperm.xlu0 %5295, %v325
        %v5297 = vpop.permute.xlu0 %5296
        %v5300 = vunpack.c.l.s4 839922192
        %v5301 = vunpack.c.0.s8 %v5300
        %v5302 = vperm.slane %v5297, %v5301
        %5303 = vset.pattern.permute.xlu0 7
        %5304 = vperm.xlu0 %5303, %v326
        %v5305 = vpop.permute.xlu0 %5304
        %v5308 = vunpack.c.l.s4 839922192
        %v5309 = vunpack.c.0.s8 %v5308
        %v5310 = vperm.slane %v5305, %v5309
        %5311 = vset.pattern.permute.xlu0 7
        %5312 = vperm.xlu0 %5311, %v327
        %v5313 = vpop.permute.xlu0 %5312
        %v5316 = vunpack.c.l.s4 839922192
        %v5317 = vunpack.c.0.s8 %v5316
        %v5318 = vperm.slane %v5313, %v5317
        %5319 = vset.pattern.permute.xlu0 7
        %5320 = vperm.xlu0 %5319, %v328
        %v5321 = vpop.permute.xlu0 %5320
        %v5324 = vunpack.c.l.s4 839922192
        %v5325 = vunpack.c.0.s8 %v5324
        %v5326 = vperm.slane %v5321, %v5325
        %5327 = vset.pattern.permute.xlu0 7
        %5328 = vperm.xlu0 %5327, %v329
        %v5329 = vpop.permute.xlu0 %5328
        %v5332 = vunpack.c.l.s4 839922192
        %v5333 = vunpack.c.0.s8 %v5332
        %v5334 = vperm.slane %v5329, %v5333
        %5335 = vset.pattern.permute.xlu0 7
        %5336 = vperm.xlu0 %5335, %v330
        %v5337 = vpop.permute.xlu0 %5336
        %v5340 = vunpack.c.l.s4 839922192
        %v5341 = vunpack.c.0.s8 %v5340
        %v5342 = vperm.slane %v5337, %v5341
        %5343 = vset.pattern.permute.xlu0 7
        %5344 = vperm.xlu0 %5343, %v331
        %v5345 = vpop.permute.xlu0 %5344
        %v5348 = vunpack.c.l.s4 839922192
        %v5349 = vunpack.c.0.s8 %v5348
        %v5350 = vperm.slane %v5345, %v5349
        %5351 = vset.pattern.permute.xlu0 7
        %5352 = vperm.xlu0 %5351, %v332
        %v5353 = vpop.permute.xlu0 %5352
        %v5356 = vunpack.c.l.s4 839922192
        %v5357 = vunpack.c.0.s8 %v5356
        %v5358 = vperm.slane %v5353, %v5357
        %5359 = vset.pattern.permute.xlu0 7
        %5360 = vperm.xlu0 %5359, %v333
        %v5361 = vpop.permute.xlu0 %5360
        %v5364 = vunpack.c.l.s4 839922192
        %v5365 = vunpack.c.0.s8 %v5364
        %v5366 = vperm.slane %v5361, %v5365
        %5367 = vset.pattern.permute.xlu0 7
        %5368 = vperm.xlu0 %5367, %v334
        %v5369 = vpop.permute.xlu0 %5368
        %v5372 = vunpack.c.l.s4 839922192
        %v5373 = vunpack.c.0.s8 %v5372
        %v5374 = vperm.slane %v5369, %v5373
        %5375 = vset.pattern.permute.xlu0 7
        %5376 = vperm.xlu0 %5375, %v335
        %v5377 = vpop.permute.xlu0 %5376
        %v5380 = vunpack.c.l.s4 839922192
        %v5381 = vunpack.c.0.s8 %v5380
        %v5382 = vperm.slane %v5377, %v5381
        %5383 = vset.pattern.permute.xlu0 7
        %5384 = vperm.xlu0 %5383, %v336
        %v5385 = vpop.permute.xlu0 %5384
        %v5388 = vunpack.c.l.s4 839922192
        %v5389 = vunpack.c.0.s8 %v5388
        %v5390 = vperm.slane %v5385, %v5389
        %5391 = vset.pattern.permute.xlu0 7
        %5392 = vperm.xlu0 %5391, %v337
        %v5393 = vpop.permute.xlu0 %5392
        %v5396 = vunpack.c.l.s4 839922192
        %v5397 = vunpack.c.0.s8 %v5396
        %v5398 = vperm.slane %v5393, %v5397
        %5399 = vset.pattern.permute.xlu0 7
        %5400 = vperm.xlu0 %5399, %v338
        %v5401 = vpop.permute.xlu0 %5400
        %v5404 = vunpack.c.l.s4 839922192
        %v5405 = vunpack.c.0.s8 %v5404
        %v5406 = vperm.slane %v5401, %v5405
        %5407 = vset.pattern.permute.xlu0 7
        %5408 = vperm.xlu0 %5407, %v339
        %v5409 = vpop.permute.xlu0 %5408
        %v5412 = vunpack.c.l.s4 839922192
        %v5413 = vunpack.c.0.s8 %v5412
        %v5414 = vperm.slane %v5409, %v5413
        %5415 = vset.pattern.permute.xlu0 7
        %5416 = vperm.xlu0 %5415, %v340
        %v5417 = vpop.permute.xlu0 %5416
        %v5420 = vunpack.c.l.s4 839922192
        %v5421 = vunpack.c.0.s8 %v5420
        %v5422 = vperm.slane %v5417, %v5421
        %5423 = vset.pattern.permute.xlu0 7
        %5424 = vperm.xlu0 %5423, %v341
        %v5425 = vpop.permute.xlu0 %5424
        %v5428 = vunpack.c.l.s4 839922192
        %v5429 = vunpack.c.0.s8 %v5428
        %v5430 = vperm.slane %v5425, %v5429
        %v5431 = vunpack.c.l.bf16 %v5142
        %v5432 = vunpack.c.l.bf16 %v5143
        %v5433 = vunpack.c.l.bf16 %v5144
        %v5434 = vunpack.c.l.bf16 %v5145
        %v5435 = vunpack.c.l.bf16 %v5146
        %v5436 = vunpack.c.l.bf16 %v5147
        %v5437 = vunpack.c.l.bf16 %v5148
        %v5438 = vunpack.c.l.bf16 %v5149
        %v5439 = vunpack.c.l.bf16 %v5150
        %v5440 = vunpack.c.l.bf16 %v5151
        %v5441 = vunpack.c.l.bf16 %v5152
        %v5442 = vunpack.c.l.bf16 %v5153
        %v5443 = vunpack.c.l.bf16 %v5154
        %v5444 = vunpack.c.l.bf16 %v5155
        %v5445 = vunpack.c.l.bf16 %v5156
        %v5446 = vunpack.c.l.bf16 %v5157
        %v5447 = vunpack.c.l.bf16 %v5158
        %v5448 = vunpack.c.l.bf16 %v5159
        %v5449 = vunpack.c.l.bf16 %v5160
        %v5450 = vunpack.c.l.bf16 %v5161
        %v5451 = vunpack.c.l.bf16 %v5162
        %v5452 = vunpack.c.l.bf16 %v5163
        %v5453 = vunpack.c.l.bf16 %v5164
        %v5454 = vunpack.c.l.bf16 %v5165
        %v5455 = vunpack.c.l.bf16 %v5166
        %v5456 = vunpack.c.l.bf16 %v5167
        %v5457 = vunpack.c.l.bf16 %v5168
        %v5458 = vunpack.c.l.bf16 %v5169
        %v5459 = vunpack.c.l.bf16 %v5170
        %v5460 = vunpack.c.l.bf16 %v5171
        %v5461 = vunpack.c.l.bf16 %v5172
        %v5462 = vunpack.c.l.bf16 %v5173
        %v5463 = vunpack.c.l.bf16 %v5174
        %v5464 = vunpack.c.l.bf16 %v5182
        %v5465 = vunpack.c.l.bf16 %v5190
        %v5466 = vunpack.c.l.bf16 %v5198
        %v5467 = vunpack.c.l.bf16 %v5206
        %v5468 = vunpack.c.l.bf16 %v5214
        %v5469 = vunpack.c.l.bf16 %v5222
        %v5470 = vunpack.c.l.bf16 %v5230
        %v5471 = vunpack.c.l.bf16 %v5238
        %v5472 = vunpack.c.l.bf16 %v5246
        %v5473 = vunpack.c.l.bf16 %v5254
        %v5474 = vunpack.c.l.bf16 %v5262
        %v5475 = vunpack.c.l.bf16 %v5270
        %v5476 = vunpack.c.l.bf16 %v5278
        %v5477 = vunpack.c.l.bf16 %v5286
        %v5478 = vunpack.c.l.bf16 %v5294
        %v5479 = vunpack.c.l.bf16 %v5302
        %v5480 = vunpack.c.l.bf16 %v5310
        %v5481 = vunpack.c.l.bf16 %v5318
        %v5482 = vunpack.c.l.bf16 %v5326
        %v5483 = vunpack.c.l.bf16 %v5334
        %v5484 = vunpack.c.l.bf16 %v5342
        %v5485 = vunpack.c.l.bf16 %v5350
        %v5486 = vunpack.c.l.bf16 %v5358
        %v5487 = vunpack.c.l.bf16 %v5366
        %v5488 = vunpack.c.l.bf16 %v5374
        %v5489 = vunpack.c.l.bf16 %v5382
        %v5490 = vunpack.c.l.bf16 %v5390
        %v5491 = vunpack.c.l.bf16 %v5398
        %v5492 = vunpack.c.l.bf16 %v5406
        %v5493 = vunpack.c.l.bf16 %v5414
        %v5494 = vunpack.c.l.bf16 %v5422
        %v5495 = vunpack.c.l.bf16 %v5430
        %v5528 = vrot.slane %v5464, 7
        %v5529 = vrot.slane %v5465, 7
        %v5530 = vsel %vm1132, %v5528, %v5529
        %v5531 = vrot.slane %v5466, 7
        %v5532 = vsel %vm1132, %v5529, %v5531
        %v5533 = vrot.slane %v5467, 7
        %v5534 = vsel %vm1132, %v5531, %v5533
        %v5535 = vrot.slane %v5468, 7
        %v5536 = vsel %vm1132, %v5533, %v5535
        %v5537 = vrot.slane %v5469, 7
        %v5538 = vsel %vm1132, %v5535, %v5537
        %v5539 = vrot.slane %v5470, 7
        %v5540 = vsel %vm1132, %v5537, %v5539
        %v5541 = vrot.slane %v5471, 7
        %v5542 = vsel %vm1132, %v5539, %v5541
        %v5543 = vrot.slane %v5472, 7
        %v5544 = vsel %vm1132, %v5541, %v5543
        %v5545 = vrot.slane %v5473, 7
        %v5546 = vsel %vm1132, %v5543, %v5545
        %v5547 = vrot.slane %v5474, 7
        %v5548 = vsel %vm1132, %v5545, %v5547
        %v5549 = vrot.slane %v5475, 7
        %v5550 = vsel %vm1132, %v5547, %v5549
        %v5551 = vrot.slane %v5476, 7
        %v5552 = vsel %vm1132, %v5549, %v5551
        %v5553 = vrot.slane %v5477, 7
        %v5554 = vsel %vm1132, %v5551, %v5553
        %v5555 = vrot.slane %v5478, 7
        %v5556 = vsel %vm1132, %v5553, %v5555
        %v5557 = vrot.slane %v5479, 7
        %v5558 = vsel %vm1132, %v5555, %v5557
        %v5559 = vrot.slane %v5480, 7
        %v5560 = vsel %vm1132, %v5557, %v5559
        %v5561 = vrot.slane %v5481, 7
        %v5562 = vsel %vm1132, %v5559, %v5561
        %v5563 = vrot.slane %v5482, 7
        %v5564 = vsel %vm1132, %v5561, %v5563
        %v5565 = vrot.slane %v5483, 7
        %v5566 = vsel %vm1132, %v5563, %v5565
        %v5567 = vrot.slane %v5484, 7
        %v5568 = vsel %vm1132, %v5565, %v5567
        %v5569 = vrot.slane %v5485, 7
        %v5570 = vsel %vm1132, %v5567, %v5569
        %v5571 = vrot.slane %v5486, 7
        %v5572 = vsel %vm1132, %v5569, %v5571
        %v5573 = vrot.slane %v5487, 7
        %v5574 = vsel %vm1132, %v5571, %v5573
        %v5575 = vrot.slane %v5488, 7
        %v5576 = vsel %vm1132, %v5573, %v5575
        %v5577 = vrot.slane %v5489, 7
        %v5578 = vsel %vm1132, %v5575, %v5577
        %v5579 = vrot.slane %v5490, 7
        %v5580 = vsel %vm1132, %v5577, %v5579
        %v5581 = vrot.slane %v5491, 7
        %v5582 = vsel %vm1132, %v5579, %v5581
        %v5583 = vrot.slane %v5492, 7
        %v5584 = vsel %vm1132, %v5581, %v5583
        %v5585 = vrot.slane %v5493, 7
        %v5586 = vsel %vm1132, %v5583, %v5585
        %v5587 = vrot.slane %v5494, 7
        %v5588 = vsel %vm1132, %v5585, %v5587
        %v5589 = vrot.slane %v5495, 7
        %v5590 = vsel %vm1132, %v5587, %v5589
        %v5624 = vmul.f32 %v5431, %v5528
        %v5625 = vmul.f32 %v5432, %v5530
        %v5626 = vmul.f32 %v5433, %v5532
        %v5627 = vmul.f32 %v5434, %v5534
        %v5628 = vmul.f32 %v5435, %v5536
        %v5629 = vmul.f32 %v5436, %v5538
        %v5630 = vmul.f32 %v5437, %v5540
        %v5631 = vmul.f32 %v5438, %v5542
        %v5632 = vmul.f32 %v5439, %v5544
        %v5633 = vmul.f32 %v5440, %v5546
        %v5634 = vmul.f32 %v5441, %v5548
        %v5635 = vmul.f32 %v5442, %v5550
        %v5636 = vmul.f32 %v5443, %v5552
        %v5637 = vmul.f32 %v5444, %v5554
        %v5638 = vmul.f32 %v5445, %v5556
        %v5639 = vmul.f32 %v5446, %v5558
        %v5640 = vmul.f32 %v5447, %v5560
        %v5641 = vmul.f32 %v5448, %v5562
        %v5642 = vmul.f32 %v5449, %v5564
        %v5643 = vmul.f32 %v5450, %v5566
        %v5644 = vmul.f32 %v5451, %v5568
        %v5645 = vmul.f32 %v5452, %v5570
        %v5646 = vmul.f32 %v5453, %v5572
        %v5647 = vmul.f32 %v5454, %v5574
        %v5648 = vmul.f32 %v5455, %v5576
        %v5649 = vmul.f32 %v5456, %v5578
        %v5650 = vmul.f32 %v5457, %v5580
        %v5651 = vmul.f32 %v5458, %v5582
        %v5652 = vmul.f32 %v5459, %v5584
        %v5653 = vmul.f32 %v5460, %v5586
        %v5654 = vmul.f32 %v5461, %v5588
        %v5655 = vmul.f32 %v5462, %v5590
        %v5656 = vmul.f32 %v5463, %v5589
        %v5657 = vpack.c.bf16 %v5625, %v5624
        %v5658 = vpack.c.bf16 %v5627, %v5626
        %v5659 = vpack.c.bf16 %v5629, %v5628
        %v5660 = vpack.c.bf16 %v5631, %v5630
        %v5661 = vpack.c.bf16 %v5633, %v5632
        %v5662 = vpack.c.bf16 %v5635, %v5634
        %v5663 = vpack.c.bf16 %v5637, %v5636
        %v5664 = vpack.c.bf16 %v5639, %v5638
        %v5665 = vpack.c.bf16 %v5641, %v5640
        %v5666 = vpack.c.bf16 %v5643, %v5642
        %v5667 = vpack.c.bf16 %v5645, %v5644
        %v5668 = vpack.c.bf16 %v5647, %v5646
        %v5669 = vpack.c.bf16 %v5649, %v5648
        %v5670 = vpack.c.bf16 %v5651, %v5650
        %v5671 = vpack.c.bf16 %v5653, %v5652
        %v5672 = vpack.c.bf16 %v5655, %v5654
        %v5673 = vpack.c.bf16 %v5656, %v5656
        %v5674 = vld [vmem:[%s2 + $0x70] sm:$0xf]
        %v5675 = vld [vmem:[%s2 + $0x74] sm:$0xf]
        %v5676 = vld [vmem:[%s2 + $0x78] sm:$0xf]
        %v5677 = vld [vmem:[%s2 + $0x7c] sm:$0xf]
        %v5679 = vshrl.u32 %v5657, 16
        %v5681 = vshll.u32 %v5657, 16
        %v5683 = vrot.slane %v5681, 1
        %v5684 = vor.u32 %v5679, %v5683
        %v5686 = vshll.u32 %v5658, 16
        %v5688 = vrot.slane %v5686, 1
        %v5689 = vsel %vm1283, %v5684, %v5688
        %v5690 = vshrl.u32 %v5658, 16
        %v5692 = vor.u32 %v5690, %v5688
        %v5694 = vshll.u32 %v5659, 16
        %v5696 = vrot.slane %v5694, 1
        %v5697 = vsel %vm1283, %v5692, %v5696
        %v5698 = vshrl.u32 %v5659, 16
        %v5700 = vor.u32 %v5698, %v5696
        %v5702 = vshll.u32 %v5660, 16
        %v5704 = vrot.slane %v5702, 1
        %v5705 = vsel %vm1283, %v5700, %v5704
        %v5706 = vshrl.u32 %v5660, 16
        %v5708 = vor.u32 %v5706, %v5704
        %v5710 = vshll.u32 %v5661, 16
        %v5712 = vrot.slane %v5710, 1
        %v5713 = vsel %vm1283, %v5708, %v5712
        %v5714 = vshrl.u32 %v5661, 16
        %v5716 = vor.u32 %v5714, %v5712
        %v5718 = vshll.u32 %v5662, 16
        %v5720 = vrot.slane %v5718, 1
        %v5721 = vsel %vm1283, %v5716, %v5720
        %v5722 = vshrl.u32 %v5662, 16
        %v5724 = vor.u32 %v5722, %v5720
        %v5726 = vshll.u32 %v5663, 16
        %v5728 = vrot.slane %v5726, 1
        %v5729 = vsel %vm1283, %v5724, %v5728
        %v5730 = vshrl.u32 %v5663, 16
        %v5732 = vor.u32 %v5730, %v5728
        %v5734 = vshll.u32 %v5664, 16
        %v5736 = vrot.slane %v5734, 1
        %v5737 = vsel %vm1283, %v5732, %v5736
        %v5738 = vshrl.u32 %v5664, 16
        %v5740 = vor.u32 %v5738, %v5736
        %v5742 = vshll.u32 %v5665, 16
        %v5744 = vrot.slane %v5742, 1
        %v5745 = vsel %vm1283, %v5740, %v5744
        %v5746 = vshrl.u32 %v5665, 16
        %v5748 = vor.u32 %v5746, %v5744
        %v5750 = vshll.u32 %v5666, 16
        %v5752 = vrot.slane %v5750, 1
        %v5753 = vsel %vm1283, %v5748, %v5752
        %v5754 = vshrl.u32 %v5666, 16
        %v5756 = vor.u32 %v5754, %v5752
        %v5758 = vshll.u32 %v5667, 16
        %v5760 = vrot.slane %v5758, 1
        %v5761 = vsel %vm1283, %v5756, %v5760
        %v5762 = vshrl.u32 %v5667, 16
        %v5764 = vor.u32 %v5762, %v5760
        %v5766 = vshll.u32 %v5668, 16
        %v5768 = vrot.slane %v5766, 1
        %v5769 = vsel %vm1283, %v5764, %v5768
        %v5770 = vshrl.u32 %v5668, 16
        %v5772 = vor.u32 %v5770, %v5768
        %v5774 = vshll.u32 %v5669, 16
        %v5776 = vrot.slane %v5774, 1
        %v5777 = vsel %vm1283, %v5772, %v5776
        %v5778 = vshrl.u32 %v5669, 16
        %v5780 = vor.u32 %v5778, %v5776
        %v5782 = vshll.u32 %v5670, 16
        %v5784 = vrot.slane %v5782, 1
        %v5785 = vsel %vm1283, %v5780, %v5784
        %v5786 = vshrl.u32 %v5670, 16
        %v5788 = vor.u32 %v5786, %v5784
        %v5790 = vshll.u32 %v5671, 16
        %v5792 = vrot.slane %v5790, 1
        %v5793 = vsel %vm1283, %v5788, %v5792
        %v5794 = vshrl.u32 %v5671, 16
        %v5796 = vor.u32 %v5794, %v5792
        %v5798 = vshll.u32 %v5672, 16
        %v5800 = vrot.slane %v5798, 1
        %v5801 = vsel %vm1283, %v5796, %v5800
        %v5802 = vshrl.u32 %v5672, 16
        %v5804 = vor.u32 %v5802, %v5800
        %v5806 = vshll.u32 %v5673, 16
        %v5808 = vrot.slane %v5806, 1
        %v5809 = vsel %vm1283, %v5804, %v5808
        %v5814 = vunpack.c.l.b16 %v5674
        %v5815 = vunpack.c.l.b16 %v5675
        %v5816 = vunpack.c.l.b16 %v5676
        %v5817 = vunpack.c.l.b16 %v5677
        %v5818 = vpack.c.b16 %v5815, %v5814
        %v5819 = vpack.c.b16 %v5817, %v5816
        %v5823 = vsel %vm1428, %v5689, 0
        %v5826 = vsel %vm1428, %v5697, 0
        %v5829 = vsel %vm1428, %v5705, 0
        %v5832 = vsel %vm1428, %v5713, 0
        %v5835 = vsel %vm1428, %v5721, 0
        %v5838 = vsel %vm1428, %v5729, 0
        %v5841 = vsel %vm1428, %v5737, 0
        %v5844 = vsel %vm1428, %v5745, 0
        %v5847 = vsel %vm1428, %v5753, 0
        %v5850 = vsel %vm1428, %v5761, 0
        %v5853 = vsel %vm1428, %v5769, 0
        %v5856 = vsel %vm1428, %v5777, 0
        %v5859 = vsel %vm1428, %v5785, 0
        %v5862 = vsel %vm1428, %v5793, 0
        %v5865 = vsel %vm1428, %v5801, 0
        %v5868 = vsel %vm1428, %v5809, 0
        %5870 = vmatpush.bf16.msra.mxu0 0
        %5871 = vmatpush.bf16.msra.mxu0 0
        %5872 = vmatpush.bf16.msra.mxu0 0
        %5873 = vmatpush.bf16.msra.mxu0 0
        %5874 = vmatpush.bf16.msra.mxu0 0
        %5875 = vmatpush.bf16.msra.mxu0 0
        %5876 = vmatpush.bf16.msra.mxu0 %v5819
        %5877 = vmatpush.bf16.msra.mxu0 %v5818
        %5878 = vmatmul.bf16.gmra.mxu0 %v5823
        %v5879 = vpop.f32.mrf.mxu0
        %v5880 = vadd.f32 0.0, %v5879
        %v5881 = vpop.f32.mrf.mxu0
        %v5882 = vadd.f32 0.0, %v5881
        %5883 = vmatmul.bf16.gmra.mxu0 %v5826
        %v5884 = vpop.f32.mrf.mxu0
        %v5885 = vadd.f32 0.0, %v5884
        %v5886 = vpop.f32.mrf.mxu0
        %v5887 = vadd.f32 0.0, %v5886
        %5888 = vmatmul.bf16.gmra.mxu0 %v5829
        %v5889 = vpop.f32.mrf.mxu0
        %v5890 = vadd.f32 0.0, %v5889
        %v5891 = vpop.f32.mrf.mxu0
        %v5892 = vadd.f32 0.0, %v5891
        %5893 = vmatmul.bf16.gmra.mxu0 %v5832
        %v5894 = vpop.f32.mrf.mxu0
        %v5895 = vadd.f32 0.0, %v5894
        %v5896 = vpop.f32.mrf.mxu0
        %v5897 = vadd.f32 0.0, %v5896
        %5898 = vmatmul.bf16.gmra.mxu0 %v5835
        %v5899 = vpop.f32.mrf.mxu0
        %v5900 = vadd.f32 0.0, %v5899
        %v5901 = vpop.f32.mrf.mxu0
        %v5902 = vadd.f32 0.0, %v5901
        %5903 = vmatmul.bf16.gmra.mxu0 %v5838
        %v5904 = vpop.f32.mrf.mxu0
        %v5905 = vadd.f32 0.0, %v5904
        %v5906 = vpop.f32.mrf.mxu0
        %v5907 = vadd.f32 0.0, %v5906
        %5908 = vmatmul.bf16.gmra.mxu0 %v5841
        %v5909 = vpop.f32.mrf.mxu0
        %v5910 = vadd.f32 0.0, %v5909
        %v5911 = vpop.f32.mrf.mxu0
        %v5912 = vadd.f32 0.0, %v5911
        %5913 = vmatmul.bf16.gmra.mxu0 %v5844
        %v5914 = vpop.f32.mrf.mxu0
        %v5915 = vadd.f32 0.0, %v5914
        %v5916 = vpop.f32.mrf.mxu0
        %v5917 = vadd.f32 0.0, %v5916
        %5918 = vmatmul.bf16.gmra.mxu0 %v5847
        %v5919 = vpop.f32.mrf.mxu0
        %v5920 = vadd.f32 0.0, %v5919
        %v5921 = vpop.f32.mrf.mxu0
        %v5922 = vadd.f32 0.0, %v5921
        %5923 = vmatmul.bf16.gmra.mxu0 %v5850
        %v5924 = vpop.f32.mrf.mxu0
        %v5925 = vadd.f32 0.0, %v5924
        %v5926 = vpop.f32.mrf.mxu0
        %v5927 = vadd.f32 0.0, %v5926
        %5928 = vmatmul.bf16.gmra.mxu0 %v5853
        %v5929 = vpop.f32.mrf.mxu0
        %v5930 = vadd.f32 0.0, %v5929
        %v5931 = vpop.f32.mrf.mxu0
        %v5932 = vadd.f32 0.0, %v5931
        %5933 = vmatmul.bf16.gmra.mxu0 %v5856
        %v5934 = vpop.f32.mrf.mxu0
        %v5935 = vadd.f32 0.0, %v5934
        %v5936 = vpop.f32.mrf.mxu0
        %v5937 = vadd.f32 0.0, %v5936
        %5938 = vmatmul.bf16.gmra.mxu0 %v5859
        %v5939 = vpop.f32.mrf.mxu0
        %v5940 = vadd.f32 0.0, %v5939
        %v5941 = vpop.f32.mrf.mxu0
        %v5942 = vadd.f32 0.0, %v5941
        %5943 = vmatmul.bf16.gmra.mxu0 %v5862
        %v5944 = vpop.f32.mrf.mxu0
        %v5945 = vadd.f32 0.0, %v5944
        %v5946 = vpop.f32.mrf.mxu0
        %v5947 = vadd.f32 0.0, %v5946
        %5948 = vmatmul.bf16.gmra.mxu0 %v5865
        %v5949 = vpop.f32.mrf.mxu0
        %v5950 = vadd.f32 0.0, %v5949
        %v5951 = vpop.f32.mrf.mxu0
        %v5952 = vadd.f32 0.0, %v5951
        %5953 = vmatmul.bf16.gmra.mxu0 %v5868
        %v5954 = vpop.f32.mrf.mxu0
        %v5955 = vadd.f32 0.0, %v5954
        %v5956 = vpop.f32.mrf.mxu0
        %v5957 = vadd.f32 0.0, %v5956
        %5958 = vdwg.mxu0
        %v5959 = vadd.f32 %v5110, %v5880
        %v5960 = vadd.f32 %v5111, %v5882
        %v5961 = vadd.f32 %v5112, %v5885
        %v5962 = vadd.f32 %v5113, %v5887
        %v5963 = vadd.f32 %v5114, %v5890
        %v5964 = vadd.f32 %v5115, %v5892
        %v5965 = vadd.f32 %v5116, %v5895
        %v5966 = vadd.f32 %v5117, %v5897
        %v5967 = vadd.f32 %v5118, %v5900
        %v5968 = vadd.f32 %v5119, %v5902
        %v5969 = vadd.f32 %v5120, %v5905
        %v5970 = vadd.f32 %v5121, %v5907
        %v5971 = vadd.f32 %v5122, %v5910
        %v5972 = vadd.f32 %v5123, %v5912
        %v5973 = vadd.f32 %v5124, %v5915
        %v5974 = vadd.f32 %v5125, %v5917
        %v5975 = vadd.f32 %v5126, %v5920
        %v5976 = vadd.f32 %v5127, %v5922
        %v5977 = vadd.f32 %v5128, %v5925
        %v5978 = vadd.f32 %v5129, %v5927
        %v5979 = vadd.f32 %v5130, %v5930
        %v5980 = vadd.f32 %v5131, %v5932
        %v5981 = vadd.f32 %v5132, %v5935
        %v5982 = vadd.f32 %v5133, %v5937
        %v5983 = vadd.f32 %v5134, %v5940
        %v5984 = vadd.f32 %v5135, %v5942
        %v5985 = vadd.f32 %v5136, %v5945
        %v5986 = vadd.f32 %v5137, %v5947
        %v5987 = vadd.f32 %v5138, %v5950
        %v5988 = vadd.f32 %v5139, %v5952
        %v5989 = vadd.f32 %v5140, %v5955
        %v5990 = vadd.f32 %v5141, %v5957
        %v5991 = vld [vmem:[%s276 + $0x10] sm:$0xe]
        %5992 = vset.pattern.permute.xlu0 8
        %5993 = vperm.xlu0 %5992, %v310
        %v5994 = vpop.permute.xlu0 %5993
        %v5997 = vunpack.c.l.s4 839922192
        %v5998 = vunpack.c.0.s8 %v5997
        %v5999 = vperm.slane %v5994, %v5998
        %6000 = vset.pattern.permute.xlu0 8
        %6001 = vperm.xlu0 %6000, %v311
        %v6002 = vpop.permute.xlu0 %6001
        %v6005 = vunpack.c.l.s4 839922192
        %v6006 = vunpack.c.0.s8 %v6005
        %v6007 = vperm.slane %v6002, %v6006
        %6008 = vset.pattern.permute.xlu0 8
        %6009 = vperm.xlu0 %6008, %v312
        %v6010 = vpop.permute.xlu0 %6009
        %v6013 = vunpack.c.l.s4 839922192
        %v6014 = vunpack.c.0.s8 %v6013
        %v6015 = vperm.slane %v6010, %v6014
        %6016 = vset.pattern.permute.xlu0 8
        %6017 = vperm.xlu0 %6016, %v313
        %v6018 = vpop.permute.xlu0 %6017
        %v6021 = vunpack.c.l.s4 839922192
        %v6022 = vunpack.c.0.s8 %v6021
        %v6023 = vperm.slane %v6018, %v6022
        %6024 = vset.pattern.permute.xlu0 8
        %6025 = vperm.xlu0 %6024, %v314
        %v6026 = vpop.permute.xlu0 %6025
        %v6029 = vunpack.c.l.s4 839922192
        %v6030 = vunpack.c.0.s8 %v6029
        %v6031 = vperm.slane %v6026, %v6030
        %6032 = vset.pattern.permute.xlu0 8
        %6033 = vperm.xlu0 %6032, %v315
        %v6034 = vpop.permute.xlu0 %6033
        %v6037 = vunpack.c.l.s4 839922192
        %v6038 = vunpack.c.0.s8 %v6037
        %v6039 = vperm.slane %v6034, %v6038
        %6040 = vset.pattern.permute.xlu0 8
        %6041 = vperm.xlu0 %6040, %v316
        %v6042 = vpop.permute.xlu0 %6041
        %v6045 = vunpack.c.l.s4 839922192
        %v6046 = vunpack.c.0.s8 %v6045
        %v6047 = vperm.slane %v6042, %v6046
        %6048 = vset.pattern.permute.xlu0 8
        %6049 = vperm.xlu0 %6048, %v317
        %v6050 = vpop.permute.xlu0 %6049
        %v6053 = vunpack.c.l.s4 839922192
        %v6054 = vunpack.c.0.s8 %v6053
        %v6055 = vperm.slane %v6050, %v6054
        %6056 = vset.pattern.permute.xlu0 8
        %6057 = vperm.xlu0 %6056, %v318
        %v6058 = vpop.permute.xlu0 %6057
        %v6061 = vunpack.c.l.s4 839922192
        %v6062 = vunpack.c.0.s8 %v6061
        %v6063 = vperm.slane %v6058, %v6062
        %6064 = vset.pattern.permute.xlu0 8
        %6065 = vperm.xlu0 %6064, %v319
        %v6066 = vpop.permute.xlu0 %6065
        %v6069 = vunpack.c.l.s4 839922192
        %v6070 = vunpack.c.0.s8 %v6069
        %v6071 = vperm.slane %v6066, %v6070
        %6072 = vset.pattern.permute.xlu0 8
        %6073 = vperm.xlu0 %6072, %v320
        %v6074 = vpop.permute.xlu0 %6073
        %v6077 = vunpack.c.l.s4 839922192
        %v6078 = vunpack.c.0.s8 %v6077
        %v6079 = vperm.slane %v6074, %v6078
        %6080 = vset.pattern.permute.xlu0 8
        %6081 = vperm.xlu0 %6080, %v321
        %v6082 = vpop.permute.xlu0 %6081
        %v6085 = vunpack.c.l.s4 839922192
        %v6086 = vunpack.c.0.s8 %v6085
        %v6087 = vperm.slane %v6082, %v6086
        %6088 = vset.pattern.permute.xlu0 8
        %6089 = vperm.xlu0 %6088, %v322
        %v6090 = vpop.permute.xlu0 %6089
        %v6093 = vunpack.c.l.s4 839922192
        %v6094 = vunpack.c.0.s8 %v6093
        %v6095 = vperm.slane %v6090, %v6094
        %6096 = vset.pattern.permute.xlu0 8
        %6097 = vperm.xlu0 %6096, %v323
        %v6098 = vpop.permute.xlu0 %6097
        %v6101 = vunpack.c.l.s4 839922192
        %v6102 = vunpack.c.0.s8 %v6101
        %v6103 = vperm.slane %v6098, %v6102
        %6104 = vset.pattern.permute.xlu0 8
        %6105 = vperm.xlu0 %6104, %v324
        %v6106 = vpop.permute.xlu0 %6105
        %v6109 = vunpack.c.l.s4 839922192
        %v6110 = vunpack.c.0.s8 %v6109
        %v6111 = vperm.slane %v6106, %v6110
        %6112 = vset.pattern.permute.xlu0 8
        %6113 = vperm.xlu0 %6112, %v325
        %v6114 = vpop.permute.xlu0 %6113
        %v6117 = vunpack.c.l.s4 839922192
        %v6118 = vunpack.c.0.s8 %v6117
        %v6119 = vperm.slane %v6114, %v6118
        %6120 = vset.pattern.permute.xlu0 8
        %6121 = vperm.xlu0 %6120, %v326
        %v6122 = vpop.permute.xlu0 %6121
        %v6125 = vunpack.c.l.s4 839922192
        %v6126 = vunpack.c.0.s8 %v6125
        %v6127 = vperm.slane %v6122, %v6126
        %6128 = vset.pattern.permute.xlu0 8
        %6129 = vperm.xlu0 %6128, %v327
        %v6130 = vpop.permute.xlu0 %6129
        %v6133 = vunpack.c.l.s4 839922192
        %v6134 = vunpack.c.0.s8 %v6133
        %v6135 = vperm.slane %v6130, %v6134
        %6136 = vset.pattern.permute.xlu0 8
        %6137 = vperm.xlu0 %6136, %v328
        %v6138 = vpop.permute.xlu0 %6137
        %v6141 = vunpack.c.l.s4 839922192
        %v6142 = vunpack.c.0.s8 %v6141
        %v6143 = vperm.slane %v6138, %v6142
        %6144 = vset.pattern.permute.xlu0 8
        %6145 = vperm.xlu0 %6144, %v329
        %v6146 = vpop.permute.xlu0 %6145
        %v6149 = vunpack.c.l.s4 839922192
        %v6150 = vunpack.c.0.s8 %v6149
        %v6151 = vperm.slane %v6146, %v6150
        %6152 = vset.pattern.permute.xlu0 8
        %6153 = vperm.xlu0 %6152, %v330
        %v6154 = vpop.permute.xlu0 %6153
        %v6157 = vunpack.c.l.s4 839922192
        %v6158 = vunpack.c.0.s8 %v6157
        %v6159 = vperm.slane %v6154, %v6158
        %6160 = vset.pattern.permute.xlu0 8
        %6161 = vperm.xlu0 %6160, %v331
        %v6162 = vpop.permute.xlu0 %6161
        %v6165 = vunpack.c.l.s4 839922192
        %v6166 = vunpack.c.0.s8 %v6165
        %v6167 = vperm.slane %v6162, %v6166
        %6168 = vset.pattern.permute.xlu0 8
        %6169 = vperm.xlu0 %6168, %v332
        %v6170 = vpop.permute.xlu0 %6169
        %v6173 = vunpack.c.l.s4 839922192
        %v6174 = vunpack.c.0.s8 %v6173
        %v6175 = vperm.slane %v6170, %v6174
        %6176 = vset.pattern.permute.xlu0 8
        %6177 = vperm.xlu0 %6176, %v333
        %v6178 = vpop.permute.xlu0 %6177
        %v6181 = vunpack.c.l.s4 839922192
        %v6182 = vunpack.c.0.s8 %v6181
        %v6183 = vperm.slane %v6178, %v6182
        %6184 = vset.pattern.permute.xlu0 8
        %6185 = vperm.xlu0 %6184, %v334
        %v6186 = vpop.permute.xlu0 %6185
        %v6189 = vunpack.c.l.s4 839922192
        %v6190 = vunpack.c.0.s8 %v6189
        %v6191 = vperm.slane %v6186, %v6190
        %6192 = vset.pattern.permute.xlu0 8
        %6193 = vperm.xlu0 %6192, %v335
        %v6194 = vpop.permute.xlu0 %6193
        %v6197 = vunpack.c.l.s4 839922192
        %v6198 = vunpack.c.0.s8 %v6197
        %v6199 = vperm.slane %v6194, %v6198
        %6200 = vset.pattern.permute.xlu0 8
        %6201 = vperm.xlu0 %6200, %v336
        %v6202 = vpop.permute.xlu0 %6201
        %v6205 = vunpack.c.l.s4 839922192
        %v6206 = vunpack.c.0.s8 %v6205
        %v6207 = vperm.slane %v6202, %v6206
        %6208 = vset.pattern.permute.xlu0 8
        %6209 = vperm.xlu0 %6208, %v337
        %v6210 = vpop.permute.xlu0 %6209
        %v6213 = vunpack.c.l.s4 839922192
        %v6214 = vunpack.c.0.s8 %v6213
        %v6215 = vperm.slane %v6210, %v6214
        %6216 = vset.pattern.permute.xlu0 8
        %6217 = vperm.xlu0 %6216, %v338
        %v6218 = vpop.permute.xlu0 %6217
        %v6221 = vunpack.c.l.s4 839922192
        %v6222 = vunpack.c.0.s8 %v6221
        %v6223 = vperm.slane %v6218, %v6222
        %6224 = vset.pattern.permute.xlu0 8
        %6225 = vperm.xlu0 %6224, %v339
        %v6226 = vpop.permute.xlu0 %6225
        %v6229 = vunpack.c.l.s4 839922192
        %v6230 = vunpack.c.0.s8 %v6229
        %v6231 = vperm.slane %v6226, %v6230
        %6232 = vset.pattern.permute.xlu0 8
        %6233 = vperm.xlu0 %6232, %v340
        %v6234 = vpop.permute.xlu0 %6233
        %v6237 = vunpack.c.l.s4 839922192
        %v6238 = vunpack.c.0.s8 %v6237
        %v6239 = vperm.slane %v6234, %v6238
        %6240 = vset.pattern.permute.xlu0 8
        %6241 = vperm.xlu0 %6240, %v341
        %v6242 = vpop.permute.xlu0 %6241
        %v6245 = vunpack.c.l.s4 839922192
        %v6246 = vunpack.c.0.s8 %v6245
        %v6247 = vperm.slane %v6242, %v6246
        %v6248 = vunpack.c.l.bf16 %v5991
        %v6249 = vunpack.c.l.bf16 %v5999
        %v6250 = vunpack.c.l.bf16 %v6007
        %v6251 = vunpack.c.l.bf16 %v6015
        %v6252 = vunpack.c.l.bf16 %v6023
        %v6253 = vunpack.c.l.bf16 %v6031
        %v6254 = vunpack.c.l.bf16 %v6039
        %v6255 = vunpack.c.l.bf16 %v6047
        %v6256 = vunpack.c.l.bf16 %v6055
        %v6257 = vunpack.c.l.bf16 %v6063
        %v6258 = vunpack.c.l.bf16 %v6071
        %v6259 = vunpack.c.l.bf16 %v6079
        %v6260 = vunpack.c.l.bf16 %v6087
        %v6261 = vunpack.c.l.bf16 %v6095
        %v6262 = vunpack.c.l.bf16 %v6103
        %v6263 = vunpack.c.l.bf16 %v6111
        %v6264 = vunpack.c.l.bf16 %v6119
        %v6265 = vunpack.c.l.bf16 %v6127
        %v6266 = vunpack.c.l.bf16 %v6135
        %v6267 = vunpack.c.l.bf16 %v6143
        %v6268 = vunpack.c.l.bf16 %v6151
        %v6269 = vunpack.c.l.bf16 %v6159
        %v6270 = vunpack.c.l.bf16 %v6167
        %v6271 = vunpack.c.l.bf16 %v6175
        %v6272 = vunpack.c.l.bf16 %v6183
        %v6273 = vunpack.c.l.bf16 %v6191
        %v6274 = vunpack.c.l.bf16 %v6199
        %v6275 = vunpack.c.l.bf16 %v6207
        %v6276 = vunpack.c.l.bf16 %v6215
        %v6277 = vunpack.c.l.bf16 %v6223
        %v6278 = vunpack.c.l.bf16 %v6231
        %v6279 = vunpack.c.l.bf16 %v6239
        %v6280 = vunpack.c.l.bf16 %v6247
        %v6313 = vrot.slane %v6249, 6
        %v6314 = vrot.slane %v6250, 6
        %v6315 = vsel %vm2037, %v6313, %v6314
        %v6316 = vrot.slane %v6251, 6
        %v6317 = vsel %vm2037, %v6314, %v6316
        %v6318 = vrot.slane %v6252, 6
        %v6319 = vsel %vm2037, %v6316, %v6318
        %v6320 = vrot.slane %v6253, 6
        %v6321 = vsel %vm2037, %v6318, %v6320
        %v6322 = vrot.slane %v6254, 6
        %v6323 = vsel %vm2037, %v6320, %v6322
        %v6324 = vrot.slane %v6255, 6
        %v6325 = vsel %vm2037, %v6322, %v6324
        %v6326 = vrot.slane %v6256, 6
        %v6327 = vsel %vm2037, %v6324, %v6326
        %v6328 = vrot.slane %v6257, 6
        %v6329 = vsel %vm2037, %v6326, %v6328
        %v6330 = vrot.slane %v6258, 6
        %v6331 = vsel %vm2037, %v6328, %v6330
        %v6332 = vrot.slane %v6259, 6
        %v6333 = vsel %vm2037, %v6330, %v6332
        %v6334 = vrot.slane %v6260, 6
        %v6335 = vsel %vm2037, %v6332, %v6334
        %v6336 = vrot.slane %v6261, 6
        %v6337 = vsel %vm2037, %v6334, %v6336
        %v6338 = vrot.slane %v6262, 6
        %v6339 = vsel %vm2037, %v6336, %v6338
        %v6340 = vrot.slane %v6263, 6
        %v6341 = vsel %vm2037, %v6338, %v6340
        %v6342 = vrot.slane %v6264, 6
        %v6343 = vsel %vm2037, %v6340, %v6342
        %v6344 = vrot.slane %v6265, 6
        %v6345 = vsel %vm2037, %v6342, %v6344
        %v6346 = vrot.slane %v6266, 6
        %v6347 = vsel %vm2037, %v6344, %v6346
        %v6348 = vrot.slane %v6267, 6
        %v6349 = vsel %vm2037, %v6346, %v6348
        %v6350 = vrot.slane %v6268, 6
        %v6351 = vsel %vm2037, %v6348, %v6350
        %v6352 = vrot.slane %v6269, 6
        %v6353 = vsel %vm2037, %v6350, %v6352
        %v6354 = vrot.slane %v6270, 6
        %v6355 = vsel %vm2037, %v6352, %v6354
        %v6356 = vrot.slane %v6271, 6
        %v6357 = vsel %vm2037, %v6354, %v6356
        %v6358 = vrot.slane %v6272, 6
        %v6359 = vsel %vm2037, %v6356, %v6358
        %v6360 = vrot.slane %v6273, 6
        %v6361 = vsel %vm2037, %v6358, %v6360
        %v6362 = vrot.slane %v6274, 6
        %v6363 = vsel %vm2037, %v6360, %v6362
        %v6364 = vrot.slane %v6275, 6
        %v6365 = vsel %vm2037, %v6362, %v6364
        %v6366 = vrot.slane %v6276, 6
        %v6367 = vsel %vm2037, %v6364, %v6366
        %v6368 = vrot.slane %v6277, 6
        %v6369 = vsel %vm2037, %v6366, %v6368
        %v6370 = vrot.slane %v6278, 6
        %v6371 = vsel %vm2037, %v6368, %v6370
        %v6372 = vrot.slane %v6279, 6
        %v6373 = vsel %vm2037, %v6370, %v6372
        %v6374 = vrot.slane %v6280, 6
        %v6375 = vsel %vm2037, %v6372, %v6374
        %v6409 = vmul.f32 %v6248, %v6313
        %v6410 = vmul.f32 %v5432, %v6315
        %v6411 = vmul.f32 %v5433, %v6317
        %v6412 = vmul.f32 %v5434, %v6319
        %v6413 = vmul.f32 %v5435, %v6321
        %v6414 = vmul.f32 %v5436, %v6323
        %v6415 = vmul.f32 %v5437, %v6325
        %v6416 = vmul.f32 %v5438, %v6327
        %v6417 = vmul.f32 %v5439, %v6329
        %v6418 = vmul.f32 %v5440, %v6331
        %v6419 = vmul.f32 %v5441, %v6333
        %v6420 = vmul.f32 %v5442, %v6335
        %v6421 = vmul.f32 %v5443, %v6337
        %v6422 = vmul.f32 %v5444, %v6339
        %v6423 = vmul.f32 %v5445, %v6341
        %v6424 = vmul.f32 %v5446, %v6343
        %v6425 = vmul.f32 %v5447, %v6345
        %v6426 = vmul.f32 %v5448, %v6347
        %v6427 = vmul.f32 %v5449, %v6349
        %v6428 = vmul.f32 %v5450, %v6351
        %v6429 = vmul.f32 %v5451, %v6353
        %v6430 = vmul.f32 %v5452, %v6355
        %v6431 = vmul.f32 %v5453, %v6357
        %v6432 = vmul.f32 %v5454, %v6359
        %v6433 = vmul.f32 %v5455, %v6361
        %v6434 = vmul.f32 %v5456, %v6363
        %v6435 = vmul.f32 %v5457, %v6365
        %v6436 = vmul.f32 %v5458, %v6367
        %v6437 = vmul.f32 %v5459, %v6369
        %v6438 = vmul.f32 %v5460, %v6371
        %v6439 = vmul.f32 %v5461, %v6373
        %v6440 = vmul.f32 %v5462, %v6375
        %v6441 = vmul.f32 %v5463, %v6374
        %v6442 = vpack.c.bf16 %v6410, %v6409
        %v6443 = vpack.c.bf16 %v6412, %v6411
        %v6444 = vpack.c.bf16 %v6414, %v6413
        %v6445 = vpack.c.bf16 %v6416, %v6415
        %v6446 = vpack.c.bf16 %v6418, %v6417
        %v6447 = vpack.c.bf16 %v6420, %v6419
        %v6448 = vpack.c.bf16 %v6422, %v6421
        %v6449 = vpack.c.bf16 %v6424, %v6423
        %v6450 = vpack.c.bf16 %v6426, %v6425
        %v6451 = vpack.c.bf16 %v6428, %v6427
        %v6452 = vpack.c.bf16 %v6430, %v6429
        %v6453 = vpack.c.bf16 %v6432, %v6431
        %v6454 = vpack.c.bf16 %v6434, %v6433
        %v6455 = vpack.c.bf16 %v6436, %v6435
        %v6456 = vpack.c.bf16 %v6438, %v6437
        %v6457 = vpack.c.bf16 %v6440, %v6439
        %v6458 = vpack.c.bf16 %v6441, %v6441
        %v6459 = vld [vmem:[%s2 + $0x80] sm:$0xf]
        %v6460 = vld [vmem:[%s2 + $0x84] sm:$0xf]
        %v6461 = vld [vmem:[%s2 + $0x88] sm:$0xf]
        %v6462 = vld [vmem:[%s2 + $0x8c] sm:$0xf]
        %v6480 = vrot.slane %v6442, 1
        %v6481 = vrot.slane %v6443, 1
        %v6482 = vsel %vm2205, %v6480, %v6481
        %v6483 = vrot.slane %v6444, 1
        %v6484 = vsel %vm2205, %v6481, %v6483
        %v6485 = vrot.slane %v6445, 1
        %v6486 = vsel %vm2205, %v6483, %v6485
        %v6487 = vrot.slane %v6446, 1
        %v6488 = vsel %vm2205, %v6485, %v6487
        %v6489 = vrot.slane %v6447, 1
        %v6490 = vsel %vm2205, %v6487, %v6489
        %v6491 = vrot.slane %v6448, 1
        %v6492 = vsel %vm2205, %v6489, %v6491
        %v6493 = vrot.slane %v6449, 1
        %v6494 = vsel %vm2205, %v6491, %v6493
        %v6495 = vrot.slane %v6450, 1
        %v6496 = vsel %vm2205, %v6493, %v6495
        %v6497 = vrot.slane %v6451, 1
        %v6498 = vsel %vm2205, %v6495, %v6497
        %v6499 = vrot.slane %v6452, 1
        %v6500 = vsel %vm2205, %v6497, %v6499
        %v6501 = vrot.slane %v6453, 1
        %v6502 = vsel %vm2205, %v6499, %v6501
        %v6503 = vrot.slane %v6454, 1
        %v6504 = vsel %vm2205, %v6501, %v6503
        %v6505 = vrot.slane %v6455, 1
        %v6506 = vsel %vm2205, %v6503, %v6505
        %v6507 = vrot.slane %v6456, 1
        %v6508 = vsel %vm2205, %v6505, %v6507
        %v6509 = vrot.slane %v6457, 1
        %v6510 = vsel %vm2205, %v6507, %v6509
        %v6511 = vrot.slane %v6458, 1
        %v6512 = vsel %vm2205, %v6509, %v6511
        %v6517 = vunpack.c.l.b16 %v6459
        %v6518 = vunpack.c.l.b16 %v6460
        %v6519 = vunpack.c.l.b16 %v6461
        %v6520 = vunpack.c.l.b16 %v6462
        %v6521 = vpack.c.b16 %v6518, %v6517
        %v6522 = vpack.c.b16 %v6520, %v6519
        %v6526 = vsel %vm1428, %v6482, 0
        %v6529 = vsel %vm1428, %v6484, 0
        %v6532 = vsel %vm1428, %v6486, 0
        %v6535 = vsel %vm1428, %v6488, 0
        %v6538 = vsel %vm1428, %v6490, 0
        %v6541 = vsel %vm1428, %v6492, 0
        %v6544 = vsel %vm1428, %v6494, 0
        %v6547 = vsel %vm1428, %v6496, 0
        %v6550 = vsel %vm1428, %v6498, 0
        %v6553 = vsel %vm1428, %v6500, 0
        %v6556 = vsel %vm1428, %v6502, 0
        %v6559 = vsel %vm1428, %v6504, 0
        %v6562 = vsel %vm1428, %v6506, 0
        %v6565 = vsel %vm1428, %v6508, 0
        %v6568 = vsel %vm1428, %v6510, 0
        %v6571 = vsel %vm1428, %v6512, 0
        %6573 = vmatpush.bf16.msra.mxu0 0
        %6574 = vmatpush.bf16.msra.mxu0 0
        %6575 = vmatpush.bf16.msra.mxu0 0
        %6576 = vmatpush.bf16.msra.mxu0 0
        %6577 = vmatpush.bf16.msra.mxu0 0
        %6578 = vmatpush.bf16.msra.mxu0 0
        %6579 = vmatpush.bf16.msra.mxu0 %v6522
        %6580 = vmatpush.bf16.msra.mxu0 %v6521
        %6581 = vmatmul.bf16.gmra.mxu0 %v6526
        %v6582 = vpop.f32.mrf.mxu0
        %v6583 = vadd.f32 0.0, %v6582
        %v6584 = vpop.f32.mrf.mxu0
        %v6585 = vadd.f32 0.0, %v6584
        %6586 = vmatmul.bf16.gmra.mxu0 %v6529
        %v6587 = vpop.f32.mrf.mxu0
        %v6588 = vadd.f32 0.0, %v6587
        %v6589 = vpop.f32.mrf.mxu0
        %v6590 = vadd.f32 0.0, %v6589
        %6591 = vmatmul.bf16.gmra.mxu0 %v6532
        %v6592 = vpop.f32.mrf.mxu0
        %v6593 = vadd.f32 0.0, %v6592
        %v6594 = vpop.f32.mrf.mxu0
        %v6595 = vadd.f32 0.0, %v6594
        %6596 = vmatmul.bf16.gmra.mxu0 %v6535
        %v6597 = vpop.f32.mrf.mxu0
        %v6598 = vadd.f32 0.0, %v6597
        %v6599 = vpop.f32.mrf.mxu0
        %v6600 = vadd.f32 0.0, %v6599
        %6601 = vmatmul.bf16.gmra.mxu0 %v6538
        %v6602 = vpop.f32.mrf.mxu0
        %v6603 = vadd.f32 0.0, %v6602
        %v6604 = vpop.f32.mrf.mxu0
        %v6605 = vadd.f32 0.0, %v6604
        %6606 = vmatmul.bf16.gmra.mxu0 %v6541
        %v6607 = vpop.f32.mrf.mxu0
        %v6608 = vadd.f32 0.0, %v6607
        %v6609 = vpop.f32.mrf.mxu0
        %v6610 = vadd.f32 0.0, %v6609
        %6611 = vmatmul.bf16.gmra.mxu0 %v6544
        %v6612 = vpop.f32.mrf.mxu0
        %v6613 = vadd.f32 0.0, %v6612
        %v6614 = vpop.f32.mrf.mxu0
        %v6615 = vadd.f32 0.0, %v6614
        %6616 = vmatmul.bf16.gmra.mxu0 %v6547
        %v6617 = vpop.f32.mrf.mxu0
        %v6618 = vadd.f32 0.0, %v6617
        %v6619 = vpop.f32.mrf.mxu0
        %v6620 = vadd.f32 0.0, %v6619
        %6621 = vmatmul.bf16.gmra.mxu0 %v6550
        %v6622 = vpop.f32.mrf.mxu0
        %v6623 = vadd.f32 0.0, %v6622
        %v6624 = vpop.f32.mrf.mxu0
        %v6625 = vadd.f32 0.0, %v6624
        %6626 = vmatmul.bf16.gmra.mxu0 %v6553
        %v6627 = vpop.f32.mrf.mxu0
        %v6628 = vadd.f32 0.0, %v6627
        %v6629 = vpop.f32.mrf.mxu0
        %v6630 = vadd.f32 0.0, %v6629
        %6631 = vmatmul.bf16.gmra.mxu0 %v6556
        %v6632 = vpop.f32.mrf.mxu0
        %v6633 = vadd.f32 0.0, %v6632
        %v6634 = vpop.f32.mrf.mxu0
        %v6635 = vadd.f32 0.0, %v6634
        %6636 = vmatmul.bf16.gmra.mxu0 %v6559
        %v6637 = vpop.f32.mrf.mxu0
        %v6638 = vadd.f32 0.0, %v6637
        %v6639 = vpop.f32.mrf.mxu0
        %v6640 = vadd.f32 0.0, %v6639
        %6641 = vmatmul.bf16.gmra.mxu0 %v6562
        %v6642 = vpop.f32.mrf.mxu0
        %v6643 = vadd.f32 0.0, %v6642
        %v6644 = vpop.f32.mrf.mxu0
        %v6645 = vadd.f32 0.0, %v6644
        %6646 = vmatmul.bf16.gmra.mxu0 %v6565
        %v6647 = vpop.f32.mrf.mxu0
        %v6648 = vadd.f32 0.0, %v6647
        %v6649 = vpop.f32.mrf.mxu0
        %v6650 = vadd.f32 0.0, %v6649
        %6651 = vmatmul.bf16.gmra.mxu0 %v6568
        %v6652 = vpop.f32.mrf.mxu0
        %v6653 = vadd.f32 0.0, %v6652
        %v6654 = vpop.f32.mrf.mxu0
        %v6655 = vadd.f32 0.0, %v6654
        %6656 = vmatmul.bf16.gmra.mxu0 %v6571
        %v6657 = vpop.f32.mrf.mxu0
        %v6658 = vadd.f32 0.0, %v6657
        %v6659 = vpop.f32.mrf.mxu0
        %v6660 = vadd.f32 0.0, %v6659
        %6661 = vdwg.mxu0
        %v6662 = vadd.f32 %v5959, %v6583
        %v6663 = vadd.f32 %v5960, %v6585
        %v6664 = vadd.f32 %v5961, %v6588
        %v6665 = vadd.f32 %v5962, %v6590
        %v6666 = vadd.f32 %v5963, %v6593
        %v6667 = vadd.f32 %v5964, %v6595
        %v6668 = vadd.f32 %v5965, %v6598
        %v6669 = vadd.f32 %v5966, %v6600
        %v6670 = vadd.f32 %v5967, %v6603
        %v6671 = vadd.f32 %v5968, %v6605
        %v6672 = vadd.f32 %v5969, %v6608
        %v6673 = vadd.f32 %v5970, %v6610
        %v6674 = vadd.f32 %v5971, %v6613
        %v6675 = vadd.f32 %v5972, %v6615
        %v6676 = vadd.f32 %v5973, %v6618
        %v6677 = vadd.f32 %v5974, %v6620
        %v6678 = vadd.f32 %v5975, %v6623
        %v6679 = vadd.f32 %v5976, %v6625
        %v6680 = vadd.f32 %v5977, %v6628
        %v6681 = vadd.f32 %v5978, %v6630
        %v6682 = vadd.f32 %v5979, %v6633
        %v6683 = vadd.f32 %v5980, %v6635
        %v6684 = vadd.f32 %v5981, %v6638
        %v6685 = vadd.f32 %v5982, %v6640
        %v6686 = vadd.f32 %v5983, %v6643
        %v6687 = vadd.f32 %v5984, %v6645
        %v6688 = vadd.f32 %v5985, %v6648
        %v6689 = vadd.f32 %v5986, %v6650
        %v6690 = vadd.f32 %v5987, %v6653
        %v6691 = vadd.f32 %v5988, %v6655
        %v6692 = vadd.f32 %v5989, %v6658
        %v6693 = vadd.f32 %v5990, %v6660
        %v6694 = vld [vmem:[%s3] sm:$0x3]
        %v6696 = vperm.slane %v6694, 0
        %v6697 = vperm.slane %v6694, 1
        %6700 = vmatpush.msra.mxu0 %v6677
        %6701 = vmatpush.msra.mxu0 %v6676
        %6702 = vmatpush.msra.mxu0 %v6675
        %6703 = vmatpush.msra.mxu0 %v6674
        %6704 = vmatpush.msra.mxu0 %v6673
        %6705 = vmatpush.msra.mxu0 %v6672
        %6706 = vmatpush.msra.mxu0 %v6671
        %6707 = vmatpush.msra.mxu0 %v6670
        %6708 = vmatpush.msra.mxu0 %v6669
        %6709 = vmatpush.msra.mxu0 %v6668
        %6710 = vmatpush.msra.mxu0 %v6667
        %6711 = vmatpush.msra.mxu0 %v6666
        %6712 = vmatpush.msra.mxu0 %v6665
        %6713 = vmatpush.msra.mxu0 %v6664
        %6714 = vmatpush.msra.mxu0 %v6663
        %6715 = vmatpush.msra.mxu0 %v6662
        %6716 = vmatmul.f32.gmra.mxu0 %v6696
        %v6717 = vpop.f32.mrf.mxu0
        %v6718 = vadd.f32 0.0, %v6717
        %6719 = vdwg.mxu0
        %6720 = vmatpush.msra.mxu0 %v6693
        %6721 = vmatpush.msra.mxu0 %v6692
        %6722 = vmatpush.msra.mxu0 %v6691
        %6723 = vmatpush.msra.mxu0 %v6690
        %6724 = vmatpush.msra.mxu0 %v6689
        %6725 = vmatpush.msra.mxu0 %v6688
        %6726 = vmatpush.msra.mxu0 %v6687
        %6727 = vmatpush.msra.mxu0 %v6686
        %6728 = vmatpush.msra.mxu0 %v6685
        %6729 = vmatpush.msra.mxu0 %v6684
        %6730 = vmatpush.msra.mxu0 %v6683
        %6731 = vmatpush.msra.mxu0 %v6682
        %6732 = vmatpush.msra.mxu0 %v6681
        %6733 = vmatpush.msra.mxu0 %v6680
        %6734 = vmatpush.msra.mxu0 %v6679
        %6735 = vmatpush.msra.mxu0 %v6678
        %6736 = vmatmul.f32.gmra.mxu0 %v6697
        %v6737 = vpop.f32.mrf.mxu0
        %v6738 = vadd.f32 %v6718, %v6737
        %6739 = vdwg.mxu0
        %v6740 = vmul.f32 %v6662, %v6662
        %v6741 = vmul.f32 %v6663, %v6663
        %v6742 = vmul.f32 %v6664, %v6664
        %v6743 = vmul.f32 %v6665, %v6665
        %v6744 = vmul.f32 %v6666, %v6666
        %v6745 = vmul.f32 %v6667, %v6667
        %v6746 = vmul.f32 %v6668, %v6668
        %v6747 = vmul.f32 %v6669, %v6669
        %v6748 = vmul.f32 %v6670, %v6670
        %v6749 = vmul.f32 %v6671, %v6671
        %v6750 = vmul.f32 %v6672, %v6672
        %v6751 = vmul.f32 %v6673, %v6673
        %v6752 = vmul.f32 %v6674, %v6674
        %v6753 = vmul.f32 %v6675, %v6675
        %v6754 = vmul.f32 %v6676, %v6676
        %v6755 = vmul.f32 %v6677, %v6677
        %v6756 = vmul.f32 %v6678, %v6678
        %v6757 = vmul.f32 %v6679, %v6679
        %v6758 = vmul.f32 %v6680, %v6680
        %v6759 = vmul.f32 %v6681, %v6681
        %v6760 = vmul.f32 %v6682, %v6682
        %v6761 = vmul.f32 %v6683, %v6683
        %v6762 = vmul.f32 %v6684, %v6684
        %v6763 = vmul.f32 %v6685, %v6685
        %v6764 = vmul.f32 %v6686, %v6686
        %v6765 = vmul.f32 %v6687, %v6687
        %v6766 = vmul.f32 %v6688, %v6688
        %v6767 = vmul.f32 %v6689, %v6689
        %v6768 = vmul.f32 %v6690, %v6690
        %v6769 = vmul.f32 %v6691, %v6691
        %v6770 = vmul.f32 %v6692, %v6692
        %v6771 = vmul.f32 %v6693, %v6693
        %6772 = vmatpush.msra.mxu0 %v6755
        %6773 = vmatpush.msra.mxu0 %v6754
        %6774 = vmatpush.msra.mxu0 %v6753
        %6775 = vmatpush.msra.mxu0 %v6752
        %6776 = vmatpush.msra.mxu0 %v6751
        %6777 = vmatpush.msra.mxu0 %v6750
        %6778 = vmatpush.msra.mxu0 %v6749
        %6779 = vmatpush.msra.mxu0 %v6748
        %6780 = vmatpush.msra.mxu0 %v6747
        %6781 = vmatpush.msra.mxu0 %v6746
        %6782 = vmatpush.msra.mxu0 %v6745
        %6783 = vmatpush.msra.mxu0 %v6744
        %6784 = vmatpush.msra.mxu0 %v6743
        %6785 = vmatpush.msra.mxu0 %v6742
        %6786 = vmatpush.msra.mxu0 %v6741
        %6787 = vmatpush.msra.mxu0 %v6740
        %6788 = vmatmul.f32.gmra.mxu0 %v6696
        %v6789 = vpop.f32.mrf.mxu0
        %v6790 = vadd.f32 0.0, %v6789
        %6791 = vdwg.mxu0
        %6792 = vmatpush.msra.mxu0 %v6771
        %6793 = vmatpush.msra.mxu0 %v6770
        %6794 = vmatpush.msra.mxu0 %v6769
        %6795 = vmatpush.msra.mxu0 %v6768
        %6796 = vmatpush.msra.mxu0 %v6767
        %6797 = vmatpush.msra.mxu0 %v6766
        %6798 = vmatpush.msra.mxu0 %v6765
        %6799 = vmatpush.msra.mxu0 %v6764
        %6800 = vmatpush.msra.mxu0 %v6763
        %6801 = vmatpush.msra.mxu0 %v6762
        %6802 = vmatpush.msra.mxu0 %v6761
        %6803 = vmatpush.msra.mxu0 %v6760
        %6804 = vmatpush.msra.mxu0 %v6759
        %6805 = vmatpush.msra.mxu0 %v6758
        %6806 = vmatpush.msra.mxu0 %v6757
        %6807 = vmatpush.msra.mxu0 %v6756
        %6808 = vmatmul.f32.gmra.mxu0 %v6697
        %v6809 = vpop.f32.mrf.mxu0
        %v6810 = vadd.f32 %v6790, %v6809
        %6811 = vdwg.mxu0
        %v6812 = vld [vmem:[%s4] sm:$0xf]
        %v6813 = vld [vmem:[%s4 + $0x4] sm:$0xf]
        %v6814 = vld [vmem:[%s4 + $0x8] sm:$0xf]
        %v6815 = vld [vmem:[%s4 + $0xc] sm:$0xf]
        %v6816 = vunpack.c.l.bf16 %v6812
        %v6817 = vunpack.c.l.bf16 %v6813
        %v6818 = vunpack.c.l.bf16 %v6814
        %v6819 = vunpack.c.l.bf16 %v6815
        %v6821 = vsel %vm1428, %v6738, 0
        %6823 = vmatpush.msra.mxu0 0.0
        %6824 = vmatpush.msra.mxu0 0.0
        %6825 = vmatpush.msra.mxu0 0.0
        %6826 = vmatpush.msra.mxu0 0.0
        %6827 = vmatpush.msra.mxu0 0.0
        %6828 = vmatpush.msra.mxu0 0.0
        %6829 = vmatpush.msra.mxu0 0.0
        %6830 = vmatpush.msra.mxu0 0.0
        %6831 = vmatpush.msra.mxu0 0.0
        %6832 = vmatpush.msra.mxu0 0.0
        %6833 = vmatpush.msra.mxu0 0.0
        %6834 = vmatpush.msra.mxu0 0.0
        %6835 = vmatpush.msra.mxu0 %v6819
        %6836 = vmatpush.msra.mxu0 %v6818
        %6837 = vmatpush.msra.mxu0 %v6817
        %6838 = vmatpush.msra.mxu0 %v6816
        %6839 = vmatmul.f32.gmra.mxu0 %v6821
        %v6840 = vpop.f32.mrf.mxu0
        %v6841 = vadd.f32 0.0, %v6840
        %6842 = vdwg.mxu0
        %v6844 = vsel %vm1428, %v6810, 0
        %6846 = vmatpush.msra.mxu0 0.0
        %6847 = vmatpush.msra.mxu0 0.0
        %6848 = vmatpush.msra.mxu0 0.0
        %6849 = vmatpush.msra.mxu0 0.0
        %6850 = vmatpush.msra.mxu0 0.0
        %6851 = vmatpush.msra.mxu0 0.0
        %6852 = vmatpush.msra.mxu0 0.0
        %6853 = vmatpush.msra.mxu0 0.0
        %6854 = vmatpush.msra.mxu0 0.0
        %6855 = vmatpush.msra.mxu0 0.0
        %6856 = vmatpush.msra.mxu0 0.0
        %6857 = vmatpush.msra.mxu0 0.0
        %6858 = vmatpush.msra.mxu0 %v6819
        %6859 = vmatpush.msra.mxu0 %v6818
        %6860 = vmatpush.msra.mxu0 %v6817
        %6861 = vmatpush.msra.mxu0 %v6816
        %6862 = vmatmul.f32.gmra.mxu0 %v6844
        %v6863 = vpop.f32.mrf.mxu0
        %v6864 = vadd.f32 0.0, %v6863
        %6865 = vdwg.mxu0
        %v6866 = vmul.f32 %v6841, 0.00048828125
        %v6867 = vmul.f32 %v6864, 0.00048828125
        %v6868 = vmul.f32 %v6866, %v6866
        %v6869 = vsub.f32 %v6867, %v6868
        %v6870 = vmax.f32 %v6869, 0.0
        %v6871 = vadd.f32 %v6870, 1e-05
        %v6872 = vrsqrt.pop %v6871
        %v6873 = vmul.f32 %v6872, %v6871
        %v6874 = vmul.f32 %v6873, %v6872
        %v6875 = vmul.f32 0.5, %v6874
        %v6876 = vsub.f32 1.5, %v6875
        %v6877 = vmul.f32 %v6872, %v6876
        %vm6878 = vweird.f32 %v6871
        %vm6879 = vweird.f32 %v6872
        %vm6880 = vmor %vm6878, %vm6879
        %v6881 = vsel %vm6880, %v6872, %v6877
        %v6882 = vld [vmem:[%s5] sm:$0x1]
        %v6883 = vmul.f32 %v6881, %v6882
        %v6884 = vld [vmem:[%s6] sm:$0x1]
        %v6885 = vmul.f32 %v6866, %v6883
        %v6886 = vsub.f32 %v6884, %v6885
        %v6887 = vperm.slane %v6883, 0
        %v6888 = vmul.f32 %v6662, %v6887
        %v6889 = vmul.f32 %v6663, %v6887
        %v6890 = vmul.f32 %v6664, %v6887
        %v6891 = vmul.f32 %v6665, %v6887
        %v6892 = vmul.f32 %v6666, %v6887
        %v6893 = vmul.f32 %v6667, %v6887
        %v6894 = vmul.f32 %v6668, %v6887
        %v6895 = vmul.f32 %v6669, %v6887
        %v6896 = vmul.f32 %v6670, %v6887
        %v6897 = vmul.f32 %v6671, %v6887
        %v6898 = vmul.f32 %v6672, %v6887
        %v6899 = vmul.f32 %v6673, %v6887
        %v6900 = vmul.f32 %v6674, %v6887
        %v6901 = vmul.f32 %v6675, %v6887
        %v6902 = vmul.f32 %v6676, %v6887
        %v6903 = vmul.f32 %v6677, %v6887
        %v6904 = vmul.f32 %v6678, %v6887
        %v6905 = vmul.f32 %v6679, %v6887
        %v6906 = vmul.f32 %v6680, %v6887
        %v6907 = vmul.f32 %v6681, %v6887
        %v6908 = vmul.f32 %v6682, %v6887
        %v6909 = vmul.f32 %v6683, %v6887
        %v6910 = vmul.f32 %v6684, %v6887
        %v6911 = vmul.f32 %v6685, %v6887
        %v6912 = vmul.f32 %v6686, %v6887
        %v6913 = vmul.f32 %v6687, %v6887
        %v6914 = vmul.f32 %v6688, %v6887
        %v6915 = vmul.f32 %v6689, %v6887
        %v6916 = vmul.f32 %v6690, %v6887
        %v6917 = vmul.f32 %v6691, %v6887
        %v6918 = vmul.f32 %v6692, %v6887
        %v6919 = vmul.f32 %v6693, %v6887
        %v6921 = vperm.slane %v6886, 0
        %v6923 = vadd.f32 %v6888, %v6921
        %v6924 = vadd.f32 %v6889, %v6921
        %v6925 = vadd.f32 %v6890, %v6921
        %v6926 = vadd.f32 %v6891, %v6921
        %v6927 = vadd.f32 %v6892, %v6921
        %v6928 = vadd.f32 %v6893, %v6921
        %v6929 = vadd.f32 %v6894, %v6921
        %v6930 = vadd.f32 %v6895, %v6921
        %v6931 = vadd.f32 %v6896, %v6921
        %v6932 = vadd.f32 %v6897, %v6921
        %v6933 = vadd.f32 %v6898, %v6921
        %v6934 = vadd.f32 %v6899, %v6921
        %v6935 = vadd.f32 %v6900, %v6921
        %v6936 = vadd.f32 %v6901, %v6921
        %v6937 = vadd.f32 %v6902, %v6921
        %v6938 = vadd.f32 %v6903, %v6921
        %v6939 = vadd.f32 %v6904, %v6921
        %v6940 = vadd.f32 %v6905, %v6921
        %v6941 = vadd.f32 %v6906, %v6921
        %v6942 = vadd.f32 %v6907, %v6921
        %v6943 = vadd.f32 %v6908, %v6921
        %v6944 = vadd.f32 %v6909, %v6921
        %v6945 = vadd.f32 %v6910, %v6921
        %v6946 = vadd.f32 %v6911, %v6921
        %v6947 = vadd.f32 %v6912, %v6921
        %v6948 = vadd.f32 %v6913, %v6921
        %v6949 = vadd.f32 %v6914, %v6921
        %v6950 = vadd.f32 %v6915, %v6921
        %v6951 = vadd.f32 %v6916, %v6921
        %v6952 = vadd.f32 %v6917, %v6921
        %v6953 = vadd.f32 %v6918, %v6921
        %v6954 = vadd.f32 %v6919, %v6921
        %v6955 = vmax.f32 %v6923, 0.0
        %v6956 = vmax.f32 %v6924, 0.0
        %v6957 = vmax.f32 %v6925, 0.0
        %v6958 = vmax.f32 %v6926, 0.0
        %v6959 = vmax.f32 %v6927, 0.0
        %v6960 = vmax.f32 %v6928, 0.0
        %v6961 = vmax.f32 %v6929, 0.0
        %v6962 = vmax.f32 %v6930, 0.0
        %v6963 = vmax.f32 %v6931, 0.0
        %v6964 = vmax.f32 %v6932, 0.0
        %v6965 = vmax.f32 %v6933, 0.0
        %v6966 = vmax.f32 %v6934, 0.0
        %v6967 = vmax.f32 %v6935, 0.0
        %v6968 = vmax.f32 %v6936, 0.0
        %v6969 = vmax.f32 %v6937, 0.0
        %v6970 = vmax.f32 %v6938, 0.0
        %v6971 = vmax.f32 %v6939, 0.0
        %v6972 = vmax.f32 %v6940, 0.0
        %v6973 = vmax.f32 %v6941, 0.0
        %v6974 = vmax.f32 %v6942, 0.0
        %v6975 = vmax.f32 %v6943, 0.0
        %v6976 = vmax.f32 %v6944, 0.0
        %v6977 = vmax.f32 %v6945, 0.0
        %v6978 = vmax.f32 %v6946, 0.0
        %v6979 = vmax.f32 %v6947, 0.0
        %v6980 = vmax.f32 %v6948, 0.0
        %v6981 = vmax.f32 %v6949, 0.0
        %v6982 = vmax.f32 %v6950, 0.0
        %v6983 = vmax.f32 %v6951, 0.0
        %v6984 = vmax.f32 %v6952, 0.0
        %v6985 = vmax.f32 %v6953, 0.0
        %v6986 = vmax.f32 %v6954, 0.0
        %v6987 = vpack.c.bf16 %v6955, %v6955
        %v6988 = vpack.c.bf16 %v6956, %v6956
        %v6989 = vpack.c.bf16 %v6957, %v6957
        %v6990 = vpack.c.bf16 %v6958, %v6958
        %v6991 = vpack.c.bf16 %v6959, %v6959
        %v6992 = vpack.c.bf16 %v6960, %v6960
        %v6993 = vpack.c.bf16 %v6961, %v6961
        %v6994 = vpack.c.bf16 %v6962, %v6962
        %v6995 = vpack.c.bf16 %v6963, %v6963
        %v6996 = vpack.c.bf16 %v6964, %v6964
        %v6997 = vpack.c.bf16 %v6965, %v6965
        %v6998 = vpack.c.bf16 %v6966, %v6966
        %v6999 = vpack.c.bf16 %v6967, %v6967
        %v7000 = vpack.c.bf16 %v6968, %v6968
        %v7001 = vpack.c.bf16 %v6969, %v6969
        %v7002 = vpack.c.bf16 %v6970, %v6970
        %v7003 = vpack.c.bf16 %v6971, %v6971
        %v7004 = vpack.c.bf16 %v6972, %v6972
        %v7005 = vpack.c.bf16 %v6973, %v6973
        %v7006 = vpack.c.bf16 %v6974, %v6974
        %v7007 = vpack.c.bf16 %v6975, %v6975
        %v7008 = vpack.c.bf16 %v6976, %v6976
        %v7009 = vpack.c.bf16 %v6977, %v6977
        %v7010 = vpack.c.bf16 %v6978, %v6978
        %v7011 = vpack.c.bf16 %v6979, %v6979
        %v7012 = vpack.c.bf16 %v6980, %v6980
        %v7013 = vpack.c.bf16 %v6981, %v6981
        %v7014 = vpack.c.bf16 %v6982, %v6982
        %v7015 = vpack.c.bf16 %v6983, %v6983
        %v7016 = vpack.c.bf16 %v6984, %v6984
        %v7017 = vpack.c.bf16 %v6985, %v6985
        %v7018 = vpack.c.bf16 %v6986, %v6986
        %vm7019 = vcmask 257024
        %7020 = vst.msk [vmem:[%s271] sm:$0xf] %vm7019, %v6987
        %7021 = vst.msk [vmem:[%s271 + $0x4] sm:$0xf] %vm7019, %v6988
        %7022 = vst.msk [vmem:[%s271 + $0x8] sm:$0xf] %vm7019, %v6989
        %7023 = vst.msk [vmem:[%s271 + $0xc] sm:$0xf] %vm7019, %v6990
        %7024 = vst.msk [vmem:[%s271 + $0x10] sm:$0xf] %vm7019, %v6991
        %7025 = vst.msk [vmem:[%s271 + $0x14] sm:$0xf] %vm7019, %v6992
        %7026 = vst.msk [vmem:[%s271 + $0x18] sm:$0xf] %vm7019, %v6993
        %7027 = vst.msk [vmem:[%s271 + $0x1c] sm:$0xf] %vm7019, %v6994
        %7028 = vst.msk [vmem:[%s271 + $0x20] sm:$0xf] %vm7019, %v6995
        %7029 = vst.msk [vmem:[%s271 + $0x24] sm:$0xf] %vm7019, %v6996
        %7030 = vst.msk [vmem:[%s271 + $0x28] sm:$0xf] %vm7019, %v6997
        %7031 = vst.msk [vmem:[%s271 + $0x2c] sm:$0xf] %vm7019, %v6998
        %7032 = vst.msk [vmem:[%s271 + $0x30] sm:$0xf] %vm7019, %v6999
        %7033 = vst.msk [vmem:[%s271 + $0x34] sm:$0xf] %vm7019, %v7000
        %7034 = vst.msk [vmem:[%s271 + $0x38] sm:$0xf] %vm7019, %v7001
        %7035 = vst.msk [vmem:[%s271 + $0x3c] sm:$0xf] %vm7019, %v7002
        %7036 = vst.msk [vmem:[%s271 + $0x40] sm:$0xf] %vm7019, %v7003
        %7037 = vst.msk [vmem:[%s271 + $0x44] sm:$0xf] %vm7019, %v7004
        %7038 = vst.msk [vmem:[%s271 + $0x48] sm:$0xf] %vm7019, %v7005
        %7039 = vst.msk [vmem:[%s271 + $0x4c] sm:$0xf] %vm7019, %v7006
        %7040 = vst.msk [vmem:[%s271 + $0x50] sm:$0xf] %vm7019, %v7007
        %7041 = vst.msk [vmem:[%s271 + $0x54] sm:$0xf] %vm7019, %v7008
        %7042 = vst.msk [vmem:[%s271 + $0x58] sm:$0xf] %vm7019, %v7009
        %7043 = vst.msk [vmem:[%s271 + $0x5c] sm:$0xf] %vm7019, %v7010
        %7044 = vst.msk [vmem:[%s271 + $0x60] sm:$0xf] %vm7019, %v7011
        %7045 = vst.msk [vmem:[%s271 + $0x64] sm:$0xf] %vm7019, %v7012
        %7046 = vst.msk [vmem:[%s271 + $0x68] sm:$0xf] %vm7019, %v7013
        %7047 = vst.msk [vmem:[%s271 + $0x6c] sm:$0xf] %vm7019, %v7014
        %7048 = vst.msk [vmem:[%s271 + $0x70] sm:$0xf] %vm7019, %v7015
        %7049 = vst.msk [vmem:[%s271 + $0x74] sm:$0xf] %vm7019, %v7016
        %7050 = vst.msk [vmem:[%s271 + $0x78] sm:$0xf] %vm7019, %v7017
        %7051 = vst.msk [vmem:[%s271 + $0x7c] sm:$0xf] %vm7019, %v7018
        %s7052 = sand.u32 %s181, 1
        %s7053 = scalar_lea.sflag [#allocation3], %s7052
        %s7054 = sand.u32 %s181, 1
        %s7055 = smul.addr %s7054, 128
        %s7056 = scalar_lea.vmem [#allocation2], %s7055
        // Predicated region
        $region49: #{_lambda_.1} parent=47 // pred_check
          %p7057 = pneg %p191
        $region50: #{_lambda_.1} parent=47 // pred_check_branch
          %7059 = sbr.rel (%p7057) target = $region52
        $region51: #{_lambda_.1} parent=47 // pred_region
          %7061 = vsyncadd %s7053, 0
          %s7062 = smul.addr %s21, 32
          %s7063 = smul.addr %s7062, 4
          %s7064 = scalar_lea.hbm %s7, %s7063
          %s7065 = sshll.u32 %s7056, 4
          %s7066 = int_to_ptr.vmem [resolvable:$true] %s7065
          %s7067 = sshll.u32 %s7064, 4
          %s7068 = int_to_ptr.hbm [resolvable:$true] %s7067
          %7073 = dma.vmem_to_hbm [thread:$0]  %s7066, 2048, %s7068, %s7053, 64, 64, 4
        $region52: #{_lambda_.1} parent=47 // pred_fallthru
          _
      $region48: #{_lambda_.1} parent=5 // pred_fallthru
        _
      %p7074 = scmp.le.s32.totalorder 2, %s16
      // Predicated region
      $region53: #{_lambda_.1} parent=5 // pred_check
        %p7075 = pneg %p7074
      $region54: #{_lambda_.1} parent=5 // pred_check_branch
        %7077 = sbr.rel (%p7075) target = $region56
      $region55: #{_lambda_.1} parent=5 // pred_region
        %s7078 = ssub.s32 %s16, 2
        // Predicated region
        $region57: #{_lambda_.1} parent=55 // pred_check
          %p7079 = pneg %p197
        $region58: #{_lambda_.1} parent=55 // pred_check_branch
          %7081 = sbr.rel (%p7079) target = $region60
        $region59: #{_lambda_.1} parent=55 // pred_region
          %s7082 = sand.u32 %s182, 1
          %s7083 = scalar_lea.sflag [#allocation3], %s7082
          %s7084 = sand.u32 %s182, 1
          %s7085 = smul.addr %s7084, 128
          %s7086 = scalar_lea.vmem [#allocation2], %s7085
          %7088 = dma.done %s7083, 2048
        $region60: #{_lambda_.1} parent=55 // pred_fallthru
          _
      $region56: #{_lambda_.1} parent=5 // pred_fallthru
        _
    $region6: #{_lambda_.1} parent=1 // loop_footer
      %s20 = sadd.s32 1, %s16
    $region7: #{_lambda_.1} parent=1 // loop_footer_branch
      %15 = sbr.rel target = $region3
    $region8: #{_lambda_.1} parent=1 // loop_exit
      _
    %7089 = vsyncpa [#allocation3], 1
    %s7090 = scalar_lea.sflag [#allocation3], 1
    %7091 = vsyncpa %s7090, 1

</llo_original>
